<compile_context>
chip_gen: v5e
topology: v5e:2x2
jax: 0.10.0
libtpu: 0.0.40
codegen_flags: <defaults>
</compile_context>

<pallas_src>
import numpy as np

import jax
import jax.numpy as jnp
from jax.experimental import pallas as pl
from jax.experimental.pallas import tpu as pltpu  # noqa: F401  (TPU backend)

LRELU_SLOPE = 0.2
BN_EPS = 1e-5


# ---------------------------------------------------------------------------
# The fused Pallas kernel: conv1+LReLU -> conv2+BN+LReLU -> conv3+BN+LReLU -> conv4
# Activation layout everywhere: (spatial_rows, N * C) with columns n-major.
# ---------------------------------------------------------------------------
def _dcgan_disc_kernel(x1_ref, w1b_ref, b1t_ref,
                       sel2_ref, wb2_ref, avg2_ref, g2_ref, beta2_ref,
                       sel3_ref, wb3_ref, avg3_ref, g3_ref, beta3_ref,
                       w4b_ref, sumc_ref, b4_ref, o_ref):
    f32 = jnp.float32

    def dot(a, b):
        return jnp.dot(a, b, preferred_element_type=f32)

    def lrelu(v):
        return jnp.where(v > 0, v, LRELU_SLOPE * v)

    def conv_taps(act, sel_ref, wb_ref):
        # act:    (S_in, N*C_in)
        # sel_ref:(16, S_out, S_in)  one-hot rows (bf16, exact 0/1), zero row == padding
        # wb_ref: (16, N*C_in, N*C_out)  block-diagonal (I_N kron W_tap) weights
        s_out = sel_ref.shape[1]
        nc_out = wb_ref.shape[2]
        acc = jnp.zeros((s_out, nc_out), f32)
        for t in range(sel_ref.shape[0]):                       # 16 static taps
            gathered = dot(sel_ref[t].astype(f32), act)         # (S_out, N*C_in)
            acc = acc + dot(gathered, wb_ref[t])                # (S_out, N*C_out)
        return acc

    def batchnorm(y, avg_ref, g_ref, beta_ref):
        # Training-mode BatchNorm2d over the whole batch, biased variance.
        # avg_ref averages the per-(n, c) column stats over n and tiles them back,
        # so stats are per-channel over all N*H*W elements.  Single pass: E[x], E[x^2].
        cm = jnp.mean(dot(y, avg_ref[...]), axis=0, keepdims=True)      # E[x]   (1, N*C)
        c2 = jnp.mean(dot(y * y, avg_ref[...]), axis=0, keepdims=True)  # E[x^2] (1, N*C)
        var = c2 - cm * cm
        return (y - cm) * jax.lax.rsqrt(var + BN_EPS) * g_ref[...] + beta_ref[...]

    # Layer 1: conv(1->16, 4x4, s2, p1) + bias + LeakyReLU.  x1 is the host-built
    # patch matrix of the RAW input (rows = output pixel, cols = (n, patch)).
    y1 = lrelu(dot(x1_ref[...], w1b_ref[...]) + b1t_ref[...])           # (256, N*16)

    # Layer 2: conv(16->32, 4x4, s2, p1) + BN + LeakyReLU.
    # Conv bias intentionally dropped: exactly cancelled by the BN mean subtraction.
    y2 = lrelu(batchnorm(conv_taps(y1, sel2_ref, wb2_ref),
                         avg2_ref, g2_ref, beta2_ref))                  # (64, N*32)

    # Layer 3: conv(32->64, 4x4, s2, p1) + BN + LeakyReLU.
    y3 = lrelu(batchnorm(conv_taps(y2, sel3_ref, wb3_ref),
                         avg3_ref, g3_ref, beta3_ref))                  # (16, N*64)

    # Layer 4: conv(64->1, 4x4, s1, p0) == per-sample full reduction; VPU, not MXU.
    z = y3 * w4b_ref[...]                                               # (16, N*64)
    per_sample = jnp.sum(dot(z, sumc_ref[...]), axis=0, keepdims=True)  # (1, N)
    o_ref[...] = per_sample + b4_ref[...]


# ---------------------------------------------------------------------------
# Host-side packing of parameters into kernel constants (done once, not per call).
# ---------------------------------------------------------------------------
def pack_params(params, batch_size):
    n = int(batch_size)
    eye_n = jnp.eye(n, dtype=jnp.float32)

    def tap_mat(w, i, j):                       # (Cout, Cin, 4, 4) -> (Cin, Cout)
        return jnp.transpose(w[:, :, i, j].astype(jnp.float32), (1, 0))

    def kron_taps(w):                           # -> (16, n*Cin, n*Cout)
        return jnp.stack([jnp.kron(eye_n, tap_mat(w, i, j))
                          for i in range(4) for j in range(4)], axis=0)

    def tile_vec(v):                            # (C,) -> (1, n*C), n-major columns
        return jnp.tile(v.astype(jnp.float32), n).reshape(1, -1)

    def sel_mats(h_in, h_out):
        # 0/1 selection matrices for a 4x4 / stride-2 / pad-1 conv on an h_in x h_in
        # image.  mats[t, oh*h_out+ow, r*h_in+c] = 1 picks input pixel (r, c) for
        # output pixel (oh, ow) and tap t=(i,j); all-zero row == zero padding.
        mats = np.zeros((16, h_out * h_out, h_in * h_in), np.float32)
        for i in range(4):
            for j in range(4):
                t = i * 4 + j
                for oh in range(h_out):
                    r = 2 * oh + i - 1
                    if not 0 <= r < h_in:
                        continue
                    for ow in range(h_out):
                        cc = 2 * ow + j - 1
                        if 0 <= cc < h_in:
                            mats[t, oh * h_out + ow, r * h_in + cc] = 1.0
        return jnp.asarray(mats, dtype=jnp.bfloat16)    # 0/1 exact in bf16

    def avg_mat(c):
        # Maps per-(n, c) column stats -> per-channel stats tiled back over n.
        return jnp.kron(jnp.full((n, n), 1.0 / n, jnp.float32),
                        jnp.eye(c, dtype=jnp.float32))

    w1, w2, w3, w4 = params["w1"], params["w2"], params["w3"], params["w4"]
    c1_out, c1_in, kh, kw = w1.shape
    c2_out, c3_out = w2.shape[0], w3.shape[0]

    # (kh, kw, c_in)-ordered patch weights for layer 1; (i, j, c)-ordered, c fastest.
    w1mat = jnp.transpose(w1.astype(jnp.float32), (2, 3, 1, 0)).reshape(kh * kw * c1_in, c1_out)
    # Layer-4 weights laid out as (spatial 16, C_in), matching y3's row order.
    w4m = jnp.transpose(w4[0].astype(jnp.float32), (1, 2, 0)).reshape(16, c3_out)

    # Note: params["b2"] / params["b3"] are deliberately NOT packed — the conv bias
    # before BatchNorm is exactly cancelled by the mean subtraction.
    return {
        "w1b": jnp.kron(eye_n, w1mat),
        "b1t": tile_vec(params["b1"]),
        "sel2": sel_mats(16, 8),
        "wb2": kron_taps(w2),
        "avg2": avg_mat(c2_out),
        "g2t": tile_vec(params["g2"]),
        "beta2t": tile_vec(params["beta2"]),
        "sel3": sel_mats(8, 4),
        "wb3": kron_taps(w3),
        "avg3": avg_mat(c3_out),
        "g3t": tile_vec(params["g3"]),
        "beta3t": tile_vec(params["beta3"]),
        "w4b": jnp.tile(w4m, (1, n)),
        "sumc": jnp.kron(eye_n, jnp.ones((c3_out, 1), jnp.float32)),
        "b4t": jnp.tile(params["b4"].astype(jnp.float32), n).reshape(1, -1),
    }


def _im2col_layer1(x_nchw):
    # Patch matrix of the RAW input only (one cheap fused XLA preprocessing step):
    # rows = output pixel (oh*Wo + ow), cols = (n, i, j, c) n-major.
    n, c, h, w = x_nchw.shape
    ho, wo = h // 2, w // 2
    xp = jnp.pad(x_nchw, ((0, 0), (0, 0), (1, 1), (1, 1)))
    taps = []
    for i in range(4):
        for j in range(4):
            taps.append(xp[:, :, i:i + 2 * ho:2, j:j + 2 * wo:2])   # (N, C, Ho, Wo)
    pat = jnp.stack(taps, axis=-1)                                  # (N, C, Ho, Wo, 16)
    pat = jnp.transpose(pat, (2, 3, 0, 4, 1))                       # (Ho, Wo, N, 16, C)
    return pat.reshape(ho * wo, n * 16 * c)


# ---------------------------------------------------------------------------
# Public forward
# ---------------------------------------------------------------------------
def discriminator_forward(x_nchw, packed):
    # x_nchw: (N, 1, 32, 32) float32 (PyTorch NCHW).  Architecture fixed to img_size=32.
    n, _, h, w = x_nchw.shape
    assert h == 32 and w == 32, "this fused kernel is specialized to img_size=32"
    x1 = _im2col_layer1(x_nchw.astype(jnp.float32))                 # (256, N*16)

    logits = pl.pallas_call(
        _dcgan_disc_kernel,
        out_shape=jax.ShapeDtypeStruct((1, n), jnp.float32),
        # No grid / no BlockSpecs: every operand is a single whole-array block
        # resident in VMEM (total ~1 MB), single kernel invocation.
    )(x1,
      packed["w1b"], packed["b1t"],
      packed["sel2"], packed["wb2"], packed["avg2"], packed["g2t"], packed["beta2t"],
      packed["sel3"], packed["wb3"], packed["avg3"], packed["g3t"], packed["beta3t"],
      packed["w4b"], packed["sumc"], packed["b4t"])

    return logits.reshape(n, 1, 1, 1)                               # back to NCHW


# ---------------------------------------------------------------------------
# Parameter init (matches the PyTorch module's weight_init statistics)
# ---------------------------------------------------------------------------
def init_params(key, img_channel=1, num_feature=16):
    # img_size=32 -> num_hidden = log2(32) - 3 = 2:
    #   conv1: (1 -> 16),  4x4 s2 p1, LeakyReLU(0.2)
    #   conv2: (16 -> 32), 4x4 s2 p1, BN, LeakyReLU(0.2)
    #   conv3: (32 -> 64), 4x4 s2 p1, BN, LeakyReLU(0.2)
    #   conv4: (64 -> 1),  4x4 s1 p0
    ks = jax.random.split(key, 10)
    nf = num_feature

    def conv_w(k, co, ci):
        return 0.02 * jax.random.normal(k, (co, ci, 4, 4), jnp.float32)

    def conv_b(k, co):
        return 0.01 * jax.random.normal(k, (co,), jnp.float32)

    return {
        "w1": conv_w(ks[0], nf, img_channel), "b1": conv_b(ks[1], nf),
        "w2": conv_w(ks[2], 2 * nf, nf), "b2": conv_b(ks[3], 2 * nf),
        "g2": 1.0 + 0.02 * jax.random.normal(ks[4], (2 * nf,), jnp.float32),
        "beta2": jnp.zeros((2 * nf,), jnp.float32),
        "w3": conv_w(ks[5], 4 * nf, 2 * nf), "b3": conv_b(ks[6], 4 * nf),
        "g3": 1.0 + 0.02 * jax.random.normal(ks[7], (4 * nf,), jnp.float32),
        "beta3": jnp.zeros((4 * nf,), jnp.float32),
        "w4": conv_w(ks[8], 1, 4 * nf), "b4": conv_b(ks[9], 1),
    }


# ---------------------------------------------------------------------------
# Pure-JAX (XLA) reference of the PyTorch forward, for correctness checking.
# Includes the conv biases before BN (their cancellation is part of the test).
# ---------------------------------------------------------------------------
def _reference_forward(x_nchw, params):
    def conv(x, w, b, stride, pad):
        y = jax.lax.conv_general_dilated(
            x, w, window_strides=(stride, stride),
            padding=[(pad, pad), (pad, pad)],
            dimension_numbers=("NCHW", "OIHW", "NCHW"),
            precision=jax.lax.Precision.HIGHEST)
        return y + b.reshape(1, -1, 1, 1)

    def bn(y, g, beta):
        mean = jnp.mean(y, axis=(0, 2, 3), keepdims=True)
        var = jnp.mean((y - mean) ** 2, axis=(0, 2, 3), keepdims=True)
        return (y - mean) * jax.lax.rsqrt(var + BN_EPS) * g.reshape(1, -1, 1, 1) \
            + beta.reshape(1, -1, 1, 1)

    lrelu = lambda v: jnp.where(v > 0, v, LRELU_SLOPE * v)

    y = lrelu(conv(x_nchw, params["w1"], params["b1"], 2, 1))
    y = lrelu(bn(conv(y, params["w2"], params["b2"], 2, 1), params["g2"], params["beta2"]))
    y = lrelu(bn(conv(y, params["w3"], params["b3"], 2, 1), params["g3"], params["beta3"]))
    y = conv(y, params["w4"], params["b4"], 1, 0)
    return y


if __name__ == "__main__":
    key = jax.random.PRNGKey(0)
    k_in, k_par = jax.random.split(key)
    N = 2
    x = jax.random.normal(k_in, (N, 1, 32, 32), jnp.float32)    # NCHW
    params = init_params(k_par)
    packed = pack_params(params, N)                             # one-time repack

    y = jax.block_until_ready(jax.jit(discriminator_forward)(x, packed))
    assert y.shape == (N, 1, 1, 1), y.shape
    assert bool(jnp.all(jnp.isfinite(y)))

    y_ref = jax.block_until_ready(jax.jit(_reference_forward)(x, params))
    max_err = float(jnp.max(jnp.abs(y - y_ref)))
    assert max_err < 5e-2, f"kernel/reference mismatch: {max_err}"

    print("KERNEL_OK")
</pallas_src>

<mosaic_0001>
module attributes {stable_mosaic.version = 11 : i64} {
  func.func @_dcgan_disc_kernel(%arg0: memref<256x32xf32, #tpu.memory_space<vmem>>, %arg1: memref<32x32xf32, #tpu.memory_space<vmem>>, %arg2: memref<1x32xf32, #tpu.memory_space<vmem>>, %arg3: memref<16x64x256xbf16, #tpu.memory_space<vmem>>, %arg4: memref<16x32x64xf32, #tpu.memory_space<vmem>>, %arg5: memref<64x64xf32, #tpu.memory_space<vmem>>, %arg6: memref<1x64xf32, #tpu.memory_space<vmem>>, %arg7: memref<1x64xf32, #tpu.memory_space<vmem>>, %arg8: memref<16x16x64xbf16, #tpu.memory_space<vmem>>, %arg9: memref<16x64x128xf32, #tpu.memory_space<vmem>>, %arg10: memref<128x128xf32, #tpu.memory_space<vmem>>, %arg11: memref<1x128xf32, #tpu.memory_space<vmem>>, %arg12: memref<1x128xf32, #tpu.memory_space<vmem>>, %arg13: memref<16x128xf32, #tpu.memory_space<vmem>>, %arg14: memref<128x2xf32, #tpu.memory_space<vmem>>, %arg15: memref<1x2xf32, #tpu.memory_space<vmem>>, %arg16: memref<1x2xf32, #tpu.memory_space<vmem>>) attributes {dimension_semantics = [], scalar_prefetch = 0 : i64, scratch_operands = 0 : i64, tpu.core_type = #tpu.core_type<tc>} {
    %c0 = arith.constant 0 : index
    %c0_0 = arith.constant 0 : index
    %0 = vector.load %arg0[%c0, %c0_0] : memref<256x32xf32, #tpu.memory_space<vmem>>, vector<256x32xf32>
    %c0_1 = arith.constant 0 : index
    %c0_2 = arith.constant 0 : index
    %1 = vector.load %arg1[%c0_1, %c0_2] : memref<32x32xf32, #tpu.memory_space<vmem>>, vector<32x32xf32>
    %cst = arith.constant dense<0.000000e+00> : vector<256x32xf32>
    %2 = tpu.matmul %0, %1, %cst {dimension_numbers = #tpu.dot_dimension_numbers<[1], [0], [0], [1], [0, 0, 1, 1], [], []>} : vector<256x32xf32>, vector<32x32xf32>, vector<256x32xf32> -> vector<256x32xf32>
    %c0_3 = arith.constant 0 : index
    %c0_4 = arith.constant 0 : index
    %3 = vector.load %arg2[%c0_3, %c0_4] : memref<1x32xf32, #tpu.memory_space<vmem>>, vector<1x32xf32>
    %4 = vector.broadcast %3 : vector<1x32xf32> to vector<256x32xf32>
    %5 = arith.addf %2, %4 : vector<256x32xf32>
    %cst_5 = arith.constant 0.000000e+00 : f32
    %6 = vector.broadcast %cst_5 : f32 to vector<256x32xf32>
    %7 = arith.cmpf ogt, %5, %6 : vector<256x32xf32>
    %cst_6 = arith.constant 2.000000e-01 : f32
    %8 = vector.broadcast %cst_6 : f32 to vector<256x32xf32>
    %9 = arith.mulf %8, %5 : vector<256x32xf32>
    %10 = arith.select %7, %5, %9 : vector<256x32xi1>, vector<256x32xf32>
    %cst_7 = arith.constant 0.000000e+00 : f32
    %11 = vector.broadcast %cst_7 : f32 to vector<64x64xf32>
    %c0_8 = arith.constant 0 : index
    %c0_9 = arith.constant 0 : index
    %c0_10 = arith.constant 0 : index
    %12 = vector.load %arg3[%c0_8, %c0_9, %c0_10] : memref<16x64x256xbf16, #tpu.memory_space<vmem>>, vector<1x64x256xbf16>
    %13 = vector.shape_cast %12 : vector<1x64x256xbf16> to vector<64x256xbf16>
    %14 = arith.extf %13 : vector<64x256xbf16> to vector<64x256xf32>
    %cst_11 = arith.constant dense<0.000000e+00> : vector<64x32xf32>
    %15 = tpu.matmul %14, %10, %cst_11 {dimension_numbers = #tpu.dot_dimension_numbers<[1], [0], [0], [1], [0, 0, 1, 1], [], []>} : vector<64x256xf32>, vector<256x32xf32>, vector<64x32xf32> -> vector<64x32xf32>
    %c0_12 = arith.constant 0 : index
    %c0_13 = arith.constant 0 : index
    %c0_14 = arith.constant 0 : index
    %16 = vector.load %arg4[%c0_12, %c0_13, %c0_14] : memref<16x32x64xf32, #tpu.memory_space<vmem>>, vector<1x32x64xf32>
    %17 = vector.shape_cast %16 : vector<1x32x64xf32> to vector<32x64xf32>
    %cst_15 = arith.constant dense<0.000000e+00> : vector<64x64xf32>
    %18 = tpu.matmul %15, %17, %cst_15 {dimension_numbers = #tpu.dot_dimension_numbers<[1], [0], [0], [1], [0, 0, 1, 1], [], []>} : vector<64x32xf32>, vector<32x64xf32>, vector<64x64xf32> -> vector<64x64xf32>
    %19 = arith.addf %11, %18 : vector<64x64xf32>
    %c1 = arith.constant 1 : index
    %c0_16 = arith.constant 0 : index
    %c0_17 = arith.constant 0 : index
    %20 = vector.load %arg3[%c1, %c0_16, %c0_17] : memref<16x64x256xbf16, #tpu.memory_space<vmem>>, vector<1x64x256xbf16>
    %21 = vector.shape_cast %20 : vector<1x64x256xbf16> to vector<64x256xbf16>
    %22 = arith.extf %21 : vector<64x256xbf16> to vector<64x256xf32>
    %cst_18 = arith.constant dense<0.000000e+00> : vector<64x32xf32>
    %23 = tpu.matmul %22, %10, %cst_18 {dimension_numbers = #tpu.dot_dimension_numbers<[1], [0], [0], [1], [0, 0, 1, 1], [], []>} : vector<64x256xf32>, vector<256x32xf32>, vector<64x32xf32> -> vector<64x32xf32>
    %c1_19 = arith.constant 1 : index
    %c0_20 = arith.constant 0 : index
    %c0_21 = arith.constant 0 : index
    %24 = vector.load %arg4[%c1_19, %c0_20, %c0_21] : memref<16x32x64xf32, #tpu.memory_space<vmem>>, vector<1x32x64xf32>
    %25 = vector.shape_cast %24 : vector<1x32x64xf32> to vector<32x64xf32>
    %cst_22 = arith.constant dense<0.000000e+00> : vector<64x64xf32>
    %26 = tpu.matmul %23, %25, %cst_22 {dimension_numbers = #tpu.dot_dimension_numbers<[1], [0], [0], [1], [0, 0, 1, 1], [], []>} : vector<64x32xf32>, vector<32x64xf32>, vector<64x64xf32> -> vector<64x64xf32>
    %27 = arith.addf %19, %26 : vector<64x64xf32>
    %c2 = arith.constant 2 : index
    %c0_23 = arith.constant 0 : index
    %c0_24 = arith.constant 0 : index
    %28 = vector.load %arg3[%c2, %c0_23, %c0_24] : memref<16x64x256xbf16, #tpu.memory_space<vmem>>, vector<1x64x256xbf16>
    %29 = vector.shape_cast %28 : vector<1x64x256xbf16> to vector<64x256xbf16>
    %30 = arith.extf %29 : vector<64x256xbf16> to vector<64x256xf32>
    %cst_25 = arith.constant dense<0.000000e+00> : vector<64x32xf32>
    %31 = tpu.matmul %30, %10, %cst_25 {dimension_numbers = #tpu.dot_dimension_numbers<[1], [0], [0], [1], [0, 0, 1, 1], [], []>} : vector<64x256xf32>, vector<256x32xf32>, vector<64x32xf32> -> vector<64x32xf32>
    %c2_26 = arith.constant 2 : index
    %c0_27 = arith.constant 0 : index
    %c0_28 = arith.constant 0 : index
    %32 = vector.load %arg4[%c2_26, %c0_27, %c0_28] : memref<16x32x64xf32, #tpu.memory_space<vmem>>, vector<1x32x64xf32>
    %33 = vector.shape_cast %32 : vector<1x32x64xf32> to vector<32x64xf32>
    %cst_29 = arith.constant dense<0.000000e+00> : vector<64x64xf32>
    %34 = tpu.matmul %31, %33, %cst_29 {dimension_numbers = #tpu.dot_dimension_numbers<[1], [0], [0], [1], [0, 0, 1, 1], [], []>} : vector<64x32xf32>, vector<32x64xf32>, vector<64x64xf32> -> vector<64x64xf32>
    %35 = arith.addf %27, %34 : vector<64x64xf32>
    %c3 = arith.constant 3 : index
    %c0_30 = arith.constant 0 : index
    %c0_31 = arith.constant 0 : index
    %36 = vector.load %arg3[%c3, %c0_30, %c0_31] : memref<16x64x256xbf16, #tpu.memory_space<vmem>>, vector<1x64x256xbf16>
    %37 = vector.shape_cast %36 : vector<1x64x256xbf16> to vector<64x256xbf16>
    %38 = arith.extf %37 : vector<64x256xbf16> to vector<64x256xf32>
    %cst_32 = arith.constant dense<0.000000e+00> : vector<64x32xf32>
    %39 = tpu.matmul %38, %10, %cst_32 {dimension_numbers = #tpu.dot_dimension_numbers<[1], [0], [0], [1], [0, 0, 1, 1], [], []>} : vector<64x256xf32>, vector<256x32xf32>, vector<64x32xf32> -> vector<64x32xf32>
    %c3_33 = arith.constant 3 : index
    %c0_34 = arith.constant 0 : index
    %c0_35 = arith.constant 0 : index
    %40 = vector.load %arg4[%c3_33, %c0_34, %c0_35] : memref<16x32x64xf32, #tpu.memory_space<vmem>>, vector<1x32x64xf32>
    %41 = vector.shape_cast %40 : vector<1x32x64xf32> to vector<32x64xf32>
    %cst_36 = arith.constant dense<0.000000e+00> : vector<64x64xf32>
    %42 = tpu.matmul %39, %41, %cst_36 {dimension_numbers = #tpu.dot_dimension_numbers<[1], [0], [0], [1], [0, 0, 1, 1], [], []>} : vector<64x32xf32>, vector<32x64xf32>, vector<64x64xf32> -> vector<64x64xf32>
    %43 = arith.addf %35, %42 : vector<64x64xf32>
    %c4 = arith.constant 4 : index
    %c0_37 = arith.constant 0 : index
    %c0_38 = arith.constant 0 : index
    %44 = vector.load %arg3[%c4, %c0_37, %c0_38] : memref<16x64x256xbf16, #tpu.memory_space<vmem>>, vector<1x64x256xbf16>
    %45 = vector.shape_cast %44 : vector<1x64x256xbf16> to vector<64x256xbf16>
    %46 = arith.extf %45 : vector<64x256xbf16> to vector<64x256xf32>
    %cst_39 = arith.constant dense<0.000000e+00> : vector<64x32xf32>
    %47 = tpu.matmul %46, %10, %cst_39 {dimension_numbers = #tpu.dot_dimension_numbers<[1], [0], [0], [1], [0, 0, 1, 1], [], []>} : vector<64x256xf32>, vector<256x32xf32>, vector<64x32xf32> -> vector<64x32xf32>
    %c4_40 = arith.constant 4 : index
    %c0_41 = arith.constant 0 : index
    %c0_42 = arith.constant 0 : index
    %48 = vector.load %arg4[%c4_40, %c0_41, %c0_42] : memref<16x32x64xf32, #tpu.memory_space<vmem>>, vector<1x32x64xf32>
    %49 = vector.shape_cast %48 : vector<1x32x64xf32> to vector<32x64xf32>
    %cst_43 = arith.constant dense<0.000000e+00> : vector<64x64xf32>
    %50 = tpu.matmul %47, %49, %cst_43 {dimension_numbers = #tpu.dot_dimension_numbers<[1], [0], [0], [1], [0, 0, 1, 1], [], []>} : vector<64x32xf32>, vector<32x64xf32>, vector<64x64xf32> -> vector<64x64xf32>
    %51 = arith.addf %43, %50 : vector<64x64xf32>
    %c5 = arith.constant 5 : index
    %c0_44 = arith.constant 0 : index
    %c0_45 = arith.constant 0 : index
    %52 = vector.load %arg3[%c5, %c0_44, %c0_45] : memref<16x64x256xbf16, #tpu.memory_space<vmem>>, vector<1x64x256xbf16>
    %53 = vector.shape_cast %52 : vector<1x64x256xbf16> to vector<64x256xbf16>
    %54 = arith.extf %53 : vector<64x256xbf16> to vector<64x256xf32>
    %cst_46 = arith.constant dense<0.000000e+00> : vector<64x32xf32>
    %55 = tpu.matmul %54, %10, %cst_46 {dimension_numbers = #tpu.dot_dimension_numbers<[1], [0], [0], [1], [0, 0, 1, 1], [], []>} : vector<64x256xf32>, vector<256x32xf32>, vector<64x32xf32> -> vector<64x32xf32>
    %c5_47 = arith.constant 5 : index
    %c0_48 = arith.constant 0 : index
    %c0_49 = arith.constant 0 : index
    %56 = vector.load %arg4[%c5_47, %c0_48, %c0_49] : memref<16x32x64xf32, #tpu.memory_space<vmem>>, vector<1x32x64xf32>
    %57 = vector.shape_cast %56 : vector<1x32x64xf32> to vector<32x64xf32>
    %cst_50 = arith.constant dense<0.000000e+00> : vector<64x64xf32>
    %58 = tpu.matmul %55, %57, %cst_50 {dimension_numbers = #tpu.dot_dimension_numbers<[1], [0], [0], [1], [0, 0, 1, 1], [], []>} : vector<64x32xf32>, vector<32x64xf32>, vector<64x64xf32> -> vector<64x64xf32>
    %59 = arith.addf %51, %58 : vector<64x64xf32>
    %c6 = arith.constant 6 : index
    %c0_51 = arith.constant 0 : index
    %c0_52 = arith.constant 0 : index
    %60 = vector.load %arg3[%c6, %c0_51, %c0_52] : memref<16x64x256xbf16, #tpu.memory_space<vmem>>, vector<1x64x256xbf16>
    %61 = vector.shape_cast %60 : vector<1x64x256xbf16> to vector<64x256xbf16>
    %62 = arith.extf %61 : vector<64x256xbf16> to vector<64x256xf32>
    %cst_53 = arith.constant dense<0.000000e+00> : vector<64x32xf32>
    %63 = tpu.matmul %62, %10, %cst_53 {dimension_numbers = #tpu.dot_dimension_numbers<[1], [0], [0], [1], [0, 0, 1, 1], [], []>} : vector<64x256xf32>, vector<256x32xf32>, vector<64x32xf32> -> vector<64x32xf32>
    %c6_54 = arith.constant 6 : index
    %c0_55 = arith.constant 0 : index
    %c0_56 = arith.constant 0 : index
    %64 = vector.load %arg4[%c6_54, %c0_55, %c0_56] : memref<16x32x64xf32, #tpu.memory_space<vmem>>, vector<1x32x64xf32>
    %65 = vector.shape_cast %64 : vector<1x32x64xf32> to vector<32x64xf32>
    %cst_57 = arith.constant dense<0.000000e+00> : vector<64x64xf32>
    %66 = tpu.matmul %63, %65, %cst_57 {dimension_numbers = #tpu.dot_dimension_numbers<[1], [0], [0], [1], [0, 0, 1, 1], [], []>} : vector<64x32xf32>, vector<32x64xf32>, vector<64x64xf32> -> vector<64x64xf32>
    %67 = arith.addf %59, %66 : vector<64x64xf32>
    %c7 = arith.constant 7 : index
    %c0_58 = arith.constant 0 : index
    %c0_59 = arith.constant 0 : index
    %68 = vector.load %arg3[%c7, %c0_58, %c0_59] : memref<16x64x256xbf16, #tpu.memory_space<vmem>>, vector<1x64x256xbf16>
    %69 = vector.shape_cast %68 : vector<1x64x256xbf16> to vector<64x256xbf16>
    %70 = arith.extf %69 : vector<64x256xbf16> to vector<64x256xf32>
    %cst_60 = arith.constant dense<0.000000e+00> : vector<64x32xf32>
    %71 = tpu.matmul %70, %10, %cst_60 {dimension_numbers = #tpu.dot_dimension_numbers<[1], [0], [0], [1], [0, 0, 1, 1], [], []>} : vector<64x256xf32>, vector<256x32xf32>, vector<64x32xf32> -> vector<64x32xf32>
    %c7_61 = arith.constant 7 : index
    %c0_62 = arith.constant 0 : index
    %c0_63 = arith.constant 0 : index
    %72 = vector.load %arg4[%c7_61, %c0_62, %c0_63] : memref<16x32x64xf32, #tpu.memory_space<vmem>>, vector<1x32x64xf32>
    %73 = vector.shape_cast %72 : vector<1x32x64xf32> to vector<32x64xf32>
    %cst_64 = arith.constant dense<0.000000e+00> : vector<64x64xf32>
    %74 = tpu.matmul %71, %73, %cst_64 {dimension_numbers = #tpu.dot_dimension_numbers<[1], [0], [0], [1], [0, 0, 1, 1], [], []>} : vector<64x32xf32>, vector<32x64xf32>, vector<64x64xf32> -> vector<64x64xf32>
    %75 = arith.addf %67, %74 : vector<64x64xf32>
    %c8 = arith.constant 8 : index
    %c0_65 = arith.constant 0 : index
    %c0_66 = arith.constant 0 : index
    %76 = vector.load %arg3[%c8, %c0_65, %c0_66] : memref<16x64x256xbf16, #tpu.memory_space<vmem>>, vector<1x64x256xbf16>
    %77 = vector.shape_cast %76 : vector<1x64x256xbf16> to vector<64x256xbf16>
    %78 = arith.extf %77 : vector<64x256xbf16> to vector<64x256xf32>
    %cst_67 = arith.constant dense<0.000000e+00> : vector<64x32xf32>
    %79 = tpu.matmul %78, %10, %cst_67 {dimension_numbers = #tpu.dot_dimension_numbers<[1], [0], [0], [1], [0, 0, 1, 1], [], []>} : vector<64x256xf32>, vector<256x32xf32>, vector<64x32xf32> -> vector<64x32xf32>
    %c8_68 = arith.constant 8 : index
    %c0_69 = arith.constant 0 : index
    %c0_70 = arith.constant 0 : index
    %80 = vector.load %arg4[%c8_68, %c0_69, %c0_70] : memref<16x32x64xf32, #tpu.memory_space<vmem>>, vector<1x32x64xf32>
    %81 = vector.shape_cast %80 : vector<1x32x64xf32> to vector<32x64xf32>
    %cst_71 = arith.constant dense<0.000000e+00> : vector<64x64xf32>
    %82 = tpu.matmul %79, %81, %cst_71 {dimension_numbers = #tpu.dot_dimension_numbers<[1], [0], [0], [1], [0, 0, 1, 1], [], []>} : vector<64x32xf32>, vector<32x64xf32>, vector<64x64xf32> -> vector<64x64xf32>
    %83 = arith.addf %75, %82 : vector<64x64xf32>
    %c9 = arith.constant 9 : index
    %c0_72 = arith.constant 0 : index
    %c0_73 = arith.constant 0 : index
    %84 = vector.load %arg3[%c9, %c0_72, %c0_73] : memref<16x64x256xbf16, #tpu.memory_space<vmem>>, vector<1x64x256xbf16>
    %85 = vector.shape_cast %84 : vector<1x64x256xbf16> to vector<64x256xbf16>
    %86 = arith.extf %85 : vector<64x256xbf16> to vector<64x256xf32>
    %cst_74 = arith.constant dense<0.000000e+00> : vector<64x32xf32>
    %87 = tpu.matmul %86, %10, %cst_74 {dimension_numbers = #tpu.dot_dimension_numbers<[1], [0], [0], [1], [0, 0, 1, 1], [], []>} : vector<64x256xf32>, vector<256x32xf32>, vector<64x32xf32> -> vector<64x32xf32>
    %c9_75 = arith.constant 9 : index
    %c0_76 = arith.constant 0 : index
    %c0_77 = arith.constant 0 : index
    %88 = vector.load %arg4[%c9_75, %c0_76, %c0_77] : memref<16x32x64xf32, #tpu.memory_space<vmem>>, vector<1x32x64xf32>
    %89 = vector.shape_cast %88 : vector<1x32x64xf32> to vector<32x64xf32>
    %cst_78 = arith.constant dense<0.000000e+00> : vector<64x64xf32>
    %90 = tpu.matmul %87, %89, %cst_78 {dimension_numbers = #tpu.dot_dimension_numbers<[1], [0], [0], [1], [0, 0, 1, 1], [], []>} : vector<64x32xf32>, vector<32x64xf32>, vector<64x64xf32> -> vector<64x64xf32>
    %91 = arith.addf %83, %90 : vector<64x64xf32>
    %c10 = arith.constant 10 : index
    %c0_79 = arith.constant 0 : index
    %c0_80 = arith.constant 0 : index
    %92 = vector.load %arg3[%c10, %c0_79, %c0_80] : memref<16x64x256xbf16, #tpu.memory_space<vmem>>, vector<1x64x256xbf16>
    %93 = vector.shape_cast %92 : vector<1x64x256xbf16> to vector<64x256xbf16>
    %94 = arith.extf %93 : vector<64x256xbf16> to vector<64x256xf32>
    %cst_81 = arith.constant dense<0.000000e+00> : vector<64x32xf32>
    %95 = tpu.matmul %94, %10, %cst_81 {dimension_numbers = #tpu.dot_dimension_numbers<[1], [0], [0], [1], [0, 0, 1, 1], [], []>} : vector<64x256xf32>, vector<256x32xf32>, vector<64x32xf32> -> vector<64x32xf32>
    %c10_82 = arith.constant 10 : index
    %c0_83 = arith.constant 0 : index
    %c0_84 = arith.constant 0 : index
    %96 = vector.load %arg4[%c10_82, %c0_83, %c0_84] : memref<16x32x64xf32, #tpu.memory_space<vmem>>, vector<1x32x64xf32>
    %97 = vector.shape_cast %96 : vector<1x32x64xf32> to vector<32x64xf32>
    %cst_85 = arith.constant dense<0.000000e+00> : vector<64x64xf32>
    %98 = tpu.matmul %95, %97, %cst_85 {dimension_numbers = #tpu.dot_dimension_numbers<[1], [0], [0], [1], [0, 0, 1, 1], [], []>} : vector<64x32xf32>, vector<32x64xf32>, vector<64x64xf32> -> vector<64x64xf32>
    %99 = arith.addf %91, %98 : vector<64x64xf32>
    %c11 = arith.constant 11 : index
    %c0_86 = arith.constant 0 : index
    %c0_87 = arith.constant 0 : index
    %100 = vector.load %arg3[%c11, %c0_86, %c0_87] : memref<16x64x256xbf16, #tpu.memory_space<vmem>>, vector<1x64x256xbf16>
    %101 = vector.shape_cast %100 : vector<1x64x256xbf16> to vector<64x256xbf16>
    %102 = arith.extf %101 : vector<64x256xbf16> to vector<64x256xf32>
    %cst_88 = arith.constant dense<0.000000e+00> : vector<64x32xf32>
    %103 = tpu.matmul %102, %10, %cst_88 {dimension_numbers = #tpu.dot_dimension_numbers<[1], [0], [0], [1], [0, 0, 1, 1], [], []>} : vector<64x256xf32>, vector<256x32xf32>, vector<64x32xf32> -> vector<64x32xf32>
    %c11_89 = arith.constant 11 : index
    %c0_90 = arith.constant 0 : index
    %c0_91 = arith.constant 0 : index
    %104 = vector.load %arg4[%c11_89, %c0_90, %c0_91] : memref<16x32x64xf32, #tpu.memory_space<vmem>>, vector<1x32x64xf32>
    %105 = vector.shape_cast %104 : vector<1x32x64xf32> to vector<32x64xf32>
    %cst_92 = arith.constant dense<0.000000e+00> : vector<64x64xf32>
    %106 = tpu.matmul %103, %105, %cst_92 {dimension_numbers = #tpu.dot_dimension_numbers<[1], [0], [0], [1], [0, 0, 1, 1], [], []>} : vector<64x32xf32>, vector<32x64xf32>, vector<64x64xf32> -> vector<64x64xf32>
    %107 = arith.addf %99, %106 : vector<64x64xf32>
    %c12 = arith.constant 12 : index
    %c0_93 = arith.constant 0 : index
    %c0_94 = arith.constant 0 : index
    %108 = vector.load %arg3[%c12, %c0_93, %c0_94] : memref<16x64x256xbf16, #tpu.memory_space<vmem>>, vector<1x64x256xbf16>
    %109 = vector.shape_cast %108 : vector<1x64x256xbf16> to vector<64x256xbf16>
    %110 = arith.extf %109 : vector<64x256xbf16> to vector<64x256xf32>
    %cst_95 = arith.constant dense<0.000000e+00> : vector<64x32xf32>
    %111 = tpu.matmul %110, %10, %cst_95 {dimension_numbers = #tpu.dot_dimension_numbers<[1], [0], [0], [1], [0, 0, 1, 1], [], []>} : vector<64x256xf32>, vector<256x32xf32>, vector<64x32xf32> -> vector<64x32xf32>
    %c12_96 = arith.constant 12 : index
    %c0_97 = arith.constant 0 : index
    %c0_98 = arith.constant 0 : index
    %112 = vector.load %arg4[%c12_96, %c0_97, %c0_98] : memref<16x32x64xf32, #tpu.memory_space<vmem>>, vector<1x32x64xf32>
    %113 = vector.shape_cast %112 : vector<1x32x64xf32> to vector<32x64xf32>
    %cst_99 = arith.constant dense<0.000000e+00> : vector<64x64xf32>
    %114 = tpu.matmul %111, %113, %cst_99 {dimension_numbers = #tpu.dot_dimension_numbers<[1], [0], [0], [1], [0, 0, 1, 1], [], []>} : vector<64x32xf32>, vector<32x64xf32>, vector<64x64xf32> -> vector<64x64xf32>
    %115 = arith.addf %107, %114 : vector<64x64xf32>
    %c13 = arith.constant 13 : index
    %c0_100 = arith.constant 0 : index
    %c0_101 = arith.constant 0 : index
    %116 = vector.load %arg3[%c13, %c0_100, %c0_101] : memref<16x64x256xbf16, #tpu.memory_space<vmem>>, vector<1x64x256xbf16>
    %117 = vector.shape_cast %116 : vector<1x64x256xbf16> to vector<64x256xbf16>
    %118 = arith.extf %117 : vector<64x256xbf16> to vector<64x256xf32>
    %cst_102 = arith.constant dense<0.000000e+00> : vector<64x32xf32>
    %119 = tpu.matmul %118, %10, %cst_102 {dimension_numbers = #tpu.dot_dimension_numbers<[1], [0], [0], [1], [0, 0, 1, 1], [], []>} : vector<64x256xf32>, vector<256x32xf32>, vector<64x32xf32> -> vector<64x32xf32>
    %c13_103 = arith.constant 13 : index
    %c0_104 = arith.constant 0 : index
    %c0_105 = arith.constant 0 : index
    %120 = vector.load %arg4[%c13_103, %c0_104, %c0_105] : memref<16x32x64xf32, #tpu.memory_space<vmem>>, vector<1x32x64xf32>
    %121 = vector.shape_cast %120 : vector<1x32x64xf32> to vector<32x64xf32>
    %cst_106 = arith.constant dense<0.000000e+00> : vector<64x64xf32>
    %122 = tpu.matmul %119, %121, %cst_106 {dimension_numbers = #tpu.dot_dimension_numbers<[1], [0], [0], [1], [0, 0, 1, 1], [], []>} : vector<64x32xf32>, vector<32x64xf32>, vector<64x64xf32> -> vector<64x64xf32>
    %123 = arith.addf %115, %122 : vector<64x64xf32>
    %c14 = arith.constant 14 : index
    %c0_107 = arith.constant 0 : index
    %c0_108 = arith.constant 0 : index
    %124 = vector.load %arg3[%c14, %c0_107, %c0_108] : memref<16x64x256xbf16, #tpu.memory_space<vmem>>, vector<1x64x256xbf16>
    %125 = vector.shape_cast %124 : vector<1x64x256xbf16> to vector<64x256xbf16>
    %126 = arith.extf %125 : vector<64x256xbf16> to vector<64x256xf32>
    %cst_109 = arith.constant dense<0.000000e+00> : vector<64x32xf32>
    %127 = tpu.matmul %126, %10, %cst_109 {dimension_numbers = #tpu.dot_dimension_numbers<[1], [0], [0], [1], [0, 0, 1, 1], [], []>} : vector<64x256xf32>, vector<256x32xf32>, vector<64x32xf32> -> vector<64x32xf32>
    %c14_110 = arith.constant 14 : index
    %c0_111 = arith.constant 0 : index
    %c0_112 = arith.constant 0 : index
    %128 = vector.load %arg4[%c14_110, %c0_111, %c0_112] : memref<16x32x64xf32, #tpu.memory_space<vmem>>, vector<1x32x64xf32>
    %129 = vector.shape_cast %128 : vector<1x32x64xf32> to vector<32x64xf32>
    %cst_113 = arith.constant dense<0.000000e+00> : vector<64x64xf32>
    %130 = tpu.matmul %127, %129, %cst_113 {dimension_numbers = #tpu.dot_dimension_numbers<[1], [0], [0], [1], [0, 0, 1, 1], [], []>} : vector<64x32xf32>, vector<32x64xf32>, vector<64x64xf32> -> vector<64x64xf32>
    %131 = arith.addf %123, %130 : vector<64x64xf32>
    %c15 = arith.constant 15 : index
    %c0_114 = arith.constant 0 : index
    %c0_115 = arith.constant 0 : index
    %132 = vector.load %arg3[%c15, %c0_114, %c0_115] : memref<16x64x256xbf16, #tpu.memory_space<vmem>>, vector<1x64x256xbf16>
    %133 = vector.shape_cast %132 : vector<1x64x256xbf16> to vector<64x256xbf16>
    %134 = arith.extf %133 : vector<64x256xbf16> to vector<64x256xf32>
    %cst_116 = arith.constant dense<0.000000e+00> : vector<64x32xf32>
    %135 = tpu.matmul %134, %10, %cst_116 {dimension_numbers = #tpu.dot_dimension_numbers<[1], [0], [0], [1], [0, 0, 1, 1], [], []>} : vector<64x256xf32>, vector<256x32xf32>, vector<64x32xf32> -> vector<64x32xf32>
    %c15_117 = arith.constant 15 : index
    %c0_118 = arith.constant 0 : index
    %c0_119 = arith.constant 0 : index
    %136 = vector.load %arg4[%c15_117, %c0_118, %c0_119] : memref<16x32x64xf32, #tpu.memory_space<vmem>>, vector<1x32x64xf32>
    %137 = vector.shape_cast %136 : vector<1x32x64xf32> to vector<32x64xf32>
    %cst_120 = arith.constant dense<0.000000e+00> : vector<64x64xf32>
    %138 = tpu.matmul %135, %137, %cst_120 {dimension_numbers = #tpu.dot_dimension_numbers<[1], [0], [0], [1], [0, 0, 1, 1], [], []>} : vector<64x32xf32>, vector<32x64xf32>, vector<64x64xf32> -> vector<64x64xf32>
    %139 = arith.addf %131, %138 : vector<64x64xf32>
    %c0_121 = arith.constant 0 : index
    %c0_122 = arith.constant 0 : index
    %140 = vector.load %arg5[%c0_121, %c0_122] : memref<64x64xf32, #tpu.memory_space<vmem>>, vector<64x64xf32>
    %cst_123 = arith.constant dense<0.000000e+00> : vector<64x64xf32>
    %141 = tpu.matmul %139, %140, %cst_123 {dimension_numbers = #tpu.dot_dimension_numbers<[1], [0], [0], [1], [0, 0, 1, 1], [], []>} : vector<64x64xf32>, vector<64x64xf32>, vector<64x64xf32> -> vector<64x64xf32>
    %cst_124 = arith.constant dense<0.000000e+00> : vector<64xf32>
    %142 = vector.multi_reduction <add>, %141, %cst_124 [0] : vector<64x64xf32> to vector<64xf32>
    %143 = vector.shape_cast %142 : vector<64xf32> to vector<1x64xf32>
    %cst_125 = arith.constant 6.400000e+01 : f32
    %144 = vector.broadcast %cst_125 : f32 to vector<1x64xf32>
    %145 = arith.divf %143, %144 : vector<1x64xf32>
    %146 = arith.mulf %139, %139 : vector<64x64xf32>
    %c0_126 = arith.constant 0 : index
    %c0_127 = arith.constant 0 : index
    %147 = vector.load %arg5[%c0_126, %c0_127] : memref<64x64xf32, #tpu.memory_space<vmem>>, vector<64x64xf32>
    %cst_128 = arith.constant dense<0.000000e+00> : vector<64x64xf32>
    %148 = tpu.matmul %146, %147, %cst_128 {dimension_numbers = #tpu.dot_dimension_numbers<[1], [0], [0], [1], [0, 0, 1, 1], [], []>} : vector<64x64xf32>, vector<64x64xf32>, vector<64x64xf32> -> vector<64x64xf32>
    %cst_129 = arith.constant dense<0.000000e+00> : vector<64xf32>
    %149 = vector.multi_reduction <add>, %148, %cst_129 [0] : vector<64x64xf32> to vector<64xf32>
    %150 = vector.shape_cast %149 : vector<64xf32> to vector<1x64xf32>
    %cst_130 = arith.constant 6.400000e+01 : f32
    %151 = vector.broadcast %cst_130 : f32 to vector<1x64xf32>
    %152 = arith.divf %150, %151 : vector<1x64xf32>
    %153 = arith.mulf %145, %145 : vector<1x64xf32>
    %154 = arith.subf %152, %153 : vector<1x64xf32>
    %155 = vector.broadcast %145 : vector<1x64xf32> to vector<64x64xf32>
    %156 = arith.subf %139, %155 : vector<64x64xf32>
    %cst_131 = arith.constant 9.99999974E-6 : f32
    %157 = vector.broadcast %cst_131 : f32 to vector<1x64xf32>
    %158 = arith.addf %154, %157 : vector<1x64xf32>
    %159 = math.rsqrt %158 : vector<1x64xf32>
    %160 = vector.broadcast %159 : vector<1x64xf32> to vector<64x64xf32>
    %161 = arith.mulf %156, %160 : vector<64x64xf32>
    %c0_132 = arith.constant 0 : index
    %c0_133 = arith.constant 0 : index
    %162 = vector.load %arg6[%c0_132, %c0_133] : memref<1x64xf32, #tpu.memory_space<vmem>>, vector<1x64xf32>
    %163 = vector.broadcast %162 : vector<1x64xf32> to vector<64x64xf32>
    %164 = arith.mulf %161, %163 : vector<64x64xf32>
    %c0_134 = arith.constant 0 : index
    %c0_135 = arith.constant 0 : index
    %165 = vector.load %arg7[%c0_134, %c0_135] : memref<1x64xf32, #tpu.memory_space<vmem>>, vector<1x64xf32>
    %166 = vector.broadcast %165 : vector<1x64xf32> to vector<64x64xf32>
    %167 = arith.addf %164, %166 : vector<64x64xf32>
    %cst_136 = arith.constant 0.000000e+00 : f32
    %168 = vector.broadcast %cst_136 : f32 to vector<64x64xf32>
    %169 = arith.cmpf ogt, %167, %168 : vector<64x64xf32>
    %cst_137 = arith.constant 2.000000e-01 : f32
    %170 = vector.broadcast %cst_137 : f32 to vector<64x64xf32>
    %171 = arith.mulf %170, %167 : vector<64x64xf32>
    %172 = arith.select %169, %167, %171 : vector<64x64xi1>, vector<64x64xf32>
    %cst_138 = arith.constant 0.000000e+00 : f32
    %173 = vector.broadcast %cst_138 : f32 to vector<16x128xf32>
    %c0_139 = arith.constant 0 : index
    %c0_140 = arith.constant 0 : index
    %c0_141 = arith.constant 0 : index
    %174 = vector.load %arg8[%c0_139, %c0_140, %c0_141] : memref<16x16x64xbf16, #tpu.memory_space<vmem>>, vector<1x16x64xbf16>
    %175 = vector.shape_cast %174 : vector<1x16x64xbf16> to vector<16x64xbf16>
    %176 = arith.extf %175 : vector<16x64xbf16> to vector<16x64xf32>
    %cst_142 = arith.constant dense<0.000000e+00> : vector<16x64xf32>
    %177 = tpu.matmul %176, %172, %cst_142 {dimension_numbers = #tpu.dot_dimension_numbers<[1], [0], [0], [1], [0, 0, 1, 1], [], []>} : vector<16x64xf32>, vector<64x64xf32>, vector<16x64xf32> -> vector<16x64xf32>
    %c0_143 = arith.constant 0 : index
    %c0_144 = arith.constant 0 : index
    %c0_145 = arith.constant 0 : index
    %178 = vector.load %arg9[%c0_143, %c0_144, %c0_145] : memref<16x64x128xf32, #tpu.memory_space<vmem>>, vector<1x64x128xf32>
    %179 = vector.shape_cast %178 : vector<1x64x128xf32> to vector<64x128xf32>
    %cst_146 = arith.constant dense<0.000000e+00> : vector<16x128xf32>
    %180 = tpu.matmul %177, %179, %cst_146 {dimension_numbers = #tpu.dot_dimension_numbers<[1], [0], [0], [1], [0, 0, 1, 1], [], []>} : vector<16x64xf32>, vector<64x128xf32>, vector<16x128xf32> -> vector<16x128xf32>
    %181 = arith.addf %173, %180 : vector<16x128xf32>
    %c1_147 = arith.constant 1 : index
    %c0_148 = arith.constant 0 : index
    %c0_149 = arith.constant 0 : index
    %182 = vector.load %arg8[%c1_147, %c0_148, %c0_149] : memref<16x16x64xbf16, #tpu.memory_space<vmem>>, vector<1x16x64xbf16>
    %183 = vector.shape_cast %182 : vector<1x16x64xbf16> to vector<16x64xbf16>
    %184 = arith.extf %183 : vector<16x64xbf16> to vector<16x64xf32>
    %cst_150 = arith.constant dense<0.000000e+00> : vector<16x64xf32>
    %185 = tpu.matmul %184, %172, %cst_150 {dimension_numbers = #tpu.dot_dimension_numbers<[1], [0], [0], [1], [0, 0, 1, 1], [], []>} : vector<16x64xf32>, vector<64x64xf32>, vector<16x64xf32> -> vector<16x64xf32>
    %c1_151 = arith.constant 1 : index
    %c0_152 = arith.constant 0 : index
    %c0_153 = arith.constant 0 : index
    %186 = vector.load %arg9[%c1_151, %c0_152, %c0_153] : memref<16x64x128xf32, #tpu.memory_space<vmem>>, vector<1x64x128xf32>
    %187 = vector.shape_cast %186 : vector<1x64x128xf32> to vector<64x128xf32>
    %cst_154 = arith.constant dense<0.000000e+00> : vector<16x128xf32>
    %188 = tpu.matmul %185, %187, %cst_154 {dimension_numbers = #tpu.dot_dimension_numbers<[1], [0], [0], [1], [0, 0, 1, 1], [], []>} : vector<16x64xf32>, vector<64x128xf32>, vector<16x128xf32> -> vector<16x128xf32>
    %189 = arith.addf %181, %188 : vector<16x128xf32>
    %c2_155 = arith.constant 2 : index
    %c0_156 = arith.constant 0 : index
    %c0_157 = arith.constant 0 : index
    %190 = vector.load %arg8[%c2_155, %c0_156, %c0_157] : memref<16x16x64xbf16, #tpu.memory_space<vmem>>, vector<1x16x64xbf16>
    %191 = vector.shape_cast %190 : vector<1x16x64xbf16> to vector<16x64xbf16>
    %192 = arith.extf %191 : vector<16x64xbf16> to vector<16x64xf32>
    %cst_158 = arith.constant dense<0.000000e+00> : vector<16x64xf32>
    %193 = tpu.matmul %192, %172, %cst_158 {dimension_numbers = #tpu.dot_dimension_numbers<[1], [0], [0], [1], [0, 0, 1, 1], [], []>} : vector<16x64xf32>, vector<64x64xf32>, vector<16x64xf32> -> vector<16x64xf32>
    %c2_159 = arith.constant 2 : index
    %c0_160 = arith.constant 0 : index
    %c0_161 = arith.constant 0 : index
    %194 = vector.load %arg9[%c2_159, %c0_160, %c0_161] : memref<16x64x128xf32, #tpu.memory_space<vmem>>, vector<1x64x128xf32>
    %195 = vector.shape_cast %194 : vector<1x64x128xf32> to vector<64x128xf32>
    %cst_162 = arith.constant dense<0.000000e+00> : vector<16x128xf32>
    %196 = tpu.matmul %193, %195, %cst_162 {dimension_numbers = #tpu.dot_dimension_numbers<[1], [0], [0], [1], [0, 0, 1, 1], [], []>} : vector<16x64xf32>, vector<64x128xf32>, vector<16x128xf32> -> vector<16x128xf32>
    %197 = arith.addf %189, %196 : vector<16x128xf32>
    %c3_163 = arith.constant 3 : index
    %c0_164 = arith.constant 0 : index
    %c0_165 = arith.constant 0 : index
    %198 = vector.load %arg8[%c3_163, %c0_164, %c0_165] : memref<16x16x64xbf16, #tpu.memory_space<vmem>>, vector<1x16x64xbf16>
    %199 = vector.shape_cast %198 : vector<1x16x64xbf16> to vector<16x64xbf16>
    %200 = arith.extf %199 : vector<16x64xbf16> to vector<16x64xf32>
    %cst_166 = arith.constant dense<0.000000e+00> : vector<16x64xf32>
    %201 = tpu.matmul %200, %172, %cst_166 {dimension_numbers = #tpu.dot_dimension_numbers<[1], [0], [0], [1], [0, 0, 1, 1], [], []>} : vector<16x64xf32>, vector<64x64xf32>, vector<16x64xf32> -> vector<16x64xf32>
    %c3_167 = arith.constant 3 : index
    %c0_168 = arith.constant 0 : index
    %c0_169 = arith.constant 0 : index
    %202 = vector.load %arg9[%c3_167, %c0_168, %c0_169] : memref<16x64x128xf32, #tpu.memory_space<vmem>>, vector<1x64x128xf32>
    %203 = vector.shape_cast %202 : vector<1x64x128xf32> to vector<64x128xf32>
    %cst_170 = arith.constant dense<0.000000e+00> : vector<16x128xf32>
    %204 = tpu.matmul %201, %203, %cst_170 {dimension_numbers = #tpu.dot_dimension_numbers<[1], [0], [0], [1], [0, 0, 1, 1], [], []>} : vector<16x64xf32>, vector<64x128xf32>, vector<16x128xf32> -> vector<16x128xf32>
    %205 = arith.addf %197, %204 : vector<16x128xf32>
    %c4_171 = arith.constant 4 : index
    %c0_172 = arith.constant 0 : index
    %c0_173 = arith.constant 0 : index
    %206 = vector.load %arg8[%c4_171, %c0_172, %c0_173] : memref<16x16x64xbf16, #tpu.memory_space<vmem>>, vector<1x16x64xbf16>
    %207 = vector.shape_cast %206 : vector<1x16x64xbf16> to vector<16x64xbf16>
    %208 = arith.extf %207 : vector<16x64xbf16> to vector<16x64xf32>
    %cst_174 = arith.constant dense<0.000000e+00> : vector<16x64xf32>
    %209 = tpu.matmul %208, %172, %cst_174 {dimension_numbers = #tpu.dot_dimension_numbers<[1], [0], [0], [1], [0, 0, 1, 1], [], []>} : vector<16x64xf32>, vector<64x64xf32>, vector<16x64xf32> -> vector<16x64xf32>
    %c4_175 = arith.constant 4 : index
    %c0_176 = arith.constant 0 : index
    %c0_177 = arith.constant 0 : index
    %210 = vector.load %arg9[%c4_175, %c0_176, %c0_177] : memref<16x64x128xf32, #tpu.memory_space<vmem>>, vector<1x64x128xf32>
    %211 = vector.shape_cast %210 : vector<1x64x128xf32> to vector<64x128xf32>
    %cst_178 = arith.constant dense<0.000000e+00> : vector<16x128xf32>
    %212 = tpu.matmul %209, %211, %cst_178 {dimension_numbers = #tpu.dot_dimension_numbers<[1], [0], [0], [1], [0, 0, 1, 1], [], []>} : vector<16x64xf32>, vector<64x128xf32>, vector<16x128xf32> -> vector<16x128xf32>
    %213 = arith.addf %205, %212 : vector<16x128xf32>
    %c5_179 = arith.constant 5 : index
    %c0_180 = arith.constant 0 : index
    %c0_181 = arith.constant 0 : index
    %214 = vector.load %arg8[%c5_179, %c0_180, %c0_181] : memref<16x16x64xbf16, #tpu.memory_space<vmem>>, vector<1x16x64xbf16>
    %215 = vector.shape_cast %214 : vector<1x16x64xbf16> to vector<16x64xbf16>
    %216 = arith.extf %215 : vector<16x64xbf16> to vector<16x64xf32>
    %cst_182 = arith.constant dense<0.000000e+00> : vector<16x64xf32>
    %217 = tpu.matmul %216, %172, %cst_182 {dimension_numbers = #tpu.dot_dimension_numbers<[1], [0], [0], [1], [0, 0, 1, 1], [], []>} : vector<16x64xf32>, vector<64x64xf32>, vector<16x64xf32> -> vector<16x64xf32>
    %c5_183 = arith.constant 5 : index
    %c0_184 = arith.constant 0 : index
    %c0_185 = arith.constant 0 : index
    %218 = vector.load %arg9[%c5_183, %c0_184, %c0_185] : memref<16x64x128xf32, #tpu.memory_space<vmem>>, vector<1x64x128xf32>
    %219 = vector.shape_cast %218 : vector<1x64x128xf32> to vector<64x128xf32>
    %cst_186 = arith.constant dense<0.000000e+00> : vector<16x128xf32>
    %220 = tpu.matmul %217, %219, %cst_186 {dimension_numbers = #tpu.dot_dimension_numbers<[1], [0], [0], [1], [0, 0, 1, 1], [], []>} : vector<16x64xf32>, vector<64x128xf32>, vector<16x128xf32> -> vector<16x128xf32>
    %221 = arith.addf %213, %220 : vector<16x128xf32>
    %c6_187 = arith.constant 6 : index
    %c0_188 = arith.constant 0 : index
    %c0_189 = arith.constant 0 : index
    %222 = vector.load %arg8[%c6_187, %c0_188, %c0_189] : memref<16x16x64xbf16, #tpu.memory_space<vmem>>, vector<1x16x64xbf16>
    %223 = vector.shape_cast %222 : vector<1x16x64xbf16> to vector<16x64xbf16>
    %224 = arith.extf %223 : vector<16x64xbf16> to vector<16x64xf32>
    %cst_190 = arith.constant dense<0.000000e+00> : vector<16x64xf32>
    %225 = tpu.matmul %224, %172, %cst_190 {dimension_numbers = #tpu.dot_dimension_numbers<[1], [0], [0], [1], [0, 0, 1, 1], [], []>} : vector<16x64xf32>, vector<64x64xf32>, vector<16x64xf32> -> vector<16x64xf32>
    %c6_191 = arith.constant 6 : index
    %c0_192 = arith.constant 0 : index
    %c0_193 = arith.constant 0 : index
    %226 = vector.load %arg9[%c6_191, %c0_192, %c0_193] : memref<16x64x128xf32, #tpu.memory_space<vmem>>, vector<1x64x128xf32>
    %227 = vector.shape_cast %226 : vector<1x64x128xf32> to vector<64x128xf32>
    %cst_194 = arith.constant dense<0.000000e+00> : vector<16x128xf32>
    %228 = tpu.matmul %225, %227, %cst_194 {dimension_numbers = #tpu.dot_dimension_numbers<[1], [0], [0], [1], [0, 0, 1, 1], [], []>} : vector<16x64xf32>, vector<64x128xf32>, vector<16x128xf32> -> vector<16x128xf32>
    %229 = arith.addf %221, %228 : vector<16x128xf32>
    %c7_195 = arith.constant 7 : index
    %c0_196 = arith.constant 0 : index
    %c0_197 = arith.constant 0 : index
    %230 = vector.load %arg8[%c7_195, %c0_196, %c0_197] : memref<16x16x64xbf16, #tpu.memory_space<vmem>>, vector<1x16x64xbf16>
    %231 = vector.shape_cast %230 : vector<1x16x64xbf16> to vector<16x64xbf16>
    %232 = arith.extf %231 : vector<16x64xbf16> to vector<16x64xf32>
    %cst_198 = arith.constant dense<0.000000e+00> : vector<16x64xf32>
    %233 = tpu.matmul %232, %172, %cst_198 {dimension_numbers = #tpu.dot_dimension_numbers<[1], [0], [0], [1], [0, 0, 1, 1], [], []>} : vector<16x64xf32>, vector<64x64xf32>, vector<16x64xf32> -> vector<16x64xf32>
    %c7_199 = arith.constant 7 : index
    %c0_200 = arith.constant 0 : index
    %c0_201 = arith.constant 0 : index
    %234 = vector.load %arg9[%c7_199, %c0_200, %c0_201] : memref<16x64x128xf32, #tpu.memory_space<vmem>>, vector<1x64x128xf32>
    %235 = vector.shape_cast %234 : vector<1x64x128xf32> to vector<64x128xf32>
    %cst_202 = arith.constant dense<0.000000e+00> : vector<16x128xf32>
    %236 = tpu.matmul %233, %235, %cst_202 {dimension_numbers = #tpu.dot_dimension_numbers<[1], [0], [0], [1], [0, 0, 1, 1], [], []>} : vector<16x64xf32>, vector<64x128xf32>, vector<16x128xf32> -> vector<16x128xf32>
    %237 = arith.addf %229, %236 : vector<16x128xf32>
    %c8_203 = arith.constant 8 : index
    %c0_204 = arith.constant 0 : index
    %c0_205 = arith.constant 0 : index
    %238 = vector.load %arg8[%c8_203, %c0_204, %c0_205] : memref<16x16x64xbf16, #tpu.memory_space<vmem>>, vector<1x16x64xbf16>
    %239 = vector.shape_cast %238 : vector<1x16x64xbf16> to vector<16x64xbf16>
    %240 = arith.extf %239 : vector<16x64xbf16> to vector<16x64xf32>
    %cst_206 = arith.constant dense<0.000000e+00> : vector<16x64xf32>
    %241 = tpu.matmul %240, %172, %cst_206 {dimension_numbers = #tpu.dot_dimension_numbers<[1], [0], [0], [1], [0, 0, 1, 1], [], []>} : vector<16x64xf32>, vector<64x64xf32>, vector<16x64xf32> -> vector<16x64xf32>
    %c8_207 = arith.constant 8 : index
    %c0_208 = arith.constant 0 : index
    %c0_209 = arith.constant 0 : index
    %242 = vector.load %arg9[%c8_207, %c0_208, %c0_209] : memref<16x64x128xf32, #tpu.memory_space<vmem>>, vector<1x64x128xf32>
    %243 = vector.shape_cast %242 : vector<1x64x128xf32> to vector<64x128xf32>
    %cst_210 = arith.constant dense<0.000000e+00> : vector<16x128xf32>
    %244 = tpu.matmul %241, %243, %cst_210 {dimension_numbers = #tpu.dot_dimension_numbers<[1], [0], [0], [1], [0, 0, 1, 1], [], []>} : vector<16x64xf32>, vector<64x128xf32>, vector<16x128xf32> -> vector<16x128xf32>
    %245 = arith.addf %237, %244 : vector<16x128xf32>
    %c9_211 = arith.constant 9 : index
    %c0_212 = arith.constant 0 : index
    %c0_213 = arith.constant 0 : index
    %246 = vector.load %arg8[%c9_211, %c0_212, %c0_213] : memref<16x16x64xbf16, #tpu.memory_space<vmem>>, vector<1x16x64xbf16>
    %247 = vector.shape_cast %246 : vector<1x16x64xbf16> to vector<16x64xbf16>
    %248 = arith.extf %247 : vector<16x64xbf16> to vector<16x64xf32>
    %cst_214 = arith.constant dense<0.000000e+00> : vector<16x64xf32>
    %249 = tpu.matmul %248, %172, %cst_214 {dimension_numbers = #tpu.dot_dimension_numbers<[1], [0], [0], [1], [0, 0, 1, 1], [], []>} : vector<16x64xf32>, vector<64x64xf32>, vector<16x64xf32> -> vector<16x64xf32>
    %c9_215 = arith.constant 9 : index
    %c0_216 = arith.constant 0 : index
    %c0_217 = arith.constant 0 : index
    %250 = vector.load %arg9[%c9_215, %c0_216, %c0_217] : memref<16x64x128xf32, #tpu.memory_space<vmem>>, vector<1x64x128xf32>
    %251 = vector.shape_cast %250 : vector<1x64x128xf32> to vector<64x128xf32>
    %cst_218 = arith.constant dense<0.000000e+00> : vector<16x128xf32>
    %252 = tpu.matmul %249, %251, %cst_218 {dimension_numbers = #tpu.dot_dimension_numbers<[1], [0], [0], [1], [0, 0, 1, 1], [], []>} : vector<16x64xf32>, vector<64x128xf32>, vector<16x128xf32> -> vector<16x128xf32>
    %253 = arith.addf %245, %252 : vector<16x128xf32>
    %c10_219 = arith.constant 10 : index
    %c0_220 = arith.constant 0 : index
    %c0_221 = arith.constant 0 : index
    %254 = vector.load %arg8[%c10_219, %c0_220, %c0_221] : memref<16x16x64xbf16, #tpu.memory_space<vmem>>, vector<1x16x64xbf16>
    %255 = vector.shape_cast %254 : vector<1x16x64xbf16> to vector<16x64xbf16>
    %256 = arith.extf %255 : vector<16x64xbf16> to vector<16x64xf32>
    %cst_222 = arith.constant dense<0.000000e+00> : vector<16x64xf32>
    %257 = tpu.matmul %256, %172, %cst_222 {dimension_numbers = #tpu.dot_dimension_numbers<[1], [0], [0], [1], [0, 0, 1, 1], [], []>} : vector<16x64xf32>, vector<64x64xf32>, vector<16x64xf32> -> vector<16x64xf32>
    %c10_223 = arith.constant 10 : index
    %c0_224 = arith.constant 0 : index
    %c0_225 = arith.constant 0 : index
    %258 = vector.load %arg9[%c10_223, %c0_224, %c0_225] : memref<16x64x128xf32, #tpu.memory_space<vmem>>, vector<1x64x128xf32>
    %259 = vector.shape_cast %258 : vector<1x64x128xf32> to vector<64x128xf32>
    %cst_226 = arith.constant dense<0.000000e+00> : vector<16x128xf32>
    %260 = tpu.matmul %257, %259, %cst_226 {dimension_numbers = #tpu.dot_dimension_numbers<[1], [0], [0], [1], [0, 0, 1, 1], [], []>} : vector<16x64xf32>, vector<64x128xf32>, vector<16x128xf32> -> vector<16x128xf32>
    %261 = arith.addf %253, %260 : vector<16x128xf32>
    %c11_227 = arith.constant 11 : index
    %c0_228 = arith.constant 0 : index
    %c0_229 = arith.constant 0 : index
    %262 = vector.load %arg8[%c11_227, %c0_228, %c0_229] : memref<16x16x64xbf16, #tpu.memory_space<vmem>>, vector<1x16x64xbf16>
    %263 = vector.shape_cast %262 : vector<1x16x64xbf16> to vector<16x64xbf16>
    %264 = arith.extf %263 : vector<16x64xbf16> to vector<16x64xf32>
    %cst_230 = arith.constant dense<0.000000e+00> : vector<16x64xf32>
    %265 = tpu.matmul %264, %172, %cst_230 {dimension_numbers = #tpu.dot_dimension_numbers<[1], [0], [0], [1], [0, 0, 1, 1], [], []>} : vector<16x64xf32>, vector<64x64xf32>, vector<16x64xf32> -> vector<16x64xf32>
    %c11_231 = arith.constant 11 : index
    %c0_232 = arith.constant 0 : index
    %c0_233 = arith.constant 0 : index
    %266 = vector.load %arg9[%c11_231, %c0_232, %c0_233] : memref<16x64x128xf32, #tpu.memory_space<vmem>>, vector<1x64x128xf32>
    %267 = vector.shape_cast %266 : vector<1x64x128xf32> to vector<64x128xf32>
    %cst_234 = arith.constant dense<0.000000e+00> : vector<16x128xf32>
    %268 = tpu.matmul %265, %267, %cst_234 {dimension_numbers = #tpu.dot_dimension_numbers<[1], [0], [0], [1], [0, 0, 1, 1], [], []>} : vector<16x64xf32>, vector<64x128xf32>, vector<16x128xf32> -> vector<16x128xf32>
    %269 = arith.addf %261, %268 : vector<16x128xf32>
    %c12_235 = arith.constant 12 : index
    %c0_236 = arith.constant 0 : index
    %c0_237 = arith.constant 0 : index
    %270 = vector.load %arg8[%c12_235, %c0_236, %c0_237] : memref<16x16x64xbf16, #tpu.memory_space<vmem>>, vector<1x16x64xbf16>
    %271 = vector.shape_cast %270 : vector<1x16x64xbf16> to vector<16x64xbf16>
    %272 = arith.extf %271 : vector<16x64xbf16> to vector<16x64xf32>
    %cst_238 = arith.constant dense<0.000000e+00> : vector<16x64xf32>
    %273 = tpu.matmul %272, %172, %cst_238 {dimension_numbers = #tpu.dot_dimension_numbers<[1], [0], [0], [1], [0, 0, 1, 1], [], []>} : vector<16x64xf32>, vector<64x64xf32>, vector<16x64xf32> -> vector<16x64xf32>
    %c12_239 = arith.constant 12 : index
    %c0_240 = arith.constant 0 : index
    %c0_241 = arith.constant 0 : index
    %274 = vector.load %arg9[%c12_239, %c0_240, %c0_241] : memref<16x64x128xf32, #tpu.memory_space<vmem>>, vector<1x64x128xf32>
    %275 = vector.shape_cast %274 : vector<1x64x128xf32> to vector<64x128xf32>
    %cst_242 = arith.constant dense<0.000000e+00> : vector<16x128xf32>
    %276 = tpu.matmul %273, %275, %cst_242 {dimension_numbers = #tpu.dot_dimension_numbers<[1], [0], [0], [1], [0, 0, 1, 1], [], []>} : vector<16x64xf32>, vector<64x128xf32>, vector<16x128xf32> -> vector<16x128xf32>
    %277 = arith.addf %269, %276 : vector<16x128xf32>
    %c13_243 = arith.constant 13 : index
    %c0_244 = arith.constant 0 : index
    %c0_245 = arith.constant 0 : index
    %278 = vector.load %arg8[%c13_243, %c0_244, %c0_245] : memref<16x16x64xbf16, #tpu.memory_space<vmem>>, vector<1x16x64xbf16>
    %279 = vector.shape_cast %278 : vector<1x16x64xbf16> to vector<16x64xbf16>
    %280 = arith.extf %279 : vector<16x64xbf16> to vector<16x64xf32>
    %cst_246 = arith.constant dense<0.000000e+00> : vector<16x64xf32>
    %281 = tpu.matmul %280, %172, %cst_246 {dimension_numbers = #tpu.dot_dimension_numbers<[1], [0], [0], [1], [0, 0, 1, 1], [], []>} : vector<16x64xf32>, vector<64x64xf32>, vector<16x64xf32> -> vector<16x64xf32>
    %c13_247 = arith.constant 13 : index
    %c0_248 = arith.constant 0 : index
    %c0_249 = arith.constant 0 : index
    %282 = vector.load %arg9[%c13_247, %c0_248, %c0_249] : memref<16x64x128xf32, #tpu.memory_space<vmem>>, vector<1x64x128xf32>
    %283 = vector.shape_cast %282 : vector<1x64x128xf32> to vector<64x128xf32>
    %cst_250 = arith.constant dense<0.000000e+00> : vector<16x128xf32>
    %284 = tpu.matmul %281, %283, %cst_250 {dimension_numbers = #tpu.dot_dimension_numbers<[1], [0], [0], [1], [0, 0, 1, 1], [], []>} : vector<16x64xf32>, vector<64x128xf32>, vector<16x128xf32> -> vector<16x128xf32>
    %285 = arith.addf %277, %284 : vector<16x128xf32>
    %c14_251 = arith.constant 14 : index
    %c0_252 = arith.constant 0 : index
    %c0_253 = arith.constant 0 : index
    %286 = vector.load %arg8[%c14_251, %c0_252, %c0_253] : memref<16x16x64xbf16, #tpu.memory_space<vmem>>, vector<1x16x64xbf16>
    %287 = vector.shape_cast %286 : vector<1x16x64xbf16> to vector<16x64xbf16>
    %288 = arith.extf %287 : vector<16x64xbf16> to vector<16x64xf32>
    %cst_254 = arith.constant dense<0.000000e+00> : vector<16x64xf32>
    %289 = tpu.matmul %288, %172, %cst_254 {dimension_numbers = #tpu.dot_dimension_numbers<[1], [0], [0], [1], [0, 0, 1, 1], [], []>} : vector<16x64xf32>, vector<64x64xf32>, vector<16x64xf32> -> vector<16x64xf32>
    %c14_255 = arith.constant 14 : index
    %c0_256 = arith.constant 0 : index
    %c0_257 = arith.constant 0 : index
    %290 = vector.load %arg9[%c14_255, %c0_256, %c0_257] : memref<16x64x128xf32, #tpu.memory_space<vmem>>, vector<1x64x128xf32>
    %291 = vector.shape_cast %290 : vector<1x64x128xf32> to vector<64x128xf32>
    %cst_258 = arith.constant dense<0.000000e+00> : vector<16x128xf32>
    %292 = tpu.matmul %289, %291, %cst_258 {dimension_numbers = #tpu.dot_dimension_numbers<[1], [0], [0], [1], [0, 0, 1, 1], [], []>} : vector<16x64xf32>, vector<64x128xf32>, vector<16x128xf32> -> vector<16x128xf32>
    %293 = arith.addf %285, %292 : vector<16x128xf32>
    %c15_259 = arith.constant 15 : index
    %c0_260 = arith.constant 0 : index
    %c0_261 = arith.constant 0 : index
    %294 = vector.load %arg8[%c15_259, %c0_260, %c0_261] : memref<16x16x64xbf16, #tpu.memory_space<vmem>>, vector<1x16x64xbf16>
    %295 = vector.shape_cast %294 : vector<1x16x64xbf16> to vector<16x64xbf16>
    %296 = arith.extf %295 : vector<16x64xbf16> to vector<16x64xf32>
    %cst_262 = arith.constant dense<0.000000e+00> : vector<16x64xf32>
    %297 = tpu.matmul %296, %172, %cst_262 {dimension_numbers = #tpu.dot_dimension_numbers<[1], [0], [0], [1], [0, 0, 1, 1], [], []>} : vector<16x64xf32>, vector<64x64xf32>, vector<16x64xf32> -> vector<16x64xf32>
    %c15_263 = arith.constant 15 : index
    %c0_264 = arith.constant 0 : index
    %c0_265 = arith.constant 0 : index
    %298 = vector.load %arg9[%c15_263, %c0_264, %c0_265] : memref<16x64x128xf32, #tpu.memory_space<vmem>>, vector<1x64x128xf32>
    %299 = vector.shape_cast %298 : vector<1x64x128xf32> to vector<64x128xf32>
    %cst_266 = arith.constant dense<0.000000e+00> : vector<16x128xf32>
    %300 = tpu.matmul %297, %299, %cst_266 {dimension_numbers = #tpu.dot_dimension_numbers<[1], [0], [0], [1], [0, 0, 1, 1], [], []>} : vector<16x64xf32>, vector<64x128xf32>, vector<16x128xf32> -> vector<16x128xf32>
    %301 = arith.addf %293, %300 : vector<16x128xf32>
    %c0_267 = arith.constant 0 : index
    %c0_268 = arith.constant 0 : index
    %302 = vector.load %arg10[%c0_267, %c0_268] : memref<128x128xf32, #tpu.memory_space<vmem>>, vector<128x128xf32>
    %cst_269 = arith.constant dense<0.000000e+00> : vector<16x128xf32>
    %303 = tpu.matmul %301, %302, %cst_269 {dimension_numbers = #tpu.dot_dimension_numbers<[1], [0], [0], [1], [0, 0, 1, 1], [], []>} : vector<16x128xf32>, vector<128x128xf32>, vector<16x128xf32> -> vector<16x128xf32>
    %cst_270 = arith.constant dense<0.000000e+00> : vector<128xf32>
    %304 = vector.multi_reduction <add>, %303, %cst_270 [0] : vector<16x128xf32> to vector<128xf32>
    %305 = vector.shape_cast %304 : vector<128xf32> to vector<1x128xf32>
    %cst_271 = arith.constant 1.600000e+01 : f32
    %306 = vector.broadcast %cst_271 : f32 to vector<1x128xf32>
    %307 = arith.divf %305, %306 : vector<1x128xf32>
    %308 = arith.mulf %301, %301 : vector<16x128xf32>
    %c0_272 = arith.constant 0 : index
    %c0_273 = arith.constant 0 : index
    %309 = vector.load %arg10[%c0_272, %c0_273] : memref<128x128xf32, #tpu.memory_space<vmem>>, vector<128x128xf32>
    %cst_274 = arith.constant dense<0.000000e+00> : vector<16x128xf32>
    %310 = tpu.matmul %308, %309, %cst_274 {dimension_numbers = #tpu.dot_dimension_numbers<[1], [0], [0], [1], [0, 0, 1, 1], [], []>} : vector<16x128xf32>, vector<128x128xf32>, vector<16x128xf32> -> vector<16x128xf32>
    %cst_275 = arith.constant dense<0.000000e+00> : vector<128xf32>
    %311 = vector.multi_reduction <add>, %310, %cst_275 [0] : vector<16x128xf32> to vector<128xf32>
    %312 = vector.shape_cast %311 : vector<128xf32> to vector<1x128xf32>
    %cst_276 = arith.constant 1.600000e+01 : f32
    %313 = vector.broadcast %cst_276 : f32 to vector<1x128xf32>
    %314 = arith.divf %312, %313 : vector<1x128xf32>
    %315 = arith.mulf %307, %307 : vector<1x128xf32>
    %316 = arith.subf %314, %315 : vector<1x128xf32>
    %317 = vector.broadcast %307 : vector<1x128xf32> to vector<16x128xf32>
    %318 = arith.subf %301, %317 : vector<16x128xf32>
    %cst_277 = arith.constant 9.99999974E-6 : f32
    %319 = vector.broadcast %cst_277 : f32 to vector<1x128xf32>
    %320 = arith.addf %316, %319 : vector<1x128xf32>
    %321 = math.rsqrt %320 : vector<1x128xf32>
    %322 = vector.broadcast %321 : vector<1x128xf32> to vector<16x128xf32>
    %323 = arith.mulf %318, %322 : vector<16x128xf32>
    %c0_278 = arith.constant 0 : index
    %c0_279 = arith.constant 0 : index
    %324 = vector.load %arg11[%c0_278, %c0_279] : memref<1x128xf32, #tpu.memory_space<vmem>>, vector<1x128xf32>
    %325 = vector.broadcast %324 : vector<1x128xf32> to vector<16x128xf32>
    %326 = arith.mulf %323, %325 : vector<16x128xf32>
    %c0_280 = arith.constant 0 : index
    %c0_281 = arith.constant 0 : index
    %327 = vector.load %arg12[%c0_280, %c0_281] : memref<1x128xf32, #tpu.memory_space<vmem>>, vector<1x128xf32>
    %328 = vector.broadcast %327 : vector<1x128xf32> to vector<16x128xf32>
    %329 = arith.addf %326, %328 : vector<16x128xf32>
    %cst_282 = arith.constant 0.000000e+00 : f32
    %330 = vector.broadcast %cst_282 : f32 to vector<16x128xf32>
    %331 = arith.cmpf ogt, %329, %330 : vector<16x128xf32>
    %cst_283 = arith.constant 2.000000e-01 : f32
    %332 = vector.broadcast %cst_283 : f32 to vector<16x128xf32>
    %333 = arith.mulf %332, %329 : vector<16x128xf32>
    %334 = arith.select %331, %329, %333 : vector<16x128xi1>, vector<16x128xf32>
    %c0_284 = arith.constant 0 : index
    %c0_285 = arith.constant 0 : index
    %335 = vector.load %arg13[%c0_284, %c0_285] : memref<16x128xf32, #tpu.memory_space<vmem>>, vector<16x128xf32>
    %336 = arith.mulf %334, %335 : vector<16x128xf32>
    %c0_286 = arith.constant 0 : index
    %c0_287 = arith.constant 0 : index
    %337 = vector.load %arg14[%c0_286, %c0_287] : memref<128x2xf32, #tpu.memory_space<vmem>>, vector<128x2xf32>
    %cst_288 = arith.constant dense<0.000000e+00> : vector<16x2xf32>
    %338 = tpu.matmul %336, %337, %cst_288 {dimension_numbers = #tpu.dot_dimension_numbers<[1], [0], [0], [1], [0, 0, 1, 1], [], []>} : vector<16x128xf32>, vector<128x2xf32>, vector<16x2xf32> -> vector<16x2xf32>
    %cst_289 = arith.constant dense<0.000000e+00> : vector<2xf32>
    %339 = vector.multi_reduction <add>, %338, %cst_289 [0] : vector<16x2xf32> to vector<2xf32>
    %340 = vector.shape_cast %339 : vector<2xf32> to vector<1x2xf32>
    %c0_290 = arith.constant 0 : index
    %c0_291 = arith.constant 0 : index
    %341 = vector.load %arg15[%c0_290, %c0_291] : memref<1x2xf32, #tpu.memory_space<vmem>>, vector<1x2xf32>
    %342 = arith.addf %340, %341 : vector<1x2xf32>
    %c0_292 = arith.constant 0 : index
    %c0_293 = arith.constant 0 : index
    %343 = vector.load %arg16[%c0_292, %c0_293] : memref<1x2xf32, #tpu.memory_space<vmem>>, vector<1x2xf32>
    tpu.vector_store %arg16[%c0_292, %c0_293], %342 {strides = array<i32>} : memref<1x2xf32, #tpu.memory_space<vmem>>, vector<1x2xf32>,
    return
  }
}

</mosaic_0001>

<llo_original>
// kernel: discriminator_forward.1
$region0: #{discriminator_forward.1}
  #allocation0 [shape = 'u32[]', space=smem, size = 0x4, offset = 0x4, fixed_abs, tag = 'smem constant byte address 0x4 - core index']
  #allocation1 [shape = 'u32[72,128]{1,0:T(1,128)}', space=vmem, size = 0x9000, scoped, tag = 'internal scratch']
  %s0 = inlined_call_operand.vmem [shape: f32[256,32], index: 0, kind: input, shape index: {}]
  %s1 = inlined_call_operand.vmem [shape: f32[32,32], index: 1, kind: input, shape index: {}]
  %s2 = inlined_call_operand.vmem [shape: f32[1,32], index: 2, kind: input, shape index: {}]
  %s3 = inlined_call_operand.vmem [shape: bf16[16,64,256], index: 3, kind: input, shape index: {}]
  %s4 = inlined_call_operand.vmem [shape: f32[16,32,64], index: 4, kind: input, shape index: {}]
  %s5 = inlined_call_operand.vmem [shape: f32[64,64], index: 5, kind: input, shape index: {}]
  %s6 = inlined_call_operand.vmem [shape: f32[1,64], index: 6, kind: input, shape index: {}]
  %s7 = inlined_call_operand.vmem [shape: f32[1,64], index: 7, kind: input, shape index: {}]
  %s8 = inlined_call_operand.vmem [shape: bf16[16,16,64], index: 8, kind: input, shape index: {}]
  %s9 = inlined_call_operand.vmem [shape: f32[16,64,128], index: 9, kind: input, shape index: {}]
  %s10 = inlined_call_operand.vmem [shape: f32[128,128], index: 10, kind: input, shape index: {}]
  %s11 = inlined_call_operand.vmem [shape: f32[1,128], index: 11, kind: input, shape index: {}]
  %s12 = inlined_call_operand.vmem [shape: f32[1,128], index: 12, kind: input, shape index: {}]
  %s13 = inlined_call_operand.vmem [shape: f32[16,128], index: 13, kind: input, shape index: {}]
  %s14 = inlined_call_operand.vmem [shape: f32[128,2], index: 14, kind: input, shape index: {}]
  %s15 = inlined_call_operand.vmem [shape: f32[1,2], index: 15, kind: input, shape index: {}]
  %s16 = inlined_call_operand.hbm [shape: f32[1,2], index: 16, kind: output, shape index: {}]
  %s17 = sld [smem:[#allocation0]]
  $region74: #{discriminator_forward.1} parent=0
    _
  %s19 = ssub.s32 1, %s17
  %s20 = scalar_select 0, %s19, %s17
  $region1: #{discriminator_forward.1} parent=0
    #allocation2 [shape = 'u8[512]{0}', space=vmem, size = 0x400, scoped, tag = 'output window, operand 0, single buffered']
    #allocation3 [shape = 's32[1]{0}', space=sflag, size = 0x4, scoped, tag = 'scoped memory for discriminator_forward.1']
    %21 = vsyncpa [#allocation3], 0
    // Predicated region
    $region2: #{discriminator_forward.1} parent=1 // pred_check
      _
    $region3: #{discriminator_forward.1} parent=1 // pred_check_branch
      %23 = sbr.rel (0) target = $region5
    $region4: #{discriminator_forward.1} parent=1 // pred_region
      _
    $region5: #{discriminator_forward.1} parent=1 // pred_fallthru
      _
    // Predicated region
    $region6: #{discriminator_forward.1} parent=1 // pred_check
      _
    $region7: #{discriminator_forward.1} parent=1 // pred_check_branch
      %25 = sbr.rel (0) target = $region9
    $region8: #{discriminator_forward.1} parent=1 // pred_region
      _
    $region9: #{discriminator_forward.1} parent=1 // pred_fallthru
      _
    // Predicated region
    $region10: #{discriminator_forward.1} parent=1 // pred_check
      _
    $region11: #{discriminator_forward.1} parent=1 // pred_check_branch
      %27 = sbr.rel (0) target = $region13
    $region12: #{discriminator_forward.1} parent=1 // pred_region
      _
    $region13: #{discriminator_forward.1} parent=1 // pred_fallthru
      _
    // Predicated region
    $region14: #{discriminator_forward.1} parent=1 // pred_check
      _
    $region15: #{discriminator_forward.1} parent=1 // pred_check_branch
      %29 = sbr.rel (0) target = $region17
    $region16: #{discriminator_forward.1} parent=1 // pred_region
      _
    $region17: #{discriminator_forward.1} parent=1 // pred_fallthru
      _
    // Predicated region
    $region18: #{discriminator_forward.1} parent=1 // pred_check
      _
    $region19: #{discriminator_forward.1} parent=1 // pred_check_branch
      %31 = sbr.rel (0) target = $region21
    $region20: #{discriminator_forward.1} parent=1 // pred_region
      _
    $region21: #{discriminator_forward.1} parent=1 // pred_fallthru
      _
    // Predicated region
    $region22: #{discriminator_forward.1} parent=1 // pred_check
      _
    $region23: #{discriminator_forward.1} parent=1 // pred_check_branch
      %33 = sbr.rel (0) target = $region25
    $region24: #{discriminator_forward.1} parent=1 // pred_region
      _
    $region25: #{discriminator_forward.1} parent=1 // pred_fallthru
      _
    // Predicated region
    $region26: #{discriminator_forward.1} parent=1 // pred_check
      _
    $region27: #{discriminator_forward.1} parent=1 // pred_check_branch
      %35 = sbr.rel (0) target = $region29
    $region28: #{discriminator_forward.1} parent=1 // pred_region
      _
    $region29: #{discriminator_forward.1} parent=1 // pred_fallthru
      _
    // Predicated region
    $region30: #{discriminator_forward.1} parent=1 // pred_check
      _
    $region31: #{discriminator_forward.1} parent=1 // pred_check_branch
      %37 = sbr.rel (0) target = $region33
    $region32: #{discriminator_forward.1} parent=1 // pred_region
      _
    $region33: #{discriminator_forward.1} parent=1 // pred_fallthru
      _
    // Predicated region
    $region34: #{discriminator_forward.1} parent=1 // pred_check
      _
    $region35: #{discriminator_forward.1} parent=1 // pred_check_branch
      %39 = sbr.rel (0) target = $region37
    $region36: #{discriminator_forward.1} parent=1 // pred_region
      _
    $region37: #{discriminator_forward.1} parent=1 // pred_fallthru
      _
    // Predicated region
    $region38: #{discriminator_forward.1} parent=1 // pred_check
      _
    $region39: #{discriminator_forward.1} parent=1 // pred_check_branch
      %41 = sbr.rel (0) target = $region41
    $region40: #{discriminator_forward.1} parent=1 // pred_region
      _
    $region41: #{discriminator_forward.1} parent=1 // pred_fallthru
      _
    // Predicated region
    $region42: #{discriminator_forward.1} parent=1 // pred_check
      _
    $region43: #{discriminator_forward.1} parent=1 // pred_check_branch
      %43 = sbr.rel (0) target = $region45
    $region44: #{discriminator_forward.1} parent=1 // pred_region
      _
    $region45: #{discriminator_forward.1} parent=1 // pred_fallthru
      _
    // Predicated region
    $region46: #{discriminator_forward.1} parent=1 // pred_check
      _
    $region47: #{discriminator_forward.1} parent=1 // pred_check_branch
      %45 = sbr.rel (0) target = $region49
    $region48: #{discriminator_forward.1} parent=1 // pred_region
      _
    $region49: #{discriminator_forward.1} parent=1 // pred_fallthru
      _
    // Predicated region
    $region50: #{discriminator_forward.1} parent=1 // pred_check
      _
    $region51: #{discriminator_forward.1} parent=1 // pred_check_branch
      %47 = sbr.rel (0) target = $region53
    $region52: #{discriminator_forward.1} parent=1 // pred_region
      _
    $region53: #{discriminator_forward.1} parent=1 // pred_fallthru
      _
    // Predicated region
    $region54: #{discriminator_forward.1} parent=1 // pred_check
      _
    $region55: #{discriminator_forward.1} parent=1 // pred_check_branch
      %49 = sbr.rel (0) target = $region57
    $region56: #{discriminator_forward.1} parent=1 // pred_region
      _
    $region57: #{discriminator_forward.1} parent=1 // pred_fallthru
      _
    // Predicated region
    $region58: #{discriminator_forward.1} parent=1 // pred_check
      _
    $region59: #{discriminator_forward.1} parent=1 // pred_check_branch
      %51 = sbr.rel (0) target = $region61
    $region60: #{discriminator_forward.1} parent=1 // pred_region
      _
    $region61: #{discriminator_forward.1} parent=1 // pred_fallthru
      _
    // Predicated region
    $region62: #{discriminator_forward.1} parent=1 // pred_check
      _
    $region63: #{discriminator_forward.1} parent=1 // pred_check_branch
      %53 = sbr.rel (0) target = $region65
    $region64: #{discriminator_forward.1} parent=1 // pred_region
      _
    $region65: #{discriminator_forward.1} parent=1 // pred_fallthru
      _
    %v54 = vld [vmem:[%s0] sm:$0xff]
    %v55 = vld [vmem:[%s0 + $0x8] sm:$0xff]
    %v56 = vld [vmem:[%s0 + $0x10] sm:$0xff]
    %v57 = vld [vmem:[%s0 + $0x18] sm:$0xff]
    %v58 = vld [vmem:[%s0 + $0x20] sm:$0xff]
    %v59 = vld [vmem:[%s0 + $0x28] sm:$0xff]
    %v60 = vld [vmem:[%s0 + $0x30] sm:$0xff]
    %v61 = vld [vmem:[%s0 + $0x38] sm:$0xff]
    %v62 = vld [vmem:[%s0 + $0x40] sm:$0xff]
    %v63 = vld [vmem:[%s0 + $0x48] sm:$0xff]
    %v64 = vld [vmem:[%s0 + $0x50] sm:$0xff]
    %v65 = vld [vmem:[%s0 + $0x58] sm:$0xff]
    %v66 = vld [vmem:[%s0 + $0x60] sm:$0xff]
    %v67 = vld [vmem:[%s0 + $0x68] sm:$0xff]
    %v68 = vld [vmem:[%s0 + $0x70] sm:$0xff]
    %v69 = vld [vmem:[%s0 + $0x78] sm:$0xff]
    %v70 = vld [vmem:[%s0 + $0x80] sm:$0xff]
    %v71 = vld [vmem:[%s0 + $0x88] sm:$0xff]
    %v72 = vld [vmem:[%s0 + $0x90] sm:$0xff]
    %v73 = vld [vmem:[%s0 + $0x98] sm:$0xff]
    %v74 = vld [vmem:[%s0 + $0xa0] sm:$0xff]
    %v75 = vld [vmem:[%s0 + $0xa8] sm:$0xff]
    %v76 = vld [vmem:[%s0 + $0xb0] sm:$0xff]
    %v77 = vld [vmem:[%s0 + $0xb8] sm:$0xff]
    %v78 = vld [vmem:[%s0 + $0xc0] sm:$0xff]
    %v79 = vld [vmem:[%s0 + $0xc8] sm:$0xff]
    %v80 = vld [vmem:[%s0 + $0xd0] sm:$0xff]
    %v81 = vld [vmem:[%s0 + $0xd8] sm:$0xff]
    %v82 = vld [vmem:[%s0 + $0xe0] sm:$0xff]
    %v83 = vld [vmem:[%s0 + $0xe8] sm:$0xff]
    %v84 = vld [vmem:[%s0 + $0xf0] sm:$0xff]
    %v85 = vld [vmem:[%s0 + $0xf8] sm:$0xff]
    %v86 = vld [vmem:[%s1] sm:$0xff]
    %v87 = vld [vmem:[%s1 + $0x8] sm:$0xff]
    %v88 = vld [vmem:[%s1 + $0x10] sm:$0xff]
    %v89 = vld [vmem:[%s1 + $0x18] sm:$0xff]
    %v90 = vld [vmem:[%s2] sm:$0x1]
    %v92 = vperm.slane %v90, 0
    %vm94 = vcmask 261120
    %v96 = vsel %vm94, %v54, 0
    %v99 = vsel %vm94, %v55, 0
    %v102 = vsel %vm94, %v56, 0
    %v105 = vsel %vm94, %v57, 0
    %v108 = vsel %vm94, %v58, 0
    %v111 = vsel %vm94, %v59, 0
    %v114 = vsel %vm94, %v60, 0
    %v117 = vsel %vm94, %v61, 0
    %v120 = vsel %vm94, %v62, 0
    %v123 = vsel %vm94, %v63, 0
    %v126 = vsel %vm94, %v64, 0
    %v129 = vsel %vm94, %v65, 0
    %v132 = vsel %vm94, %v66, 0
    %v135 = vsel %vm94, %v67, 0
    %v138 = vsel %vm94, %v68, 0
    %v141 = vsel %vm94, %v69, 0
    %v144 = vsel %vm94, %v70, 0
    %v147 = vsel %vm94, %v71, 0
    %v150 = vsel %vm94, %v72, 0
    %v153 = vsel %vm94, %v73, 0
    %v156 = vsel %vm94, %v74, 0
    %v159 = vsel %vm94, %v75, 0
    %v162 = vsel %vm94, %v76, 0
    %v165 = vsel %vm94, %v77, 0
    %v168 = vsel %vm94, %v78, 0
    %v171 = vsel %vm94, %v79, 0
    %v174 = vsel %vm94, %v80, 0
    %v177 = vsel %vm94, %v81, 0
    %v180 = vsel %vm94, %v82, 0
    %v183 = vsel %vm94, %v83, 0
    %v186 = vsel %vm94, %v84, 0
    %v189 = vsel %vm94, %v85, 0
    %191 = vmatpush.msra.mxu0 0.0
    %192 = vmatpush.msra.mxu0 0.0
    %193 = vmatpush.msra.mxu0 0.0
    %194 = vmatpush.msra.mxu0 0.0
    %195 = vmatpush.msra.mxu0 0.0
    %196 = vmatpush.msra.mxu0 0.0
    %197 = vmatpush.msra.mxu0 0.0
    %198 = vmatpush.msra.mxu0 0.0
    %199 = vmatpush.msra.mxu0 0.0
    %200 = vmatpush.msra.mxu0 0.0
    %201 = vmatpush.msra.mxu0 0.0
    %202 = vmatpush.msra.mxu0 0.0
    %203 = vmatpush.msra.mxu0 %v89
    %204 = vmatpush.msra.mxu0 %v88
    %205 = vmatpush.msra.mxu0 %v87
    %206 = vmatpush.msra.mxu0 %v86
    %207 = vmatmul.f32.gmra.mxu0 %v96
    %v208 = vpop.f32.mrf.mxu0
    %v209 = vadd.f32 %v92, %v208
    %210 = vmatmul.f32.gmra.mxu0 %v99
    %v211 = vpop.f32.mrf.mxu0
    %v212 = vadd.f32 %v92, %v211
    %213 = vmatmul.f32.gmra.mxu0 %v102
    %v214 = vpop.f32.mrf.mxu0
    %v215 = vadd.f32 %v92, %v214
    %216 = vmatmul.f32.gmra.mxu0 %v105
    %v217 = vpop.f32.mrf.mxu0
    %v218 = vadd.f32 %v92, %v217
    %219 = vmatmul.f32.gmra.mxu0 %v108
    %v220 = vpop.f32.mrf.mxu0
    %v221 = vadd.f32 %v92, %v220
    %222 = vmatmul.f32.gmra.mxu0 %v111
    %v223 = vpop.f32.mrf.mxu0
    %v224 = vadd.f32 %v92, %v223
    %225 = vmatmul.f32.gmra.mxu0 %v114
    %v226 = vpop.f32.mrf.mxu0
    %v227 = vadd.f32 %v92, %v226
    %228 = vmatmul.f32.gmra.mxu0 %v117
    %v229 = vpop.f32.mrf.mxu0
    %v230 = vadd.f32 %v92, %v229
    %231 = vmatmul.f32.gmra.mxu0 %v120
    %v232 = vpop.f32.mrf.mxu0
    %v233 = vadd.f32 %v92, %v232
    %234 = vmatmul.f32.gmra.mxu0 %v123
    %v235 = vpop.f32.mrf.mxu0
    %v236 = vadd.f32 %v92, %v235
    %237 = vmatmul.f32.gmra.mxu0 %v126
    %v238 = vpop.f32.mrf.mxu0
    %v239 = vadd.f32 %v92, %v238
    %240 = vmatmul.f32.gmra.mxu0 %v129
    %v241 = vpop.f32.mrf.mxu0
    %v242 = vadd.f32 %v92, %v241
    %243 = vmatmul.f32.gmra.mxu0 %v132
    %v244 = vpop.f32.mrf.mxu0
    %v245 = vadd.f32 %v92, %v244
    %246 = vmatmul.f32.gmra.mxu0 %v135
    %v247 = vpop.f32.mrf.mxu0
    %v248 = vadd.f32 %v92, %v247
    %249 = vmatmul.f32.gmra.mxu0 %v138
    %v250 = vpop.f32.mrf.mxu0
    %v251 = vadd.f32 %v92, %v250
    %252 = vmatmul.f32.gmra.mxu0 %v141
    %v253 = vpop.f32.mrf.mxu0
    %v254 = vadd.f32 %v92, %v253
    %255 = vmatmul.f32.gmra.mxu0 %v144
    %v256 = vpop.f32.mrf.mxu0
    %v257 = vadd.f32 %v92, %v256
    %258 = vmatmul.f32.gmra.mxu0 %v147
    %v259 = vpop.f32.mrf.mxu0
    %v260 = vadd.f32 %v92, %v259
    %261 = vmatmul.f32.gmra.mxu0 %v150
    %v262 = vpop.f32.mrf.mxu0
    %v263 = vadd.f32 %v92, %v262
    %264 = vmatmul.f32.gmra.mxu0 %v153
    %v265 = vpop.f32.mrf.mxu0
    %v266 = vadd.f32 %v92, %v265
    %267 = vmatmul.f32.gmra.mxu0 %v156
    %v268 = vpop.f32.mrf.mxu0
    %v269 = vadd.f32 %v92, %v268
    %270 = vmatmul.f32.gmra.mxu0 %v159
    %v271 = vpop.f32.mrf.mxu0
    %v272 = vadd.f32 %v92, %v271
    %273 = vmatmul.f32.gmra.mxu0 %v162
    %v274 = vpop.f32.mrf.mxu0
    %v275 = vadd.f32 %v92, %v274
    %276 = vmatmul.f32.gmra.mxu0 %v165
    %v277 = vpop.f32.mrf.mxu0
    %v278 = vadd.f32 %v92, %v277
    %279 = vmatmul.f32.gmra.mxu0 %v168
    %v280 = vpop.f32.mrf.mxu0
    %v281 = vadd.f32 %v92, %v280
    %282 = vmatmul.f32.gmra.mxu0 %v171
    %v283 = vpop.f32.mrf.mxu0
    %v284 = vadd.f32 %v92, %v283
    %285 = vmatmul.f32.gmra.mxu0 %v174
    %v286 = vpop.f32.mrf.mxu0
    %v287 = vadd.f32 %v92, %v286
    %288 = vmatmul.f32.gmra.mxu0 %v177
    %v289 = vpop.f32.mrf.mxu0
    %v290 = vadd.f32 %v92, %v289
    %291 = vmatmul.f32.gmra.mxu0 %v180
    %v292 = vpop.f32.mrf.mxu0
    %v293 = vadd.f32 %v92, %v292
    %294 = vmatmul.f32.gmra.mxu0 %v183
    %v295 = vpop.f32.mrf.mxu0
    %v296 = vadd.f32 %v92, %v295
    %297 = vmatmul.f32.gmra.mxu0 %v186
    %v298 = vpop.f32.mrf.mxu0
    %v299 = vadd.f32 %v92, %v298
    %300 = vmatmul.f32.gmra.mxu0 %v189
    %v301 = vpop.f32.mrf.mxu0
    %v302 = vadd.f32 %v92, %v301
    %303 = vdwg.mxu0
    %vm304 = vcmp.gt.f32.partialorder %v209, 0.0
    %vm305 = vcmp.gt.f32.partialorder %v212, 0.0
    %vm306 = vcmp.gt.f32.partialorder %v215, 0.0
    %vm307 = vcmp.gt.f32.partialorder %v218, 0.0
    %vm308 = vcmp.gt.f32.partialorder %v221, 0.0
    %vm309 = vcmp.gt.f32.partialorder %v224, 0.0
    %vm310 = vcmp.gt.f32.partialorder %v227, 0.0
    %vm311 = vcmp.gt.f32.partialorder %v230, 0.0
    %vm312 = vcmp.gt.f32.partialorder %v233, 0.0
    %vm313 = vcmp.gt.f32.partialorder %v236, 0.0
    %vm314 = vcmp.gt.f32.partialorder %v239, 0.0
    %vm315 = vcmp.gt.f32.partialorder %v242, 0.0
    %vm316 = vcmp.gt.f32.partialorder %v245, 0.0
    %vm317 = vcmp.gt.f32.partialorder %v248, 0.0
    %vm318 = vcmp.gt.f32.partialorder %v251, 0.0
    %vm319 = vcmp.gt.f32.partialorder %v254, 0.0
    %vm320 = vcmp.gt.f32.partialorder %v257, 0.0
    %vm321 = vcmp.gt.f32.partialorder %v260, 0.0
    %vm322 = vcmp.gt.f32.partialorder %v263, 0.0
    %vm323 = vcmp.gt.f32.partialorder %v266, 0.0
    %vm324 = vcmp.gt.f32.partialorder %v269, 0.0
    %vm325 = vcmp.gt.f32.partialorder %v272, 0.0
    %vm326 = vcmp.gt.f32.partialorder %v275, 0.0
    %vm327 = vcmp.gt.f32.partialorder %v278, 0.0
    %vm328 = vcmp.gt.f32.partialorder %v281, 0.0
    %vm329 = vcmp.gt.f32.partialorder %v284, 0.0
    %vm330 = vcmp.gt.f32.partialorder %v287, 0.0
    %vm331 = vcmp.gt.f32.partialorder %v290, 0.0
    %vm332 = vcmp.gt.f32.partialorder %v293, 0.0
    %vm333 = vcmp.gt.f32.partialorder %v296, 0.0
    %vm334 = vcmp.gt.f32.partialorder %v299, 0.0
    %vm335 = vcmp.gt.f32.partialorder %v302, 0.0
    %v336 = vmul.f32 %v209, 0.2
    %v337 = vmul.f32 %v212, 0.2
    %v338 = vmul.f32 %v215, 0.2
    %v339 = vmul.f32 %v218, 0.2
    %v340 = vmul.f32 %v221, 0.2
    %v341 = vmul.f32 %v224, 0.2
    %v342 = vmul.f32 %v227, 0.2
    %v343 = vmul.f32 %v230, 0.2
    %v344 = vmul.f32 %v233, 0.2
    %v345 = vmul.f32 %v236, 0.2
    %v346 = vmul.f32 %v239, 0.2
    %v347 = vmul.f32 %v242, 0.2
    %v348 = vmul.f32 %v245, 0.2
    %v349 = vmul.f32 %v248, 0.2
    %v350 = vmul.f32 %v251, 0.2
    %v351 = vmul.f32 %v254, 0.2
    %v352 = vmul.f32 %v257, 0.2
    %v353 = vmul.f32 %v260, 0.2
    %v354 = vmul.f32 %v263, 0.2
    %v355 = vmul.f32 %v266, 0.2
    %v356 = vmul.f32 %v269, 0.2
    %v357 = vmul.f32 %v272, 0.2
    %v358 = vmul.f32 %v275, 0.2
    %v359 = vmul.f32 %v278, 0.2
    %v360 = vmul.f32 %v281, 0.2
    %v361 = vmul.f32 %v284, 0.2
    %v362 = vmul.f32 %v287, 0.2
    %v363 = vmul.f32 %v290, 0.2
    %v364 = vmul.f32 %v293, 0.2
    %v365 = vmul.f32 %v296, 0.2
    %v366 = vmul.f32 %v299, 0.2
    %v367 = vmul.f32 %v302, 0.2
    %v368 = vsel %vm304, %v209, %v336
    %v369 = vsel %vm305, %v212, %v337
    %v370 = vsel %vm306, %v215, %v338
    %v371 = vsel %vm307, %v218, %v339
    %v372 = vsel %vm308, %v221, %v340
    %v373 = vsel %vm309, %v224, %v341
    %v374 = vsel %vm310, %v227, %v342
    %v375 = vsel %vm311, %v230, %v343
    %v376 = vsel %vm312, %v233, %v344
    %v377 = vsel %vm313, %v236, %v345
    %v378 = vsel %vm314, %v239, %v346
    %v379 = vsel %vm315, %v242, %v347
    %v380 = vsel %vm316, %v245, %v348
    %v381 = vsel %vm317, %v248, %v349
    %v382 = vsel %vm318, %v251, %v350
    %v383 = vsel %vm319, %v254, %v351
    %v384 = vsel %vm320, %v257, %v352
    %v385 = vsel %vm321, %v260, %v353
    %v386 = vsel %vm322, %v263, %v354
    %v387 = vsel %vm323, %v266, %v355
    %v388 = vsel %vm324, %v269, %v356
    %v389 = vsel %vm325, %v272, %v357
    %v390 = vsel %vm326, %v275, %v358
    %v391 = vsel %vm327, %v278, %v359
    %v392 = vsel %vm328, %v281, %v360
    %v393 = vsel %vm329, %v284, %v361
    %v394 = vsel %vm330, %v287, %v362
    %v395 = vsel %vm331, %v290, %v363
    %v396 = vsel %vm332, %v293, %v364
    %v397 = vsel %vm333, %v296, %v365
    %v398 = vsel %vm334, %v299, %v366
    %v399 = vsel %vm335, %v302, %v367
    %v400 = vld [vmem:[%s3] sm:$0xff]
    %v401 = vld [vmem:[%s3 + $0x8] sm:$0xff]
    %v402 = vld [vmem:[%s3 + $0x10] sm:$0xff]
    %v403 = vld [vmem:[%s3 + $0x18] sm:$0xff]
    %v404 = vld [vmem:[%s3 + $0x20] sm:$0xff]
    %v405 = vld [vmem:[%s3 + $0x28] sm:$0xff]
    %v406 = vld [vmem:[%s3 + $0x30] sm:$0xff]
    %v407 = vld [vmem:[%s3 + $0x38] sm:$0xff]
    %v408 = vunpack.c.l.bf16 %v400
    %v409 = vunpack.c.h.bf16 %v400
    %v410 = vunpack.c.l.bf16 %v401
    %v411 = vunpack.c.h.bf16 %v401
    %v412 = vunpack.c.l.bf16 %v402
    %v413 = vunpack.c.h.bf16 %v402
    %v414 = vunpack.c.l.bf16 %v403
    %v415 = vunpack.c.h.bf16 %v403
    %v416 = vunpack.c.l.bf16 %v404
    %v417 = vunpack.c.h.bf16 %v404
    %v418 = vunpack.c.l.bf16 %v405
    %v419 = vunpack.c.h.bf16 %v405
    %v420 = vunpack.c.l.bf16 %v406
    %v421 = vunpack.c.h.bf16 %v406
    %v422 = vunpack.c.l.bf16 %v407
    %v423 = vunpack.c.h.bf16 %v407
    %424 = vmatpush.msra.mxu0 %v383
    %425 = vmatpush.msra.mxu0 %v382
    %426 = vmatpush.msra.mxu0 %v381
    %427 = vmatpush.msra.mxu0 %v380
    %428 = vmatpush.msra.mxu0 %v379
    %429 = vmatpush.msra.mxu0 %v378
    %430 = vmatpush.msra.mxu0 %v377
    %431 = vmatpush.msra.mxu0 %v376
    %432 = vmatpush.msra.mxu0 %v375
    %433 = vmatpush.msra.mxu0 %v374
    %434 = vmatpush.msra.mxu0 %v373
    %435 = vmatpush.msra.mxu0 %v372
    %436 = vmatpush.msra.mxu0 %v371
    %437 = vmatpush.msra.mxu0 %v370
    %438 = vmatpush.msra.mxu0 %v369
    %439 = vmatpush.msra.mxu0 %v368
    %440 = vmatmul.f32.gmra.mxu0 %v408
    %v441 = vpop.f32.mrf.mxu0
    %v442 = vadd.f32 0.0, %v441
    %443 = vmatmul.f32.gmra.mxu0 %v410
    %v444 = vpop.f32.mrf.mxu0
    %v445 = vadd.f32 0.0, %v444
    %446 = vmatmul.f32.gmra.mxu0 %v412
    %v447 = vpop.f32.mrf.mxu0
    %v448 = vadd.f32 0.0, %v447
    %449 = vmatmul.f32.gmra.mxu0 %v414
    %v450 = vpop.f32.mrf.mxu0
    %v451 = vadd.f32 0.0, %v450
    %452 = vmatmul.f32.gmra.mxu0 %v416
    %v453 = vpop.f32.mrf.mxu0
    %v454 = vadd.f32 0.0, %v453
    %455 = vmatmul.f32.gmra.mxu0 %v418
    %v456 = vpop.f32.mrf.mxu0
    %v457 = vadd.f32 0.0, %v456
    %458 = vmatmul.f32.gmra.mxu0 %v420
    %v459 = vpop.f32.mrf.mxu0
    %v460 = vadd.f32 0.0, %v459
    %461 = vmatmul.f32.gmra.mxu0 %v422
    %v462 = vpop.f32.mrf.mxu0
    %v463 = vadd.f32 0.0, %v462
    %464 = vdwg.mxu0
    %465 = vmatpush.msra.mxu0 %v399
    %466 = vmatpush.msra.mxu0 %v398
    %467 = vmatpush.msra.mxu0 %v397
    %468 = vmatpush.msra.mxu0 %v396
    %469 = vmatpush.msra.mxu0 %v395
    %470 = vmatpush.msra.mxu0 %v394
    %471 = vmatpush.msra.mxu0 %v393
    %472 = vmatpush.msra.mxu0 %v392
    %473 = vmatpush.msra.mxu0 %v391
    %474 = vmatpush.msra.mxu0 %v390
    %475 = vmatpush.msra.mxu0 %v389
    %476 = vmatpush.msra.mxu0 %v388
    %477 = vmatpush.msra.mxu0 %v387
    %478 = vmatpush.msra.mxu0 %v386
    %479 = vmatpush.msra.mxu0 %v385
    %480 = vmatpush.msra.mxu0 %v384
    %481 = vmatmul.f32.gmra.mxu0 %v409
    %v482 = vpop.f32.mrf.mxu0
    %v483 = vadd.f32 %v442, %v482
    %484 = vmatmul.f32.gmra.mxu0 %v411
    %v485 = vpop.f32.mrf.mxu0
    %v486 = vadd.f32 %v445, %v485
    %487 = vmatmul.f32.gmra.mxu0 %v413
    %v488 = vpop.f32.mrf.mxu0
    %v489 = vadd.f32 %v448, %v488
    %490 = vmatmul.f32.gmra.mxu0 %v415
    %v491 = vpop.f32.mrf.mxu0
    %v492 = vadd.f32 %v451, %v491
    %493 = vmatmul.f32.gmra.mxu0 %v417
    %v494 = vpop.f32.mrf.mxu0
    %v495 = vadd.f32 %v454, %v494
    %496 = vmatmul.f32.gmra.mxu0 %v419
    %v497 = vpop.f32.mrf.mxu0
    %v498 = vadd.f32 %v457, %v497
    %499 = vmatmul.f32.gmra.mxu0 %v421
    %v500 = vpop.f32.mrf.mxu0
    %v501 = vadd.f32 %v460, %v500
    %502 = vmatmul.f32.gmra.mxu0 %v423
    %v503 = vpop.f32.mrf.mxu0
    %v504 = vadd.f32 %v463, %v503
    %505 = vdwg.mxu0
    %v506 = vld [vmem:[%s4] sm:$0xff]
    %v507 = vld [vmem:[%s4 + $0x8] sm:$0xff]
    %v508 = vld [vmem:[%s4 + $0x10] sm:$0xff]
    %v509 = vld [vmem:[%s4 + $0x18] sm:$0xff]
    %s510 = scalar_lea.vmem %s3, 64
    %v511 = vld [vmem:[%s510] sm:$0xff]
    %v512 = vld [vmem:[%s510 + $0x8] sm:$0xff]
    %v513 = vld [vmem:[%s510 + $0x10] sm:$0xff]
    %v514 = vld [vmem:[%s510 + $0x18] sm:$0xff]
    %v515 = vld [vmem:[%s510 + $0x20] sm:$0xff]
    %v516 = vld [vmem:[%s510 + $0x28] sm:$0xff]
    %v517 = vld [vmem:[%s510 + $0x30] sm:$0xff]
    %v518 = vld [vmem:[%s510 + $0x38] sm:$0xff]
    %v519 = vunpack.c.l.bf16 %v511
    %v520 = vunpack.c.h.bf16 %v511
    %v521 = vunpack.c.l.bf16 %v512
    %v522 = vunpack.c.h.bf16 %v512
    %v523 = vunpack.c.l.bf16 %v513
    %v524 = vunpack.c.h.bf16 %v513
    %v525 = vunpack.c.l.bf16 %v514
    %v526 = vunpack.c.h.bf16 %v514
    %v527 = vunpack.c.l.bf16 %v515
    %v528 = vunpack.c.h.bf16 %v515
    %v529 = vunpack.c.l.bf16 %v516
    %v530 = vunpack.c.h.bf16 %v516
    %v531 = vunpack.c.l.bf16 %v517
    %v532 = vunpack.c.h.bf16 %v517
    %v533 = vunpack.c.l.bf16 %v518
    %v534 = vunpack.c.h.bf16 %v518
    %535 = vmatpush.msra.mxu0 %v383
    %536 = vmatpush.msra.mxu0 %v382
    %537 = vmatpush.msra.mxu0 %v381
    %538 = vmatpush.msra.mxu0 %v380
    %539 = vmatpush.msra.mxu0 %v379
    %540 = vmatpush.msra.mxu0 %v378
    %541 = vmatpush.msra.mxu0 %v377
    %542 = vmatpush.msra.mxu0 %v376
    %543 = vmatpush.msra.mxu0 %v375
    %544 = vmatpush.msra.mxu0 %v374
    %545 = vmatpush.msra.mxu0 %v373
    %546 = vmatpush.msra.mxu0 %v372
    %547 = vmatpush.msra.mxu0 %v371
    %548 = vmatpush.msra.mxu0 %v370
    %549 = vmatpush.msra.mxu0 %v369
    %550 = vmatpush.msra.mxu0 %v368
    %551 = vmatmul.f32.gmra.mxu0 %v519
    %v552 = vpop.f32.mrf.mxu0
    %v553 = vadd.f32 0.0, %v552
    %554 = vmatmul.f32.gmra.mxu0 %v521
    %v555 = vpop.f32.mrf.mxu0
    %v556 = vadd.f32 0.0, %v555
    %557 = vmatmul.f32.gmra.mxu0 %v523
    %v558 = vpop.f32.mrf.mxu0
    %v559 = vadd.f32 0.0, %v558
    %560 = vmatmul.f32.gmra.mxu0 %v525
    %v561 = vpop.f32.mrf.mxu0
    %v562 = vadd.f32 0.0, %v561
    %563 = vmatmul.f32.gmra.mxu0 %v527
    %v564 = vpop.f32.mrf.mxu0
    %v565 = vadd.f32 0.0, %v564
    %566 = vmatmul.f32.gmra.mxu0 %v529
    %v567 = vpop.f32.mrf.mxu0
    %v568 = vadd.f32 0.0, %v567
    %569 = vmatmul.f32.gmra.mxu0 %v531
    %v570 = vpop.f32.mrf.mxu0
    %v571 = vadd.f32 0.0, %v570
    %572 = vmatmul.f32.gmra.mxu0 %v533
    %v573 = vpop.f32.mrf.mxu0
    %v574 = vadd.f32 0.0, %v573
    %575 = vdwg.mxu0
    %576 = vmatpush.msra.mxu0 %v399
    %577 = vmatpush.msra.mxu0 %v398
    %578 = vmatpush.msra.mxu0 %v397
    %579 = vmatpush.msra.mxu0 %v396
    %580 = vmatpush.msra.mxu0 %v395
    %581 = vmatpush.msra.mxu0 %v394
    %582 = vmatpush.msra.mxu0 %v393
    %583 = vmatpush.msra.mxu0 %v392
    %584 = vmatpush.msra.mxu0 %v391
    %585 = vmatpush.msra.mxu0 %v390
    %586 = vmatpush.msra.mxu0 %v389
    %587 = vmatpush.msra.mxu0 %v388
    %588 = vmatpush.msra.mxu0 %v387
    %589 = vmatpush.msra.mxu0 %v386
    %590 = vmatpush.msra.mxu0 %v385
    %591 = vmatpush.msra.mxu0 %v384
    %592 = vmatmul.f32.gmra.mxu0 %v520
    %v593 = vpop.f32.mrf.mxu0
    %v594 = vadd.f32 %v553, %v593
    %595 = vmatmul.f32.gmra.mxu0 %v522
    %v596 = vpop.f32.mrf.mxu0
    %v597 = vadd.f32 %v556, %v596
    %598 = vmatmul.f32.gmra.mxu0 %v524
    %v599 = vpop.f32.mrf.mxu0
    %v600 = vadd.f32 %v559, %v599
    %601 = vmatmul.f32.gmra.mxu0 %v526
    %v602 = vpop.f32.mrf.mxu0
    %v603 = vadd.f32 %v562, %v602
    %604 = vmatmul.f32.gmra.mxu0 %v528
    %v605 = vpop.f32.mrf.mxu0
    %v606 = vadd.f32 %v565, %v605
    %607 = vmatmul.f32.gmra.mxu0 %v530
    %v608 = vpop.f32.mrf.mxu0
    %v609 = vadd.f32 %v568, %v608
    %610 = vmatmul.f32.gmra.mxu0 %v532
    %v611 = vpop.f32.mrf.mxu0
    %v612 = vadd.f32 %v571, %v611
    %613 = vmatmul.f32.gmra.mxu0 %v534
    %v614 = vpop.f32.mrf.mxu0
    %v615 = vadd.f32 %v574, %v614
    %616 = vdwg.mxu0
    %s617 = scalar_lea.vmem %s4, 32
    %v618 = vld [vmem:[%s617] sm:$0xff]
    %v619 = vld [vmem:[%s617 + $0x8] sm:$0xff]
    %v620 = vld [vmem:[%s617 + $0x10] sm:$0xff]
    %v621 = vld [vmem:[%s617 + $0x18] sm:$0xff]
    %v623 = vsel %vm94, %v594, 0
    %v626 = vsel %vm94, %v597, 0
    %v629 = vsel %vm94, %v600, 0
    %v632 = vsel %vm94, %v603, 0
    %v635 = vsel %vm94, %v606, 0
    %v638 = vsel %vm94, %v609, 0
    %v641 = vsel %vm94, %v612, 0
    %v644 = vsel %vm94, %v615, 0
    %646 = vmatpush.msra.mxu0 0.0
    %647 = vmatpush.msra.mxu0 0.0
    %648 = vmatpush.msra.mxu0 0.0
    %649 = vmatpush.msra.mxu0 0.0
    %650 = vmatpush.msra.mxu0 0.0
    %651 = vmatpush.msra.mxu0 0.0
    %652 = vmatpush.msra.mxu0 0.0
    %653 = vmatpush.msra.mxu0 0.0
    %654 = vmatpush.msra.mxu0 0.0
    %655 = vmatpush.msra.mxu0 0.0
    %656 = vmatpush.msra.mxu0 0.0
    %657 = vmatpush.msra.mxu0 0.0
    %658 = vmatpush.msra.mxu0 %v621
    %659 = vmatpush.msra.mxu0 %v620
    %660 = vmatpush.msra.mxu0 %v619
    %661 = vmatpush.msra.mxu0 %v618
    %662 = vmatmul.f32.gmra.mxu0 %v623
    %v663 = vpop.f32.mrf.mxu0
    %v664 = vadd.f32 0.0, %v663
    %665 = vmatmul.f32.gmra.mxu0 %v626
    %v666 = vpop.f32.mrf.mxu0
    %v667 = vadd.f32 0.0, %v666
    %668 = vmatmul.f32.gmra.mxu0 %v629
    %v669 = vpop.f32.mrf.mxu0
    %v670 = vadd.f32 0.0, %v669
    %671 = vmatmul.f32.gmra.mxu0 %v632
    %v672 = vpop.f32.mrf.mxu0
    %v673 = vadd.f32 0.0, %v672
    %674 = vmatmul.f32.gmra.mxu0 %v635
    %v675 = vpop.f32.mrf.mxu0
    %v676 = vadd.f32 0.0, %v675
    %677 = vmatmul.f32.gmra.mxu0 %v638
    %v678 = vpop.f32.mrf.mxu0
    %v679 = vadd.f32 0.0, %v678
    %680 = vmatmul.f32.gmra.mxu0 %v641
    %v681 = vpop.f32.mrf.mxu0
    %v682 = vadd.f32 0.0, %v681
    %683 = vmatmul.f32.gmra.mxu0 %v644
    %v684 = vpop.f32.mrf.mxu0
    %v685 = vadd.f32 0.0, %v684
    %686 = vdwg.mxu0
    %v688 = vsel %vm94, %v483, 0
    %v691 = vsel %vm94, %v486, 0
    %v694 = vsel %vm94, %v489, 0
    %v697 = vsel %vm94, %v492, 0
    %v700 = vsel %vm94, %v495, 0
    %v703 = vsel %vm94, %v498, 0
    %v706 = vsel %vm94, %v501, 0
    %v709 = vsel %vm94, %v504, 0
    %711 = vmatpush.msra.mxu0 0.0
    %712 = vmatpush.msra.mxu0 0.0
    %713 = vmatpush.msra.mxu0 0.0
    %714 = vmatpush.msra.mxu0 0.0
    %715 = vmatpush.msra.mxu0 0.0
    %716 = vmatpush.msra.mxu0 0.0
    %717 = vmatpush.msra.mxu0 0.0
    %718 = vmatpush.msra.mxu0 0.0
    %719 = vmatpush.msra.mxu0 0.0
    %720 = vmatpush.msra.mxu0 0.0
    %721 = vmatpush.msra.mxu0 0.0
    %722 = vmatpush.msra.mxu0 0.0
    %723 = vmatpush.msra.mxu0 %v509
    %724 = vmatpush.msra.mxu0 %v508
    %725 = vmatpush.msra.mxu0 %v507
    %726 = vmatpush.msra.mxu0 %v506
    %727 = vmatmul.f32.gmra.mxu0 %v688
    %v728 = vpop.f32.mrf.mxu0
    %v729 = vadd.f32 %v664, %v728
    %730 = vmatmul.f32.gmra.mxu0 %v691
    %v731 = vpop.f32.mrf.mxu0
    %v732 = vadd.f32 %v667, %v731
    %733 = vmatmul.f32.gmra.mxu0 %v694
    %v734 = vpop.f32.mrf.mxu0
    %v735 = vadd.f32 %v670, %v734
    %736 = vmatmul.f32.gmra.mxu0 %v697
    %v737 = vpop.f32.mrf.mxu0
    %v738 = vadd.f32 %v673, %v737
    %739 = vmatmul.f32.gmra.mxu0 %v700
    %v740 = vpop.f32.mrf.mxu0
    %v741 = vadd.f32 %v676, %v740
    %742 = vmatmul.f32.gmra.mxu0 %v703
    %v743 = vpop.f32.mrf.mxu0
    %v744 = vadd.f32 %v679, %v743
    %745 = vmatmul.f32.gmra.mxu0 %v706
    %v746 = vpop.f32.mrf.mxu0
    %v747 = vadd.f32 %v682, %v746
    %748 = vmatmul.f32.gmra.mxu0 %v709
    %v749 = vpop.f32.mrf.mxu0
    %v750 = vadd.f32 %v685, %v749
    %751 = vdwg.mxu0
    %s752 = scalar_lea.vmem %s3, 128
    %v753 = vld [vmem:[%s752] sm:$0xff]
    %v754 = vld [vmem:[%s752 + $0x8] sm:$0xff]
    %v755 = vld [vmem:[%s752 + $0x10] sm:$0xff]
    %v756 = vld [vmem:[%s752 + $0x18] sm:$0xff]
    %v757 = vld [vmem:[%s752 + $0x20] sm:$0xff]
    %v758 = vld [vmem:[%s752 + $0x28] sm:$0xff]
    %v759 = vld [vmem:[%s752 + $0x30] sm:$0xff]
    %v760 = vld [vmem:[%s752 + $0x38] sm:$0xff]
    %v761 = vunpack.c.l.bf16 %v753
    %v762 = vunpack.c.h.bf16 %v753
    %v763 = vunpack.c.l.bf16 %v754
    %v764 = vunpack.c.h.bf16 %v754
    %v765 = vunpack.c.l.bf16 %v755
    %v766 = vunpack.c.h.bf16 %v755
    %v767 = vunpack.c.l.bf16 %v756
    %v768 = vunpack.c.h.bf16 %v756
    %v769 = vunpack.c.l.bf16 %v757
    %v770 = vunpack.c.h.bf16 %v757
    %v771 = vunpack.c.l.bf16 %v758
    %v772 = vunpack.c.h.bf16 %v758
    %v773 = vunpack.c.l.bf16 %v759
    %v774 = vunpack.c.h.bf16 %v759
    %v775 = vunpack.c.l.bf16 %v760
    %v776 = vunpack.c.h.bf16 %v760
    %777 = vmatpush.msra.mxu0 %v383
    %778 = vmatpush.msra.mxu0 %v382
    %779 = vmatpush.msra.mxu0 %v381
    %780 = vmatpush.msra.mxu0 %v380
    %781 = vmatpush.msra.mxu0 %v379
    %782 = vmatpush.msra.mxu0 %v378
    %783 = vmatpush.msra.mxu0 %v377
    %784 = vmatpush.msra.mxu0 %v376
    %785 = vmatpush.msra.mxu0 %v375
    %786 = vmatpush.msra.mxu0 %v374
    %787 = vmatpush.msra.mxu0 %v373
    %788 = vmatpush.msra.mxu0 %v372
    %789 = vmatpush.msra.mxu0 %v371
    %790 = vmatpush.msra.mxu0 %v370
    %791 = vmatpush.msra.mxu0 %v369
    %792 = vmatpush.msra.mxu0 %v368
    %793 = vmatmul.f32.gmra.mxu0 %v761
    %v794 = vpop.f32.mrf.mxu0
    %v795 = vadd.f32 0.0, %v794
    %796 = vmatmul.f32.gmra.mxu0 %v763
    %v797 = vpop.f32.mrf.mxu0
    %v798 = vadd.f32 0.0, %v797
    %799 = vmatmul.f32.gmra.mxu0 %v765
    %v800 = vpop.f32.mrf.mxu0
    %v801 = vadd.f32 0.0, %v800
    %802 = vmatmul.f32.gmra.mxu0 %v767
    %v803 = vpop.f32.mrf.mxu0
    %v804 = vadd.f32 0.0, %v803
    %805 = vmatmul.f32.gmra.mxu0 %v769
    %v806 = vpop.f32.mrf.mxu0
    %v807 = vadd.f32 0.0, %v806
    %808 = vmatmul.f32.gmra.mxu0 %v771
    %v809 = vpop.f32.mrf.mxu0
    %v810 = vadd.f32 0.0, %v809
    %811 = vmatmul.f32.gmra.mxu0 %v773
    %v812 = vpop.f32.mrf.mxu0
    %v813 = vadd.f32 0.0, %v812
    %814 = vmatmul.f32.gmra.mxu0 %v775
    %v815 = vpop.f32.mrf.mxu0
    %v816 = vadd.f32 0.0, %v815
    %817 = vdwg.mxu0
    %818 = vmatpush.msra.mxu0 %v399
    %819 = vmatpush.msra.mxu0 %v398
    %820 = vmatpush.msra.mxu0 %v397
    %821 = vmatpush.msra.mxu0 %v396
    %822 = vmatpush.msra.mxu0 %v395
    %823 = vmatpush.msra.mxu0 %v394
    %824 = vmatpush.msra.mxu0 %v393
    %825 = vmatpush.msra.mxu0 %v392
    %826 = vmatpush.msra.mxu0 %v391
    %827 = vmatpush.msra.mxu0 %v390
    %828 = vmatpush.msra.mxu0 %v389
    %829 = vmatpush.msra.mxu0 %v388
    %830 = vmatpush.msra.mxu0 %v387
    %831 = vmatpush.msra.mxu0 %v386
    %832 = vmatpush.msra.mxu0 %v385
    %833 = vmatpush.msra.mxu0 %v384
    %834 = vmatmul.f32.gmra.mxu0 %v762
    %v835 = vpop.f32.mrf.mxu0
    %v836 = vadd.f32 %v795, %v835
    %837 = vmatmul.f32.gmra.mxu0 %v764
    %v838 = vpop.f32.mrf.mxu0
    %v839 = vadd.f32 %v798, %v838
    %840 = vmatmul.f32.gmra.mxu0 %v766
    %v841 = vpop.f32.mrf.mxu0
    %v842 = vadd.f32 %v801, %v841
    %843 = vmatmul.f32.gmra.mxu0 %v768
    %v844 = vpop.f32.mrf.mxu0
    %v845 = vadd.f32 %v804, %v844
    %846 = vmatmul.f32.gmra.mxu0 %v770
    %v847 = vpop.f32.mrf.mxu0
    %v848 = vadd.f32 %v807, %v847
    %849 = vmatmul.f32.gmra.mxu0 %v772
    %v850 = vpop.f32.mrf.mxu0
    %v851 = vadd.f32 %v810, %v850
    %852 = vmatmul.f32.gmra.mxu0 %v774
    %v853 = vpop.f32.mrf.mxu0
    %v854 = vadd.f32 %v813, %v853
    %855 = vmatmul.f32.gmra.mxu0 %v776
    %v856 = vpop.f32.mrf.mxu0
    %v857 = vadd.f32 %v816, %v856
    %858 = vdwg.mxu0
    %s859 = scalar_lea.vmem %s4, 64
    %v860 = vld [vmem:[%s859] sm:$0xff]
    %v861 = vld [vmem:[%s859 + $0x8] sm:$0xff]
    %v862 = vld [vmem:[%s859 + $0x10] sm:$0xff]
    %v863 = vld [vmem:[%s859 + $0x18] sm:$0xff]
    %v865 = vsel %vm94, %v836, 0
    %v868 = vsel %vm94, %v839, 0
    %v871 = vsel %vm94, %v842, 0
    %v874 = vsel %vm94, %v845, 0
    %v877 = vsel %vm94, %v848, 0
    %v880 = vsel %vm94, %v851, 0
    %v883 = vsel %vm94, %v854, 0
    %v886 = vsel %vm94, %v857, 0
    %888 = vmatpush.msra.mxu0 0.0
    %889 = vmatpush.msra.mxu0 0.0
    %890 = vmatpush.msra.mxu0 0.0
    %891 = vmatpush.msra.mxu0 0.0
    %892 = vmatpush.msra.mxu0 0.0
    %893 = vmatpush.msra.mxu0 0.0
    %894 = vmatpush.msra.mxu0 0.0
    %895 = vmatpush.msra.mxu0 0.0
    %896 = vmatpush.msra.mxu0 0.0
    %897 = vmatpush.msra.mxu0 0.0
    %898 = vmatpush.msra.mxu0 0.0
    %899 = vmatpush.msra.mxu0 0.0
    %900 = vmatpush.msra.mxu0 %v863
    %901 = vmatpush.msra.mxu0 %v862
    %902 = vmatpush.msra.mxu0 %v861
    %903 = vmatpush.msra.mxu0 %v860
    %904 = vmatmul.f32.gmra.mxu0 %v865
    %v905 = vpop.f32.mrf.mxu0
    %v906 = vadd.f32 0.0, %v905
    %907 = vmatmul.f32.gmra.mxu0 %v868
    %v908 = vpop.f32.mrf.mxu0
    %v909 = vadd.f32 0.0, %v908
    %910 = vmatmul.f32.gmra.mxu0 %v871
    %v911 = vpop.f32.mrf.mxu0
    %v912 = vadd.f32 0.0, %v911
    %913 = vmatmul.f32.gmra.mxu0 %v874
    %v914 = vpop.f32.mrf.mxu0
    %v915 = vadd.f32 0.0, %v914
    %916 = vmatmul.f32.gmra.mxu0 %v877
    %v917 = vpop.f32.mrf.mxu0
    %v918 = vadd.f32 0.0, %v917
    %919 = vmatmul.f32.gmra.mxu0 %v880
    %v920 = vpop.f32.mrf.mxu0
    %v921 = vadd.f32 0.0, %v920
    %922 = vmatmul.f32.gmra.mxu0 %v883
    %v923 = vpop.f32.mrf.mxu0
    %v924 = vadd.f32 0.0, %v923
    %925 = vmatmul.f32.gmra.mxu0 %v886
    %v926 = vpop.f32.mrf.mxu0
    %v927 = vadd.f32 0.0, %v926
    %928 = vdwg.mxu0
    %v929 = vadd.f32 %v729, %v906
    %v930 = vadd.f32 %v732, %v909
    %v931 = vadd.f32 %v735, %v912
    %v932 = vadd.f32 %v738, %v915
    %v933 = vadd.f32 %v741, %v918
    %v934 = vadd.f32 %v744, %v921
    %v935 = vadd.f32 %v747, %v924
    %v936 = vadd.f32 %v750, %v927
    %s937 = scalar_lea.vmem %s3, 192
    %v938 = vld [vmem:[%s937] sm:$0xff]
    %v939 = vld [vmem:[%s937 + $0x8] sm:$0xff]
    %v940 = vld [vmem:[%s937 + $0x10] sm:$0xff]
    %v941 = vld [vmem:[%s937 + $0x18] sm:$0xff]
    %v942 = vld [vmem:[%s937 + $0x20] sm:$0xff]
    %v943 = vld [vmem:[%s937 + $0x28] sm:$0xff]
    %v944 = vld [vmem:[%s937 + $0x30] sm:$0xff]
    %v945 = vld [vmem:[%s937 + $0x38] sm:$0xff]
    %v946 = vunpack.c.l.bf16 %v938
    %v947 = vunpack.c.h.bf16 %v938
    %v948 = vunpack.c.l.bf16 %v939
    %v949 = vunpack.c.h.bf16 %v939
    %v950 = vunpack.c.l.bf16 %v940
    %v951 = vunpack.c.h.bf16 %v940
    %v952 = vunpack.c.l.bf16 %v941
    %v953 = vunpack.c.h.bf16 %v941
    %v954 = vunpack.c.l.bf16 %v942
    %v955 = vunpack.c.h.bf16 %v942
    %v956 = vunpack.c.l.bf16 %v943
    %v957 = vunpack.c.h.bf16 %v943
    %v958 = vunpack.c.l.bf16 %v944
    %v959 = vunpack.c.h.bf16 %v944
    %v960 = vunpack.c.l.bf16 %v945
    %v961 = vunpack.c.h.bf16 %v945
    %962 = vmatpush.msra.mxu0 %v383
    %963 = vmatpush.msra.mxu0 %v382
    %964 = vmatpush.msra.mxu0 %v381
    %965 = vmatpush.msra.mxu0 %v380
    %966 = vmatpush.msra.mxu0 %v379
    %967 = vmatpush.msra.mxu0 %v378
    %968 = vmatpush.msra.mxu0 %v377
    %969 = vmatpush.msra.mxu0 %v376
    %970 = vmatpush.msra.mxu0 %v375
    %971 = vmatpush.msra.mxu0 %v374
    %972 = vmatpush.msra.mxu0 %v373
    %973 = vmatpush.msra.mxu0 %v372
    %974 = vmatpush.msra.mxu0 %v371
    %975 = vmatpush.msra.mxu0 %v370
    %976 = vmatpush.msra.mxu0 %v369
    %977 = vmatpush.msra.mxu0 %v368
    %978 = vmatmul.f32.gmra.mxu0 %v946
    %v979 = vpop.f32.mrf.mxu0
    %v980 = vadd.f32 0.0, %v979
    %981 = vmatmul.f32.gmra.mxu0 %v948
    %v982 = vpop.f32.mrf.mxu0
    %v983 = vadd.f32 0.0, %v982
    %984 = vmatmul.f32.gmra.mxu0 %v950
    %v985 = vpop.f32.mrf.mxu0
    %v986 = vadd.f32 0.0, %v985
    %987 = vmatmul.f32.gmra.mxu0 %v952
    %v988 = vpop.f32.mrf.mxu0
    %v989 = vadd.f32 0.0, %v988
    %990 = vmatmul.f32.gmra.mxu0 %v954
    %v991 = vpop.f32.mrf.mxu0
    %v992 = vadd.f32 0.0, %v991
    %993 = vmatmul.f32.gmra.mxu0 %v956
    %v994 = vpop.f32.mrf.mxu0
    %v995 = vadd.f32 0.0, %v994
    %996 = vmatmul.f32.gmra.mxu0 %v958
    %v997 = vpop.f32.mrf.mxu0
    %v998 = vadd.f32 0.0, %v997
    %999 = vmatmul.f32.gmra.mxu0 %v960
    %v1000 = vpop.f32.mrf.mxu0
    %v1001 = vadd.f32 0.0, %v1000
    %1002 = vdwg.mxu0
    %1003 = vmatpush.msra.mxu0 %v399
    %1004 = vmatpush.msra.mxu0 %v398
    %1005 = vmatpush.msra.mxu0 %v397
    %1006 = vmatpush.msra.mxu0 %v396
    %1007 = vmatpush.msra.mxu0 %v395
    %1008 = vmatpush.msra.mxu0 %v394
    %1009 = vmatpush.msra.mxu0 %v393
    %1010 = vmatpush.msra.mxu0 %v392
    %1011 = vmatpush.msra.mxu0 %v391
    %1012 = vmatpush.msra.mxu0 %v390
    %1013 = vmatpush.msra.mxu0 %v389
    %1014 = vmatpush.msra.mxu0 %v388
    %1015 = vmatpush.msra.mxu0 %v387
    %1016 = vmatpush.msra.mxu0 %v386
    %1017 = vmatpush.msra.mxu0 %v385
    %1018 = vmatpush.msra.mxu0 %v384
    %1019 = vmatmul.f32.gmra.mxu0 %v947
    %v1020 = vpop.f32.mrf.mxu0
    %v1021 = vadd.f32 %v980, %v1020
    %1022 = vmatmul.f32.gmra.mxu0 %v949
    %v1023 = vpop.f32.mrf.mxu0
    %v1024 = vadd.f32 %v983, %v1023
    %1025 = vmatmul.f32.gmra.mxu0 %v951
    %v1026 = vpop.f32.mrf.mxu0
    %v1027 = vadd.f32 %v986, %v1026
    %1028 = vmatmul.f32.gmra.mxu0 %v953
    %v1029 = vpop.f32.mrf.mxu0
    %v1030 = vadd.f32 %v989, %v1029
    %1031 = vmatmul.f32.gmra.mxu0 %v955
    %v1032 = vpop.f32.mrf.mxu0
    %v1033 = vadd.f32 %v992, %v1032
    %1034 = vmatmul.f32.gmra.mxu0 %v957
    %v1035 = vpop.f32.mrf.mxu0
    %v1036 = vadd.f32 %v995, %v1035
    %1037 = vmatmul.f32.gmra.mxu0 %v959
    %v1038 = vpop.f32.mrf.mxu0
    %v1039 = vadd.f32 %v998, %v1038
    %1040 = vmatmul.f32.gmra.mxu0 %v961
    %v1041 = vpop.f32.mrf.mxu0
    %v1042 = vadd.f32 %v1001, %v1041
    %1043 = vdwg.mxu0
    %s1044 = scalar_lea.vmem %s4, 96
    %v1045 = vld [vmem:[%s1044] sm:$0xff]
    %v1046 = vld [vmem:[%s1044 + $0x8] sm:$0xff]
    %v1047 = vld [vmem:[%s1044 + $0x10] sm:$0xff]
    %v1048 = vld [vmem:[%s1044 + $0x18] sm:$0xff]
    %v1050 = vsel %vm94, %v1021, 0
    %v1053 = vsel %vm94, %v1024, 0
    %v1056 = vsel %vm94, %v1027, 0
    %v1059 = vsel %vm94, %v1030, 0
    %v1062 = vsel %vm94, %v1033, 0
    %v1065 = vsel %vm94, %v1036, 0
    %v1068 = vsel %vm94, %v1039, 0
    %v1071 = vsel %vm94, %v1042, 0
    %1073 = vmatpush.msra.mxu0 0.0
    %1074 = vmatpush.msra.mxu0 0.0
    %1075 = vmatpush.msra.mxu0 0.0
    %1076 = vmatpush.msra.mxu0 0.0
    %1077 = vmatpush.msra.mxu0 0.0
    %1078 = vmatpush.msra.mxu0 0.0
    %1079 = vmatpush.msra.mxu0 0.0
    %1080 = vmatpush.msra.mxu0 0.0
    %1081 = vmatpush.msra.mxu0 0.0
    %1082 = vmatpush.msra.mxu0 0.0
    %1083 = vmatpush.msra.mxu0 0.0
    %1084 = vmatpush.msra.mxu0 0.0
    %1085 = vmatpush.msra.mxu0 %v1048
    %1086 = vmatpush.msra.mxu0 %v1047
    %1087 = vmatpush.msra.mxu0 %v1046
    %1088 = vmatpush.msra.mxu0 %v1045
    %1089 = vmatmul.f32.gmra.mxu0 %v1050
    %v1090 = vpop.f32.mrf.mxu0
    %v1091 = vadd.f32 0.0, %v1090
    %1092 = vmatmul.f32.gmra.mxu0 %v1053
    %v1093 = vpop.f32.mrf.mxu0
    %v1094 = vadd.f32 0.0, %v1093
    %1095 = vmatmul.f32.gmra.mxu0 %v1056
    %v1096 = vpop.f32.mrf.mxu0
    %v1097 = vadd.f32 0.0, %v1096
    %1098 = vmatmul.f32.gmra.mxu0 %v1059
    %v1099 = vpop.f32.mrf.mxu0
    %v1100 = vadd.f32 0.0, %v1099
    %1101 = vmatmul.f32.gmra.mxu0 %v1062
    %v1102 = vpop.f32.mrf.mxu0
    %v1103 = vadd.f32 0.0, %v1102
    %1104 = vmatmul.f32.gmra.mxu0 %v1065
    %v1105 = vpop.f32.mrf.mxu0
    %v1106 = vadd.f32 0.0, %v1105
    %1107 = vmatmul.f32.gmra.mxu0 %v1068
    %v1108 = vpop.f32.mrf.mxu0
    %v1109 = vadd.f32 0.0, %v1108
    %1110 = vmatmul.f32.gmra.mxu0 %v1071
    %v1111 = vpop.f32.mrf.mxu0
    %v1112 = vadd.f32 0.0, %v1111
    %1113 = vdwg.mxu0
    %v1114 = vadd.f32 %v929, %v1091
    %v1115 = vadd.f32 %v930, %v1094
    %v1116 = vadd.f32 %v931, %v1097
    %v1117 = vadd.f32 %v932, %v1100
    %v1118 = vadd.f32 %v933, %v1103
    %v1119 = vadd.f32 %v934, %v1106
    %v1120 = vadd.f32 %v935, %v1109
    %v1121 = vadd.f32 %v936, %v1112
    %s1122 = scalar_lea.vmem %s3, 256
    %v1123 = vld [vmem:[%s1122] sm:$0xff]
    %v1124 = vld [vmem:[%s1122 + $0x8] sm:$0xff]
    %v1125 = vld [vmem:[%s1122 + $0x10] sm:$0xff]
    %v1126 = vld [vmem:[%s1122 + $0x18] sm:$0xff]
    %v1127 = vld [vmem:[%s1122 + $0x20] sm:$0xff]
    %v1128 = vld [vmem:[%s1122 + $0x28] sm:$0xff]
    %v1129 = vld [vmem:[%s1122 + $0x30] sm:$0xff]
    %v1130 = vld [vmem:[%s1122 + $0x38] sm:$0xff]
    %v1131 = vunpack.c.l.bf16 %v1123
    %v1132 = vunpack.c.h.bf16 %v1123
    %v1133 = vunpack.c.l.bf16 %v1124
    %v1134 = vunpack.c.h.bf16 %v1124
    %v1135 = vunpack.c.l.bf16 %v1125
    %v1136 = vunpack.c.h.bf16 %v1125
    %v1137 = vunpack.c.l.bf16 %v1126
    %v1138 = vunpack.c.h.bf16 %v1126
    %v1139 = vunpack.c.l.bf16 %v1127
    %v1140 = vunpack.c.h.bf16 %v1127
    %v1141 = vunpack.c.l.bf16 %v1128
    %v1142 = vunpack.c.h.bf16 %v1128
    %v1143 = vunpack.c.l.bf16 %v1129
    %v1144 = vunpack.c.h.bf16 %v1129
    %v1145 = vunpack.c.l.bf16 %v1130
    %v1146 = vunpack.c.h.bf16 %v1130
    %1147 = vmatpush.msra.mxu0 %v383
    %1148 = vmatpush.msra.mxu0 %v382
    %1149 = vmatpush.msra.mxu0 %v381
    %1150 = vmatpush.msra.mxu0 %v380
    %1151 = vmatpush.msra.mxu0 %v379
    %1152 = vmatpush.msra.mxu0 %v378
    %1153 = vmatpush.msra.mxu0 %v377
    %1154 = vmatpush.msra.mxu0 %v376
    %1155 = vmatpush.msra.mxu0 %v375
    %1156 = vmatpush.msra.mxu0 %v374
    %1157 = vmatpush.msra.mxu0 %v373
    %1158 = vmatpush.msra.mxu0 %v372
    %1159 = vmatpush.msra.mxu0 %v371
    %1160 = vmatpush.msra.mxu0 %v370
    %1161 = vmatpush.msra.mxu0 %v369
    %1162 = vmatpush.msra.mxu0 %v368
    %1163 = vmatmul.f32.gmra.mxu0 %v1131
    %v1164 = vpop.f32.mrf.mxu0
    %v1165 = vadd.f32 0.0, %v1164
    %1166 = vmatmul.f32.gmra.mxu0 %v1133
    %v1167 = vpop.f32.mrf.mxu0
    %v1168 = vadd.f32 0.0, %v1167
    %1169 = vmatmul.f32.gmra.mxu0 %v1135
    %v1170 = vpop.f32.mrf.mxu0
    %v1171 = vadd.f32 0.0, %v1170
    %1172 = vmatmul.f32.gmra.mxu0 %v1137
    %v1173 = vpop.f32.mrf.mxu0
    %v1174 = vadd.f32 0.0, %v1173
    %1175 = vmatmul.f32.gmra.mxu0 %v1139
    %v1176 = vpop.f32.mrf.mxu0
    %v1177 = vadd.f32 0.0, %v1176
    %1178 = vmatmul.f32.gmra.mxu0 %v1141
    %v1179 = vpop.f32.mrf.mxu0
    %v1180 = vadd.f32 0.0, %v1179
    %1181 = vmatmul.f32.gmra.mxu0 %v1143
    %v1182 = vpop.f32.mrf.mxu0
    %v1183 = vadd.f32 0.0, %v1182
    %1184 = vmatmul.f32.gmra.mxu0 %v1145
    %v1185 = vpop.f32.mrf.mxu0
    %v1186 = vadd.f32 0.0, %v1185
    %1187 = vdwg.mxu0
    %1188 = vmatpush.msra.mxu0 %v399
    %1189 = vmatpush.msra.mxu0 %v398
    %1190 = vmatpush.msra.mxu0 %v397
    %1191 = vmatpush.msra.mxu0 %v396
    %1192 = vmatpush.msra.mxu0 %v395
    %1193 = vmatpush.msra.mxu0 %v394
    %1194 = vmatpush.msra.mxu0 %v393
    %1195 = vmatpush.msra.mxu0 %v392
    %1196 = vmatpush.msra.mxu0 %v391
    %1197 = vmatpush.msra.mxu0 %v390
    %1198 = vmatpush.msra.mxu0 %v389
    %1199 = vmatpush.msra.mxu0 %v388
    %1200 = vmatpush.msra.mxu0 %v387
    %1201 = vmatpush.msra.mxu0 %v386
    %1202 = vmatpush.msra.mxu0 %v385
    %1203 = vmatpush.msra.mxu0 %v384
    %1204 = vmatmul.f32.gmra.mxu0 %v1132
    %v1205 = vpop.f32.mrf.mxu0
    %v1206 = vadd.f32 %v1165, %v1205
    %1207 = vmatmul.f32.gmra.mxu0 %v1134
    %v1208 = vpop.f32.mrf.mxu0
    %v1209 = vadd.f32 %v1168, %v1208
    %1210 = vmatmul.f32.gmra.mxu0 %v1136
    %v1211 = vpop.f32.mrf.mxu0
    %v1212 = vadd.f32 %v1171, %v1211
    %1213 = vmatmul.f32.gmra.mxu0 %v1138
    %v1214 = vpop.f32.mrf.mxu0
    %v1215 = vadd.f32 %v1174, %v1214
    %1216 = vmatmul.f32.gmra.mxu0 %v1140
    %v1217 = vpop.f32.mrf.mxu0
    %v1218 = vadd.f32 %v1177, %v1217
    %1219 = vmatmul.f32.gmra.mxu0 %v1142
    %v1220 = vpop.f32.mrf.mxu0
    %v1221 = vadd.f32 %v1180, %v1220
    %1222 = vmatmul.f32.gmra.mxu0 %v1144
    %v1223 = vpop.f32.mrf.mxu0
    %v1224 = vadd.f32 %v1183, %v1223
    %1225 = vmatmul.f32.gmra.mxu0 %v1146
    %v1226 = vpop.f32.mrf.mxu0
    %v1227 = vadd.f32 %v1186, %v1226
    %1228 = vdwg.mxu0
    %s1229 = scalar_lea.vmem %s4, 128
    %v1230 = vld [vmem:[%s1229] sm:$0xff]
    %v1231 = vld [vmem:[%s1229 + $0x8] sm:$0xff]
    %v1232 = vld [vmem:[%s1229 + $0x10] sm:$0xff]
    %v1233 = vld [vmem:[%s1229 + $0x18] sm:$0xff]
    %v1235 = vsel %vm94, %v1206, 0
    %v1238 = vsel %vm94, %v1209, 0
    %v1241 = vsel %vm94, %v1212, 0
    %v1244 = vsel %vm94, %v1215, 0
    %v1247 = vsel %vm94, %v1218, 0
    %v1250 = vsel %vm94, %v1221, 0
    %v1253 = vsel %vm94, %v1224, 0
    %v1256 = vsel %vm94, %v1227, 0
    %1258 = vmatpush.msra.mxu0 0.0
    %1259 = vmatpush.msra.mxu0 0.0
    %1260 = vmatpush.msra.mxu0 0.0
    %1261 = vmatpush.msra.mxu0 0.0
    %1262 = vmatpush.msra.mxu0 0.0
    %1263 = vmatpush.msra.mxu0 0.0
    %1264 = vmatpush.msra.mxu0 0.0
    %1265 = vmatpush.msra.mxu0 0.0
    %1266 = vmatpush.msra.mxu0 0.0
    %1267 = vmatpush.msra.mxu0 0.0
    %1268 = vmatpush.msra.mxu0 0.0
    %1269 = vmatpush.msra.mxu0 0.0
    %1270 = vmatpush.msra.mxu0 %v1233
    %1271 = vmatpush.msra.mxu0 %v1232
    %1272 = vmatpush.msra.mxu0 %v1231
    %1273 = vmatpush.msra.mxu0 %v1230
    %1274 = vmatmul.f32.gmra.mxu0 %v1235
    %v1275 = vpop.f32.mrf.mxu0
    %v1276 = vadd.f32 0.0, %v1275
    %1277 = vmatmul.f32.gmra.mxu0 %v1238
    %v1278 = vpop.f32.mrf.mxu0
    %v1279 = vadd.f32 0.0, %v1278
    %1280 = vmatmul.f32.gmra.mxu0 %v1241
    %v1281 = vpop.f32.mrf.mxu0
    %v1282 = vadd.f32 0.0, %v1281
    %1283 = vmatmul.f32.gmra.mxu0 %v1244
    %v1284 = vpop.f32.mrf.mxu0
    %v1285 = vadd.f32 0.0, %v1284
    %1286 = vmatmul.f32.gmra.mxu0 %v1247
    %v1287 = vpop.f32.mrf.mxu0
    %v1288 = vadd.f32 0.0, %v1287
    %1289 = vmatmul.f32.gmra.mxu0 %v1250
    %v1290 = vpop.f32.mrf.mxu0
    %v1291 = vadd.f32 0.0, %v1290
    %1292 = vmatmul.f32.gmra.mxu0 %v1253
    %v1293 = vpop.f32.mrf.mxu0
    %v1294 = vadd.f32 0.0, %v1293
    %1295 = vmatmul.f32.gmra.mxu0 %v1256
    %v1296 = vpop.f32.mrf.mxu0
    %v1297 = vadd.f32 0.0, %v1296
    %1298 = vdwg.mxu0
    %v1299 = vadd.f32 %v1114, %v1276
    %v1300 = vadd.f32 %v1115, %v1279
    %v1301 = vadd.f32 %v1116, %v1282
    %v1302 = vadd.f32 %v1117, %v1285
    %v1303 = vadd.f32 %v1118, %v1288
    %v1304 = vadd.f32 %v1119, %v1291
    %v1305 = vadd.f32 %v1120, %v1294
    %v1306 = vadd.f32 %v1121, %v1297
    %s1307 = scalar_lea.vmem %s3, 320
    %v1308 = vld [vmem:[%s1307] sm:$0xff]
    %v1309 = vld [vmem:[%s1307 + $0x8] sm:$0xff]
    %v1310 = vld [vmem:[%s1307 + $0x10] sm:$0xff]
    %v1311 = vld [vmem:[%s1307 + $0x18] sm:$0xff]
    %v1312 = vld [vmem:[%s1307 + $0x20] sm:$0xff]
    %v1313 = vld [vmem:[%s1307 + $0x28] sm:$0xff]
    %v1314 = vld [vmem:[%s1307 + $0x30] sm:$0xff]
    %v1315 = vld [vmem:[%s1307 + $0x38] sm:$0xff]
    %v1316 = vunpack.c.l.bf16 %v1308
    %v1317 = vunpack.c.h.bf16 %v1308
    %v1318 = vunpack.c.l.bf16 %v1309
    %v1319 = vunpack.c.h.bf16 %v1309
    %v1320 = vunpack.c.l.bf16 %v1310
    %v1321 = vunpack.c.h.bf16 %v1310
    %v1322 = vunpack.c.l.bf16 %v1311
    %v1323 = vunpack.c.h.bf16 %v1311
    %v1324 = vunpack.c.l.bf16 %v1312
    %v1325 = vunpack.c.h.bf16 %v1312
    %v1326 = vunpack.c.l.bf16 %v1313
    %v1327 = vunpack.c.h.bf16 %v1313
    %v1328 = vunpack.c.l.bf16 %v1314
    %v1329 = vunpack.c.h.bf16 %v1314
    %v1330 = vunpack.c.l.bf16 %v1315
    %v1331 = vunpack.c.h.bf16 %v1315
    %1332 = vmatpush.msra.mxu0 %v383
    %1333 = vmatpush.msra.mxu0 %v382
    %1334 = vmatpush.msra.mxu0 %v381
    %1335 = vmatpush.msra.mxu0 %v380
    %1336 = vmatpush.msra.mxu0 %v379
    %1337 = vmatpush.msra.mxu0 %v378
    %1338 = vmatpush.msra.mxu0 %v377
    %1339 = vmatpush.msra.mxu0 %v376
    %1340 = vmatpush.msra.mxu0 %v375
    %1341 = vmatpush.msra.mxu0 %v374
    %1342 = vmatpush.msra.mxu0 %v373
    %1343 = vmatpush.msra.mxu0 %v372
    %1344 = vmatpush.msra.mxu0 %v371
    %1345 = vmatpush.msra.mxu0 %v370
    %1346 = vmatpush.msra.mxu0 %v369
    %1347 = vmatpush.msra.mxu0 %v368
    %1348 = vmatmul.f32.gmra.mxu0 %v1316
    %v1349 = vpop.f32.mrf.mxu0
    %v1350 = vadd.f32 0.0, %v1349
    %1351 = vmatmul.f32.gmra.mxu0 %v1318
    %v1352 = vpop.f32.mrf.mxu0
    %v1353 = vadd.f32 0.0, %v1352
    %1354 = vmatmul.f32.gmra.mxu0 %v1320
    %v1355 = vpop.f32.mrf.mxu0
    %v1356 = vadd.f32 0.0, %v1355
    %1357 = vmatmul.f32.gmra.mxu0 %v1322
    %v1358 = vpop.f32.mrf.mxu0
    %v1359 = vadd.f32 0.0, %v1358
    %1360 = vmatmul.f32.gmra.mxu0 %v1324
    %v1361 = vpop.f32.mrf.mxu0
    %v1362 = vadd.f32 0.0, %v1361
    %1363 = vmatmul.f32.gmra.mxu0 %v1326
    %v1364 = vpop.f32.mrf.mxu0
    %v1365 = vadd.f32 0.0, %v1364
    %1366 = vmatmul.f32.gmra.mxu0 %v1328
    %v1367 = vpop.f32.mrf.mxu0
    %v1368 = vadd.f32 0.0, %v1367
    %1369 = vmatmul.f32.gmra.mxu0 %v1330
    %v1370 = vpop.f32.mrf.mxu0
    %v1371 = vadd.f32 0.0, %v1370
    %1372 = vdwg.mxu0
    %1373 = vmatpush.msra.mxu0 %v399
    %1374 = vmatpush.msra.mxu0 %v398
    %1375 = vmatpush.msra.mxu0 %v397
    %1376 = vmatpush.msra.mxu0 %v396
    %1377 = vmatpush.msra.mxu0 %v395
    %1378 = vmatpush.msra.mxu0 %v394
    %1379 = vmatpush.msra.mxu0 %v393
    %1380 = vmatpush.msra.mxu0 %v392
    %1381 = vmatpush.msra.mxu0 %v391
    %1382 = vmatpush.msra.mxu0 %v390
    %1383 = vmatpush.msra.mxu0 %v389
    %1384 = vmatpush.msra.mxu0 %v388
    %1385 = vmatpush.msra.mxu0 %v387
    %1386 = vmatpush.msra.mxu0 %v386
    %1387 = vmatpush.msra.mxu0 %v385
    %1388 = vmatpush.msra.mxu0 %v384
    %1389 = vmatmul.f32.gmra.mxu0 %v1317
    %v1390 = vpop.f32.mrf.mxu0
    %v1391 = vadd.f32 %v1350, %v1390
    %1392 = vmatmul.f32.gmra.mxu0 %v1319
    %v1393 = vpop.f32.mrf.mxu0
    %v1394 = vadd.f32 %v1353, %v1393
    %1395 = vmatmul.f32.gmra.mxu0 %v1321
    %v1396 = vpop.f32.mrf.mxu0
    %v1397 = vadd.f32 %v1356, %v1396
    %1398 = vmatmul.f32.gmra.mxu0 %v1323
    %v1399 = vpop.f32.mrf.mxu0
    %v1400 = vadd.f32 %v1359, %v1399
    %1401 = vmatmul.f32.gmra.mxu0 %v1325
    %v1402 = vpop.f32.mrf.mxu0
    %v1403 = vadd.f32 %v1362, %v1402
    %1404 = vmatmul.f32.gmra.mxu0 %v1327
    %v1405 = vpop.f32.mrf.mxu0
    %v1406 = vadd.f32 %v1365, %v1405
    %1407 = vmatmul.f32.gmra.mxu0 %v1329
    %v1408 = vpop.f32.mrf.mxu0
    %v1409 = vadd.f32 %v1368, %v1408
    %1410 = vmatmul.f32.gmra.mxu0 %v1331
    %v1411 = vpop.f32.mrf.mxu0
    %v1412 = vadd.f32 %v1371, %v1411
    %1413 = vdwg.mxu0
    %s1414 = scalar_lea.vmem %s4, 160
    %v1415 = vld [vmem:[%s1414] sm:$0xff]
    %v1416 = vld [vmem:[%s1414 + $0x8] sm:$0xff]
    %v1417 = vld [vmem:[%s1414 + $0x10] sm:$0xff]
    %v1418 = vld [vmem:[%s1414 + $0x18] sm:$0xff]
    %v1420 = vsel %vm94, %v1391, 0
    %v1423 = vsel %vm94, %v1394, 0
    %v1426 = vsel %vm94, %v1397, 0
    %v1429 = vsel %vm94, %v1400, 0
    %v1432 = vsel %vm94, %v1403, 0
    %v1435 = vsel %vm94, %v1406, 0
    %v1438 = vsel %vm94, %v1409, 0
    %v1441 = vsel %vm94, %v1412, 0
    %1443 = vmatpush.msra.mxu0 0.0
    %1444 = vmatpush.msra.mxu0 0.0
    %1445 = vmatpush.msra.mxu0 0.0
    %1446 = vmatpush.msra.mxu0 0.0
    %1447 = vmatpush.msra.mxu0 0.0
    %1448 = vmatpush.msra.mxu0 0.0
    %1449 = vmatpush.msra.mxu0 0.0
    %1450 = vmatpush.msra.mxu0 0.0
    %1451 = vmatpush.msra.mxu0 0.0
    %1452 = vmatpush.msra.mxu0 0.0
    %1453 = vmatpush.msra.mxu0 0.0
    %1454 = vmatpush.msra.mxu0 0.0
    %1455 = vmatpush.msra.mxu0 %v1418
    %1456 = vmatpush.msra.mxu0 %v1417
    %1457 = vmatpush.msra.mxu0 %v1416
    %1458 = vmatpush.msra.mxu0 %v1415
    %1459 = vmatmul.f32.gmra.mxu0 %v1420
    %v1460 = vpop.f32.mrf.mxu0
    %v1461 = vadd.f32 0.0, %v1460
    %1462 = vmatmul.f32.gmra.mxu0 %v1423
    %v1463 = vpop.f32.mrf.mxu0
    %v1464 = vadd.f32 0.0, %v1463
    %1465 = vmatmul.f32.gmra.mxu0 %v1426
    %v1466 = vpop.f32.mrf.mxu0
    %v1467 = vadd.f32 0.0, %v1466
    %1468 = vmatmul.f32.gmra.mxu0 %v1429
    %v1469 = vpop.f32.mrf.mxu0
    %v1470 = vadd.f32 0.0, %v1469
    %1471 = vmatmul.f32.gmra.mxu0 %v1432
    %v1472 = vpop.f32.mrf.mxu0
    %v1473 = vadd.f32 0.0, %v1472
    %1474 = vmatmul.f32.gmra.mxu0 %v1435
    %v1475 = vpop.f32.mrf.mxu0
    %v1476 = vadd.f32 0.0, %v1475
    %1477 = vmatmul.f32.gmra.mxu0 %v1438
    %v1478 = vpop.f32.mrf.mxu0
    %v1479 = vadd.f32 0.0, %v1478
    %1480 = vmatmul.f32.gmra.mxu0 %v1441
    %v1481 = vpop.f32.mrf.mxu0
    %v1482 = vadd.f32 0.0, %v1481
    %1483 = vdwg.mxu0
    %v1484 = vadd.f32 %v1299, %v1461
    %v1485 = vadd.f32 %v1300, %v1464
    %v1486 = vadd.f32 %v1301, %v1467
    %v1487 = vadd.f32 %v1302, %v1470
    %v1488 = vadd.f32 %v1303, %v1473
    %v1489 = vadd.f32 %v1304, %v1476
    %v1490 = vadd.f32 %v1305, %v1479
    %v1491 = vadd.f32 %v1306, %v1482
    %s1492 = scalar_lea.vmem %s3, 384
    %v1493 = vld [vmem:[%s1492] sm:$0xff]
    %v1494 = vld [vmem:[%s1492 + $0x8] sm:$0xff]
    %v1495 = vld [vmem:[%s1492 + $0x10] sm:$0xff]
    %v1496 = vld [vmem:[%s1492 + $0x18] sm:$0xff]
    %v1497 = vld [vmem:[%s1492 + $0x20] sm:$0xff]
    %v1498 = vld [vmem:[%s1492 + $0x28] sm:$0xff]
    %v1499 = vld [vmem:[%s1492 + $0x30] sm:$0xff]
    %v1500 = vld [vmem:[%s1492 + $0x38] sm:$0xff]
    %v1501 = vunpack.c.l.bf16 %v1493
    %v1502 = vunpack.c.h.bf16 %v1493
    %v1503 = vunpack.c.l.bf16 %v1494
    %v1504 = vunpack.c.h.bf16 %v1494
    %v1505 = vunpack.c.l.bf16 %v1495
    %v1506 = vunpack.c.h.bf16 %v1495
    %v1507 = vunpack.c.l.bf16 %v1496
    %v1508 = vunpack.c.h.bf16 %v1496
    %v1509 = vunpack.c.l.bf16 %v1497
    %v1510 = vunpack.c.h.bf16 %v1497
    %v1511 = vunpack.c.l.bf16 %v1498
    %v1512 = vunpack.c.h.bf16 %v1498
    %v1513 = vunpack.c.l.bf16 %v1499
    %v1514 = vunpack.c.h.bf16 %v1499
    %v1515 = vunpack.c.l.bf16 %v1500
    %v1516 = vunpack.c.h.bf16 %v1500
    %1517 = vmatpush.msra.mxu0 %v383
    %1518 = vmatpush.msra.mxu0 %v382
    %1519 = vmatpush.msra.mxu0 %v381
    %1520 = vmatpush.msra.mxu0 %v380
    %1521 = vmatpush.msra.mxu0 %v379
    %1522 = vmatpush.msra.mxu0 %v378
    %1523 = vmatpush.msra.mxu0 %v377
    %1524 = vmatpush.msra.mxu0 %v376
    %1525 = vmatpush.msra.mxu0 %v375
    %1526 = vmatpush.msra.mxu0 %v374
    %1527 = vmatpush.msra.mxu0 %v373
    %1528 = vmatpush.msra.mxu0 %v372
    %1529 = vmatpush.msra.mxu0 %v371
    %1530 = vmatpush.msra.mxu0 %v370
    %1531 = vmatpush.msra.mxu0 %v369
    %1532 = vmatpush.msra.mxu0 %v368
    %1533 = vmatmul.f32.gmra.mxu0 %v1501
    %v1534 = vpop.f32.mrf.mxu0
    %v1535 = vadd.f32 0.0, %v1534
    %1536 = vmatmul.f32.gmra.mxu0 %v1503
    %v1537 = vpop.f32.mrf.mxu0
    %v1538 = vadd.f32 0.0, %v1537
    %1539 = vmatmul.f32.gmra.mxu0 %v1505
    %v1540 = vpop.f32.mrf.mxu0
    %v1541 = vadd.f32 0.0, %v1540
    %1542 = vmatmul.f32.gmra.mxu0 %v1507
    %v1543 = vpop.f32.mrf.mxu0
    %v1544 = vadd.f32 0.0, %v1543
    %1545 = vmatmul.f32.gmra.mxu0 %v1509
    %v1546 = vpop.f32.mrf.mxu0
    %v1547 = vadd.f32 0.0, %v1546
    %1548 = vmatmul.f32.gmra.mxu0 %v1511
    %v1549 = vpop.f32.mrf.mxu0
    %v1550 = vadd.f32 0.0, %v1549
    %1551 = vmatmul.f32.gmra.mxu0 %v1513
    %v1552 = vpop.f32.mrf.mxu0
    %v1553 = vadd.f32 0.0, %v1552
    %1554 = vmatmul.f32.gmra.mxu0 %v1515
    %v1555 = vpop.f32.mrf.mxu0
    %v1556 = vadd.f32 0.0, %v1555
    %1557 = vdwg.mxu0
    %1558 = vmatpush.msra.mxu0 %v399
    %1559 = vmatpush.msra.mxu0 %v398
    %1560 = vmatpush.msra.mxu0 %v397
    %1561 = vmatpush.msra.mxu0 %v396
    %1562 = vmatpush.msra.mxu0 %v395
    %1563 = vmatpush.msra.mxu0 %v394
    %1564 = vmatpush.msra.mxu0 %v393
    %1565 = vmatpush.msra.mxu0 %v392
    %1566 = vmatpush.msra.mxu0 %v391
    %1567 = vmatpush.msra.mxu0 %v390
    %1568 = vmatpush.msra.mxu0 %v389
    %1569 = vmatpush.msra.mxu0 %v388
    %1570 = vmatpush.msra.mxu0 %v387
    %1571 = vmatpush.msra.mxu0 %v386
    %1572 = vmatpush.msra.mxu0 %v385
    %1573 = vmatpush.msra.mxu0 %v384
    %1574 = vmatmul.f32.gmra.mxu0 %v1502
    %v1575 = vpop.f32.mrf.mxu0
    %v1576 = vadd.f32 %v1535, %v1575
    %1577 = vmatmul.f32.gmra.mxu0 %v1504
    %v1578 = vpop.f32.mrf.mxu0
    %v1579 = vadd.f32 %v1538, %v1578
    %1580 = vmatmul.f32.gmra.mxu0 %v1506
    %v1581 = vpop.f32.mrf.mxu0
    %v1582 = vadd.f32 %v1541, %v1581
    %1583 = vmatmul.f32.gmra.mxu0 %v1508
    %v1584 = vpop.f32.mrf.mxu0
    %v1585 = vadd.f32 %v1544, %v1584
    %1586 = vmatmul.f32.gmra.mxu0 %v1510
    %v1587 = vpop.f32.mrf.mxu0
    %v1588 = vadd.f32 %v1547, %v1587
    %1589 = vmatmul.f32.gmra.mxu0 %v1512
    %v1590 = vpop.f32.mrf.mxu0
    %v1591 = vadd.f32 %v1550, %v1590
    %1592 = vmatmul.f32.gmra.mxu0 %v1514
    %v1593 = vpop.f32.mrf.mxu0
    %v1594 = vadd.f32 %v1553, %v1593
    %1595 = vmatmul.f32.gmra.mxu0 %v1516
    %v1596 = vpop.f32.mrf.mxu0
    %v1597 = vadd.f32 %v1556, %v1596
    %1598 = vdwg.mxu0
    %s1599 = scalar_lea.vmem %s4, 192
    %v1600 = vld [vmem:[%s1599] sm:$0xff]
    %v1601 = vld [vmem:[%s1599 + $0x8] sm:$0xff]
    %v1602 = vld [vmem:[%s1599 + $0x10] sm:$0xff]
    %v1603 = vld [vmem:[%s1599 + $0x18] sm:$0xff]
    %v1605 = vsel %vm94, %v1576, 0
    %v1608 = vsel %vm94, %v1579, 0
    %v1611 = vsel %vm94, %v1582, 0
    %v1614 = vsel %vm94, %v1585, 0
    %v1617 = vsel %vm94, %v1588, 0
    %v1620 = vsel %vm94, %v1591, 0
    %v1623 = vsel %vm94, %v1594, 0
    %v1626 = vsel %vm94, %v1597, 0
    %1628 = vmatpush.msra.mxu0 0.0
    %1629 = vmatpush.msra.mxu0 0.0
    %1630 = vmatpush.msra.mxu0 0.0
    %1631 = vmatpush.msra.mxu0 0.0
    %1632 = vmatpush.msra.mxu0 0.0
    %1633 = vmatpush.msra.mxu0 0.0
    %1634 = vmatpush.msra.mxu0 0.0
    %1635 = vmatpush.msra.mxu0 0.0
    %1636 = vmatpush.msra.mxu0 0.0
    %1637 = vmatpush.msra.mxu0 0.0
    %1638 = vmatpush.msra.mxu0 0.0
    %1639 = vmatpush.msra.mxu0 0.0
    %1640 = vmatpush.msra.mxu0 %v1603
    %1641 = vmatpush.msra.mxu0 %v1602
    %1642 = vmatpush.msra.mxu0 %v1601
    %1643 = vmatpush.msra.mxu0 %v1600
    %1644 = vmatmul.f32.gmra.mxu0 %v1605
    %v1645 = vpop.f32.mrf.mxu0
    %v1646 = vadd.f32 0.0, %v1645
    %1647 = vmatmul.f32.gmra.mxu0 %v1608
    %v1648 = vpop.f32.mrf.mxu0
    %v1649 = vadd.f32 0.0, %v1648
    %1650 = vmatmul.f32.gmra.mxu0 %v1611
    %v1651 = vpop.f32.mrf.mxu0
    %v1652 = vadd.f32 0.0, %v1651
    %1653 = vmatmul.f32.gmra.mxu0 %v1614
    %v1654 = vpop.f32.mrf.mxu0
    %v1655 = vadd.f32 0.0, %v1654
    %1656 = vmatmul.f32.gmra.mxu0 %v1617
    %v1657 = vpop.f32.mrf.mxu0
    %v1658 = vadd.f32 0.0, %v1657
    %1659 = vmatmul.f32.gmra.mxu0 %v1620
    %v1660 = vpop.f32.mrf.mxu0
    %v1661 = vadd.f32 0.0, %v1660
    %1662 = vmatmul.f32.gmra.mxu0 %v1623
    %v1663 = vpop.f32.mrf.mxu0
    %v1664 = vadd.f32 0.0, %v1663
    %1665 = vmatmul.f32.gmra.mxu0 %v1626
    %v1666 = vpop.f32.mrf.mxu0
    %v1667 = vadd.f32 0.0, %v1666
    %1668 = vdwg.mxu0
    %v1669 = vadd.f32 %v1484, %v1646
    %v1670 = vadd.f32 %v1485, %v1649
    %v1671 = vadd.f32 %v1486, %v1652
    %v1672 = vadd.f32 %v1487, %v1655
    %v1673 = vadd.f32 %v1488, %v1658
    %v1674 = vadd.f32 %v1489, %v1661
    %v1675 = vadd.f32 %v1490, %v1664
    %v1676 = vadd.f32 %v1491, %v1667
    %s1677 = scalar_lea.vmem %s3, 448
    %v1678 = vld [vmem:[%s1677] sm:$0xff]
    %v1679 = vld [vmem:[%s1677 + $0x8] sm:$0xff]
    %v1680 = vld [vmem:[%s1677 + $0x10] sm:$0xff]
    %v1681 = vld [vmem:[%s1677 + $0x18] sm:$0xff]
    %v1682 = vld [vmem:[%s1677 + $0x20] sm:$0xff]
    %v1683 = vld [vmem:[%s1677 + $0x28] sm:$0xff]
    %v1684 = vld [vmem:[%s1677 + $0x30] sm:$0xff]
    %v1685 = vld [vmem:[%s1677 + $0x38] sm:$0xff]
    %v1686 = vunpack.c.l.bf16 %v1678
    %v1687 = vunpack.c.h.bf16 %v1678
    %v1688 = vunpack.c.l.bf16 %v1679
    %v1689 = vunpack.c.h.bf16 %v1679
    %v1690 = vunpack.c.l.bf16 %v1680
    %v1691 = vunpack.c.h.bf16 %v1680
    %v1692 = vunpack.c.l.bf16 %v1681
    %v1693 = vunpack.c.h.bf16 %v1681
    %v1694 = vunpack.c.l.bf16 %v1682
    %v1695 = vunpack.c.h.bf16 %v1682
    %v1696 = vunpack.c.l.bf16 %v1683
    %v1697 = vunpack.c.h.bf16 %v1683
    %v1698 = vunpack.c.l.bf16 %v1684
    %v1699 = vunpack.c.h.bf16 %v1684
    %v1700 = vunpack.c.l.bf16 %v1685
    %v1701 = vunpack.c.h.bf16 %v1685
    %1702 = vmatpush.msra.mxu0 %v383
    %1703 = vmatpush.msra.mxu0 %v382
    %1704 = vmatpush.msra.mxu0 %v381
    %1705 = vmatpush.msra.mxu0 %v380
    %1706 = vmatpush.msra.mxu0 %v379
    %1707 = vmatpush.msra.mxu0 %v378
    %1708 = vmatpush.msra.mxu0 %v377
    %1709 = vmatpush.msra.mxu0 %v376
    %1710 = vmatpush.msra.mxu0 %v375
    %1711 = vmatpush.msra.mxu0 %v374
    %1712 = vmatpush.msra.mxu0 %v373
    %1713 = vmatpush.msra.mxu0 %v372
    %1714 = vmatpush.msra.mxu0 %v371
    %1715 = vmatpush.msra.mxu0 %v370
    %1716 = vmatpush.msra.mxu0 %v369
    %1717 = vmatpush.msra.mxu0 %v368
    %1718 = vmatmul.f32.gmra.mxu0 %v1686
    %v1719 = vpop.f32.mrf.mxu0
    %v1720 = vadd.f32 0.0, %v1719
    %1721 = vmatmul.f32.gmra.mxu0 %v1688
    %v1722 = vpop.f32.mrf.mxu0
    %v1723 = vadd.f32 0.0, %v1722
    %1724 = vmatmul.f32.gmra.mxu0 %v1690
    %v1725 = vpop.f32.mrf.mxu0
    %v1726 = vadd.f32 0.0, %v1725
    %1727 = vmatmul.f32.gmra.mxu0 %v1692
    %v1728 = vpop.f32.mrf.mxu0
    %v1729 = vadd.f32 0.0, %v1728
    %1730 = vmatmul.f32.gmra.mxu0 %v1694
    %v1731 = vpop.f32.mrf.mxu0
    %v1732 = vadd.f32 0.0, %v1731
    %1733 = vmatmul.f32.gmra.mxu0 %v1696
    %v1734 = vpop.f32.mrf.mxu0
    %v1735 = vadd.f32 0.0, %v1734
    %1736 = vmatmul.f32.gmra.mxu0 %v1698
    %v1737 = vpop.f32.mrf.mxu0
    %v1738 = vadd.f32 0.0, %v1737
    %1739 = vmatmul.f32.gmra.mxu0 %v1700
    %v1740 = vpop.f32.mrf.mxu0
    %v1741 = vadd.f32 0.0, %v1740
    %1742 = vdwg.mxu0
    %1743 = vmatpush.msra.mxu0 %v399
    %1744 = vmatpush.msra.mxu0 %v398
    %1745 = vmatpush.msra.mxu0 %v397
    %1746 = vmatpush.msra.mxu0 %v396
    %1747 = vmatpush.msra.mxu0 %v395
    %1748 = vmatpush.msra.mxu0 %v394
    %1749 = vmatpush.msra.mxu0 %v393
    %1750 = vmatpush.msra.mxu0 %v392
    %1751 = vmatpush.msra.mxu0 %v391
    %1752 = vmatpush.msra.mxu0 %v390
    %1753 = vmatpush.msra.mxu0 %v389
    %1754 = vmatpush.msra.mxu0 %v388
    %1755 = vmatpush.msra.mxu0 %v387
    %1756 = vmatpush.msra.mxu0 %v386
    %1757 = vmatpush.msra.mxu0 %v385
    %1758 = vmatpush.msra.mxu0 %v384
    %1759 = vmatmul.f32.gmra.mxu0 %v1687
    %v1760 = vpop.f32.mrf.mxu0
    %v1761 = vadd.f32 %v1720, %v1760
    %1762 = vmatmul.f32.gmra.mxu0 %v1689
    %v1763 = vpop.f32.mrf.mxu0
    %v1764 = vadd.f32 %v1723, %v1763
    %1765 = vmatmul.f32.gmra.mxu0 %v1691
    %v1766 = vpop.f32.mrf.mxu0
    %v1767 = vadd.f32 %v1726, %v1766
    %1768 = vmatmul.f32.gmra.mxu0 %v1693
    %v1769 = vpop.f32.mrf.mxu0
    %v1770 = vadd.f32 %v1729, %v1769
    %1771 = vmatmul.f32.gmra.mxu0 %v1695
    %v1772 = vpop.f32.mrf.mxu0
    %v1773 = vadd.f32 %v1732, %v1772
    %1774 = vmatmul.f32.gmra.mxu0 %v1697
    %v1775 = vpop.f32.mrf.mxu0
    %v1776 = vadd.f32 %v1735, %v1775
    %1777 = vmatmul.f32.gmra.mxu0 %v1699
    %v1778 = vpop.f32.mrf.mxu0
    %v1779 = vadd.f32 %v1738, %v1778
    %1780 = vmatmul.f32.gmra.mxu0 %v1701
    %v1781 = vpop.f32.mrf.mxu0
    %v1782 = vadd.f32 %v1741, %v1781
    %1783 = vdwg.mxu0
    %s1784 = scalar_lea.vmem %s4, 224
    %v1785 = vld [vmem:[%s1784] sm:$0xff]
    %v1786 = vld [vmem:[%s1784 + $0x8] sm:$0xff]
    %v1787 = vld [vmem:[%s1784 + $0x10] sm:$0xff]
    %v1788 = vld [vmem:[%s1784 + $0x18] sm:$0xff]
    %v1790 = vsel %vm94, %v1761, 0
    %v1793 = vsel %vm94, %v1764, 0
    %v1796 = vsel %vm94, %v1767, 0
    %v1799 = vsel %vm94, %v1770, 0
    %v1802 = vsel %vm94, %v1773, 0
    %v1805 = vsel %vm94, %v1776, 0
    %v1808 = vsel %vm94, %v1779, 0
    %v1811 = vsel %vm94, %v1782, 0
    %1813 = vmatpush.msra.mxu0 0.0
    %1814 = vmatpush.msra.mxu0 0.0
    %1815 = vmatpush.msra.mxu0 0.0
    %1816 = vmatpush.msra.mxu0 0.0
    %1817 = vmatpush.msra.mxu0 0.0
    %1818 = vmatpush.msra.mxu0 0.0
    %1819 = vmatpush.msra.mxu0 0.0
    %1820 = vmatpush.msra.mxu0 0.0
    %1821 = vmatpush.msra.mxu0 0.0
    %1822 = vmatpush.msra.mxu0 0.0
    %1823 = vmatpush.msra.mxu0 0.0
    %1824 = vmatpush.msra.mxu0 0.0
    %1825 = vmatpush.msra.mxu0 %v1788
    %1826 = vmatpush.msra.mxu0 %v1787
    %1827 = vmatpush.msra.mxu0 %v1786
    %1828 = vmatpush.msra.mxu0 %v1785
    %1829 = vmatmul.f32.gmra.mxu0 %v1790
    %v1830 = vpop.f32.mrf.mxu0
    %v1831 = vadd.f32 0.0, %v1830
    %1832 = vmatmul.f32.gmra.mxu0 %v1793
    %v1833 = vpop.f32.mrf.mxu0
    %v1834 = vadd.f32 0.0, %v1833
    %1835 = vmatmul.f32.gmra.mxu0 %v1796
    %v1836 = vpop.f32.mrf.mxu0
    %v1837 = vadd.f32 0.0, %v1836
    %1838 = vmatmul.f32.gmra.mxu0 %v1799
    %v1839 = vpop.f32.mrf.mxu0
    %v1840 = vadd.f32 0.0, %v1839
    %1841 = vmatmul.f32.gmra.mxu0 %v1802
    %v1842 = vpop.f32.mrf.mxu0
    %v1843 = vadd.f32 0.0, %v1842
    %1844 = vmatmul.f32.gmra.mxu0 %v1805
    %v1845 = vpop.f32.mrf.mxu0
    %v1846 = vadd.f32 0.0, %v1845
    %1847 = vmatmul.f32.gmra.mxu0 %v1808
    %v1848 = vpop.f32.mrf.mxu0
    %v1849 = vadd.f32 0.0, %v1848
    %1850 = vmatmul.f32.gmra.mxu0 %v1811
    %v1851 = vpop.f32.mrf.mxu0
    %v1852 = vadd.f32 0.0, %v1851
    %1853 = vdwg.mxu0
    %v1854 = vadd.f32 %v1669, %v1831
    %v1855 = vadd.f32 %v1670, %v1834
    %v1856 = vadd.f32 %v1671, %v1837
    %v1857 = vadd.f32 %v1672, %v1840
    %v1858 = vadd.f32 %v1673, %v1843
    %v1859 = vadd.f32 %v1674, %v1846
    %v1860 = vadd.f32 %v1675, %v1849
    %v1861 = vadd.f32 %v1676, %v1852
    %s1862 = scalar_lea.vmem %s3, 512
    %v1863 = vld [vmem:[%s1862] sm:$0xff]
    %v1864 = vld [vmem:[%s1862 + $0x8] sm:$0xff]
    %v1865 = vld [vmem:[%s1862 + $0x10] sm:$0xff]
    %v1866 = vld [vmem:[%s1862 + $0x18] sm:$0xff]
    %v1867 = vld [vmem:[%s1862 + $0x20] sm:$0xff]
    %v1868 = vld [vmem:[%s1862 + $0x28] sm:$0xff]
    %v1869 = vld [vmem:[%s1862 + $0x30] sm:$0xff]
    %v1870 = vld [vmem:[%s1862 + $0x38] sm:$0xff]
    %v1871 = vunpack.c.l.bf16 %v1863
    %v1872 = vunpack.c.h.bf16 %v1863
    %v1873 = vunpack.c.l.bf16 %v1864
    %v1874 = vunpack.c.h.bf16 %v1864
    %v1875 = vunpack.c.l.bf16 %v1865
    %v1876 = vunpack.c.h.bf16 %v1865
    %v1877 = vunpack.c.l.bf16 %v1866
    %v1878 = vunpack.c.h.bf16 %v1866
    %v1879 = vunpack.c.l.bf16 %v1867
    %v1880 = vunpack.c.h.bf16 %v1867
    %v1881 = vunpack.c.l.bf16 %v1868
    %v1882 = vunpack.c.h.bf16 %v1868
    %v1883 = vunpack.c.l.bf16 %v1869
    %v1884 = vunpack.c.h.bf16 %v1869
    %v1885 = vunpack.c.l.bf16 %v1870
    %v1886 = vunpack.c.h.bf16 %v1870
    %1887 = vmatpush.msra.mxu0 %v383
    %1888 = vmatpush.msra.mxu0 %v382
    %1889 = vmatpush.msra.mxu0 %v381
    %1890 = vmatpush.msra.mxu0 %v380
    %1891 = vmatpush.msra.mxu0 %v379
    %1892 = vmatpush.msra.mxu0 %v378
    %1893 = vmatpush.msra.mxu0 %v377
    %1894 = vmatpush.msra.mxu0 %v376
    %1895 = vmatpush.msra.mxu0 %v375
    %1896 = vmatpush.msra.mxu0 %v374
    %1897 = vmatpush.msra.mxu0 %v373
    %1898 = vmatpush.msra.mxu0 %v372
    %1899 = vmatpush.msra.mxu0 %v371
    %1900 = vmatpush.msra.mxu0 %v370
    %1901 = vmatpush.msra.mxu0 %v369
    %1902 = vmatpush.msra.mxu0 %v368
    %1903 = vmatmul.f32.gmra.mxu0 %v1871
    %v1904 = vpop.f32.mrf.mxu0
    %v1905 = vadd.f32 0.0, %v1904
    %1906 = vmatmul.f32.gmra.mxu0 %v1873
    %v1907 = vpop.f32.mrf.mxu0
    %v1908 = vadd.f32 0.0, %v1907
    %1909 = vmatmul.f32.gmra.mxu0 %v1875
    %v1910 = vpop.f32.mrf.mxu0
    %v1911 = vadd.f32 0.0, %v1910
    %1912 = vmatmul.f32.gmra.mxu0 %v1877
    %v1913 = vpop.f32.mrf.mxu0
    %v1914 = vadd.f32 0.0, %v1913
    %1915 = vmatmul.f32.gmra.mxu0 %v1879
    %v1916 = vpop.f32.mrf.mxu0
    %v1917 = vadd.f32 0.0, %v1916
    %1918 = vmatmul.f32.gmra.mxu0 %v1881
    %v1919 = vpop.f32.mrf.mxu0
    %v1920 = vadd.f32 0.0, %v1919
    %1921 = vmatmul.f32.gmra.mxu0 %v1883
    %v1922 = vpop.f32.mrf.mxu0
    %v1923 = vadd.f32 0.0, %v1922
    %1924 = vmatmul.f32.gmra.mxu0 %v1885
    %v1925 = vpop.f32.mrf.mxu0
    %v1926 = vadd.f32 0.0, %v1925
    %1927 = vdwg.mxu0
    %1928 = vmatpush.msra.mxu0 %v399
    %1929 = vmatpush.msra.mxu0 %v398
    %1930 = vmatpush.msra.mxu0 %v397
    %1931 = vmatpush.msra.mxu0 %v396
    %1932 = vmatpush.msra.mxu0 %v395
    %1933 = vmatpush.msra.mxu0 %v394
    %1934 = vmatpush.msra.mxu0 %v393
    %1935 = vmatpush.msra.mxu0 %v392
    %1936 = vmatpush.msra.mxu0 %v391
    %1937 = vmatpush.msra.mxu0 %v390
    %1938 = vmatpush.msra.mxu0 %v389
    %1939 = vmatpush.msra.mxu0 %v388
    %1940 = vmatpush.msra.mxu0 %v387
    %1941 = vmatpush.msra.mxu0 %v386
    %1942 = vmatpush.msra.mxu0 %v385
    %1943 = vmatpush.msra.mxu0 %v384
    %1944 = vmatmul.f32.gmra.mxu0 %v1872
    %v1945 = vpop.f32.mrf.mxu0
    %v1946 = vadd.f32 %v1905, %v1945
    %1947 = vmatmul.f32.gmra.mxu0 %v1874
    %v1948 = vpop.f32.mrf.mxu0
    %v1949 = vadd.f32 %v1908, %v1948
    %1950 = vmatmul.f32.gmra.mxu0 %v1876
    %v1951 = vpop.f32.mrf.mxu0
    %v1952 = vadd.f32 %v1911, %v1951
    %1953 = vmatmul.f32.gmra.mxu0 %v1878
    %v1954 = vpop.f32.mrf.mxu0
    %v1955 = vadd.f32 %v1914, %v1954
    %1956 = vmatmul.f32.gmra.mxu0 %v1880
    %v1957 = vpop.f32.mrf.mxu0
    %v1958 = vadd.f32 %v1917, %v1957
    %1959 = vmatmul.f32.gmra.mxu0 %v1882
    %v1960 = vpop.f32.mrf.mxu0
    %v1961 = vadd.f32 %v1920, %v1960
    %1962 = vmatmul.f32.gmra.mxu0 %v1884
    %v1963 = vpop.f32.mrf.mxu0
    %v1964 = vadd.f32 %v1923, %v1963
    %1965 = vmatmul.f32.gmra.mxu0 %v1886
    %v1966 = vpop.f32.mrf.mxu0
    %v1967 = vadd.f32 %v1926, %v1966
    %1968 = vdwg.mxu0
    %s1969 = scalar_lea.vmem %s4, 256
    %v1970 = vld [vmem:[%s1969] sm:$0xff]
    %v1971 = vld [vmem:[%s1969 + $0x8] sm:$0xff]
    %v1972 = vld [vmem:[%s1969 + $0x10] sm:$0xff]
    %v1973 = vld [vmem:[%s1969 + $0x18] sm:$0xff]
    %v1975 = vsel %vm94, %v1946, 0
    %v1978 = vsel %vm94, %v1949, 0
    %v1981 = vsel %vm94, %v1952, 0
    %v1984 = vsel %vm94, %v1955, 0
    %v1987 = vsel %vm94, %v1958, 0
    %v1990 = vsel %vm94, %v1961, 0
    %v1993 = vsel %vm94, %v1964, 0
    %v1996 = vsel %vm94, %v1967, 0
    %1998 = vmatpush.msra.mxu0 0.0
    %1999 = vmatpush.msra.mxu0 0.0
    %2000 = vmatpush.msra.mxu0 0.0
    %2001 = vmatpush.msra.mxu0 0.0
    %2002 = vmatpush.msra.mxu0 0.0
    %2003 = vmatpush.msra.mxu0 0.0
    %2004 = vmatpush.msra.mxu0 0.0
    %2005 = vmatpush.msra.mxu0 0.0
    %2006 = vmatpush.msra.mxu0 0.0
    %2007 = vmatpush.msra.mxu0 0.0
    %2008 = vmatpush.msra.mxu0 0.0
    %2009 = vmatpush.msra.mxu0 0.0
    %2010 = vmatpush.msra.mxu0 %v1973
    %2011 = vmatpush.msra.mxu0 %v1972
    %2012 = vmatpush.msra.mxu0 %v1971
    %2013 = vmatpush.msra.mxu0 %v1970
    %2014 = vmatmul.f32.gmra.mxu0 %v1975
    %v2015 = vpop.f32.mrf.mxu0
    %v2016 = vadd.f32 0.0, %v2015
    %2017 = vmatmul.f32.gmra.mxu0 %v1978
    %v2018 = vpop.f32.mrf.mxu0
    %v2019 = vadd.f32 0.0, %v2018
    %2020 = vmatmul.f32.gmra.mxu0 %v1981
    %v2021 = vpop.f32.mrf.mxu0
    %v2022 = vadd.f32 0.0, %v2021
    %2023 = vmatmul.f32.gmra.mxu0 %v1984
    %v2024 = vpop.f32.mrf.mxu0
    %v2025 = vadd.f32 0.0, %v2024
    %2026 = vmatmul.f32.gmra.mxu0 %v1987
    %v2027 = vpop.f32.mrf.mxu0
    %v2028 = vadd.f32 0.0, %v2027
    %2029 = vmatmul.f32.gmra.mxu0 %v1990
    %v2030 = vpop.f32.mrf.mxu0
    %v2031 = vadd.f32 0.0, %v2030
    %2032 = vmatmul.f32.gmra.mxu0 %v1993
    %v2033 = vpop.f32.mrf.mxu0
    %v2034 = vadd.f32 0.0, %v2033
    %2035 = vmatmul.f32.gmra.mxu0 %v1996
    %v2036 = vpop.f32.mrf.mxu0
    %v2037 = vadd.f32 0.0, %v2036
    %2038 = vdwg.mxu0
    %v2039 = vadd.f32 %v1854, %v2016
    %v2040 = vadd.f32 %v1855, %v2019
    %v2041 = vadd.f32 %v1856, %v2022
    %v2042 = vadd.f32 %v1857, %v2025
    %v2043 = vadd.f32 %v1858, %v2028
    %v2044 = vadd.f32 %v1859, %v2031
    %v2045 = vadd.f32 %v1860, %v2034
    %v2046 = vadd.f32 %v1861, %v2037
    %s2047 = scalar_lea.vmem %s3, 576
    %v2048 = vld [vmem:[%s2047] sm:$0xff]
    %v2049 = vld [vmem:[%s2047 + $0x8] sm:$0xff]
    %v2050 = vld [vmem:[%s2047 + $0x10] sm:$0xff]
    %v2051 = vld [vmem:[%s2047 + $0x18] sm:$0xff]
    %v2052 = vld [vmem:[%s2047 + $0x20] sm:$0xff]
    %v2053 = vld [vmem:[%s2047 + $0x28] sm:$0xff]
    %v2054 = vld [vmem:[%s2047 + $0x30] sm:$0xff]
    %v2055 = vld [vmem:[%s2047 + $0x38] sm:$0xff]
    %v2056 = vunpack.c.l.bf16 %v2048
    %v2057 = vunpack.c.h.bf16 %v2048
    %v2058 = vunpack.c.l.bf16 %v2049
    %v2059 = vunpack.c.h.bf16 %v2049
    %v2060 = vunpack.c.l.bf16 %v2050
    %v2061 = vunpack.c.h.bf16 %v2050
    %v2062 = vunpack.c.l.bf16 %v2051
    %v2063 = vunpack.c.h.bf16 %v2051
    %v2064 = vunpack.c.l.bf16 %v2052
    %v2065 = vunpack.c.h.bf16 %v2052
    %v2066 = vunpack.c.l.bf16 %v2053
    %v2067 = vunpack.c.h.bf16 %v2053
    %v2068 = vunpack.c.l.bf16 %v2054
    %v2069 = vunpack.c.h.bf16 %v2054
    %v2070 = vunpack.c.l.bf16 %v2055
    %v2071 = vunpack.c.h.bf16 %v2055
    %2072 = vmatpush.msra.mxu0 %v383
    %2073 = vmatpush.msra.mxu0 %v382
    %2074 = vmatpush.msra.mxu0 %v381
    %2075 = vmatpush.msra.mxu0 %v380
    %2076 = vmatpush.msra.mxu0 %v379
    %2077 = vmatpush.msra.mxu0 %v378
    %2078 = vmatpush.msra.mxu0 %v377
    %2079 = vmatpush.msra.mxu0 %v376
    %2080 = vmatpush.msra.mxu0 %v375
    %2081 = vmatpush.msra.mxu0 %v374
    %2082 = vmatpush.msra.mxu0 %v373
    %2083 = vmatpush.msra.mxu0 %v372
    %2084 = vmatpush.msra.mxu0 %v371
    %2085 = vmatpush.msra.mxu0 %v370
    %2086 = vmatpush.msra.mxu0 %v369
    %2087 = vmatpush.msra.mxu0 %v368
    %2088 = vmatmul.f32.gmra.mxu0 %v2056
    %v2089 = vpop.f32.mrf.mxu0
    %v2090 = vadd.f32 0.0, %v2089
    %2091 = vmatmul.f32.gmra.mxu0 %v2058
    %v2092 = vpop.f32.mrf.mxu0
    %v2093 = vadd.f32 0.0, %v2092
    %2094 = vmatmul.f32.gmra.mxu0 %v2060
    %v2095 = vpop.f32.mrf.mxu0
    %v2096 = vadd.f32 0.0, %v2095
    %2097 = vmatmul.f32.gmra.mxu0 %v2062
    %v2098 = vpop.f32.mrf.mxu0
    %v2099 = vadd.f32 0.0, %v2098
    %2100 = vmatmul.f32.gmra.mxu0 %v2064
    %v2101 = vpop.f32.mrf.mxu0
    %v2102 = vadd.f32 0.0, %v2101
    %2103 = vmatmul.f32.gmra.mxu0 %v2066
    %v2104 = vpop.f32.mrf.mxu0
    %v2105 = vadd.f32 0.0, %v2104
    %2106 = vmatmul.f32.gmra.mxu0 %v2068
    %v2107 = vpop.f32.mrf.mxu0
    %v2108 = vadd.f32 0.0, %v2107
    %2109 = vmatmul.f32.gmra.mxu0 %v2070
    %v2110 = vpop.f32.mrf.mxu0
    %v2111 = vadd.f32 0.0, %v2110
    %2112 = vdwg.mxu0
    %2113 = vmatpush.msra.mxu0 %v399
    %2114 = vmatpush.msra.mxu0 %v398
    %2115 = vmatpush.msra.mxu0 %v397
    %2116 = vmatpush.msra.mxu0 %v396
    %2117 = vmatpush.msra.mxu0 %v395
    %2118 = vmatpush.msra.mxu0 %v394
    %2119 = vmatpush.msra.mxu0 %v393
    %2120 = vmatpush.msra.mxu0 %v392
    %2121 = vmatpush.msra.mxu0 %v391
    %2122 = vmatpush.msra.mxu0 %v390
    %2123 = vmatpush.msra.mxu0 %v389
    %2124 = vmatpush.msra.mxu0 %v388
    %2125 = vmatpush.msra.mxu0 %v387
    %2126 = vmatpush.msra.mxu0 %v386
    %2127 = vmatpush.msra.mxu0 %v385
    %2128 = vmatpush.msra.mxu0 %v384
    %2129 = vmatmul.f32.gmra.mxu0 %v2057
    %v2130 = vpop.f32.mrf.mxu0
    %v2131 = vadd.f32 %v2090, %v2130
    %2132 = vmatmul.f32.gmra.mxu0 %v2059
    %v2133 = vpop.f32.mrf.mxu0
    %v2134 = vadd.f32 %v2093, %v2133
    %2135 = vmatmul.f32.gmra.mxu0 %v2061
    %v2136 = vpop.f32.mrf.mxu0
    %v2137 = vadd.f32 %v2096, %v2136
    %2138 = vmatmul.f32.gmra.mxu0 %v2063
    %v2139 = vpop.f32.mrf.mxu0
    %v2140 = vadd.f32 %v2099, %v2139
    %2141 = vmatmul.f32.gmra.mxu0 %v2065
    %v2142 = vpop.f32.mrf.mxu0
    %v2143 = vadd.f32 %v2102, %v2142
    %2144 = vmatmul.f32.gmra.mxu0 %v2067
    %v2145 = vpop.f32.mrf.mxu0
    %v2146 = vadd.f32 %v2105, %v2145
    %2147 = vmatmul.f32.gmra.mxu0 %v2069
    %v2148 = vpop.f32.mrf.mxu0
    %v2149 = vadd.f32 %v2108, %v2148
    %2150 = vmatmul.f32.gmra.mxu0 %v2071
    %v2151 = vpop.f32.mrf.mxu0
    %v2152 = vadd.f32 %v2111, %v2151
    %2153 = vdwg.mxu0
    %s2154 = scalar_lea.vmem %s4, 288
    %v2155 = vld [vmem:[%s2154] sm:$0xff]
    %v2156 = vld [vmem:[%s2154 + $0x8] sm:$0xff]
    %v2157 = vld [vmem:[%s2154 + $0x10] sm:$0xff]
    %v2158 = vld [vmem:[%s2154 + $0x18] sm:$0xff]
    %v2160 = vsel %vm94, %v2131, 0
    %v2163 = vsel %vm94, %v2134, 0
    %v2166 = vsel %vm94, %v2137, 0
    %v2169 = vsel %vm94, %v2140, 0
    %v2172 = vsel %vm94, %v2143, 0
    %v2175 = vsel %vm94, %v2146, 0
    %v2178 = vsel %vm94, %v2149, 0
    %v2181 = vsel %vm94, %v2152, 0
    %2183 = vmatpush.msra.mxu0 0.0
    %2184 = vmatpush.msra.mxu0 0.0
    %2185 = vmatpush.msra.mxu0 0.0
    %2186 = vmatpush.msra.mxu0 0.0
    %2187 = vmatpush.msra.mxu0 0.0
    %2188 = vmatpush.msra.mxu0 0.0
    %2189 = vmatpush.msra.mxu0 0.0
    %2190 = vmatpush.msra.mxu0 0.0
    %2191 = vmatpush.msra.mxu0 0.0
    %2192 = vmatpush.msra.mxu0 0.0
    %2193 = vmatpush.msra.mxu0 0.0
    %2194 = vmatpush.msra.mxu0 0.0
    %2195 = vmatpush.msra.mxu0 %v2158
    %2196 = vmatpush.msra.mxu0 %v2157
    %2197 = vmatpush.msra.mxu0 %v2156
    %2198 = vmatpush.msra.mxu0 %v2155
    %2199 = vmatmul.f32.gmra.mxu0 %v2160
    %v2200 = vpop.f32.mrf.mxu0
    %v2201 = vadd.f32 0.0, %v2200
    %2202 = vmatmul.f32.gmra.mxu0 %v2163
    %v2203 = vpop.f32.mrf.mxu0
    %v2204 = vadd.f32 0.0, %v2203
    %2205 = vmatmul.f32.gmra.mxu0 %v2166
    %v2206 = vpop.f32.mrf.mxu0
    %v2207 = vadd.f32 0.0, %v2206
    %2208 = vmatmul.f32.gmra.mxu0 %v2169
    %v2209 = vpop.f32.mrf.mxu0
    %v2210 = vadd.f32 0.0, %v2209
    %2211 = vmatmul.f32.gmra.mxu0 %v2172
    %v2212 = vpop.f32.mrf.mxu0
    %v2213 = vadd.f32 0.0, %v2212
    %2214 = vmatmul.f32.gmra.mxu0 %v2175
    %v2215 = vpop.f32.mrf.mxu0
    %v2216 = vadd.f32 0.0, %v2215
    %2217 = vmatmul.f32.gmra.mxu0 %v2178
    %v2218 = vpop.f32.mrf.mxu0
    %v2219 = vadd.f32 0.0, %v2218
    %2220 = vmatmul.f32.gmra.mxu0 %v2181
    %v2221 = vpop.f32.mrf.mxu0
    %v2222 = vadd.f32 0.0, %v2221
    %2223 = vdwg.mxu0
    %v2224 = vadd.f32 %v2039, %v2201
    %v2225 = vadd.f32 %v2040, %v2204
    %v2226 = vadd.f32 %v2041, %v2207
    %v2227 = vadd.f32 %v2042, %v2210
    %v2228 = vadd.f32 %v2043, %v2213
    %v2229 = vadd.f32 %v2044, %v2216
    %v2230 = vadd.f32 %v2045, %v2219
    %v2231 = vadd.f32 %v2046, %v2222
    %s2232 = scalar_lea.vmem %s3, 640
    %v2233 = vld [vmem:[%s2232] sm:$0xff]
    %v2234 = vld [vmem:[%s2232 + $0x8] sm:$0xff]
    %v2235 = vld [vmem:[%s2232 + $0x10] sm:$0xff]
    %v2236 = vld [vmem:[%s2232 + $0x18] sm:$0xff]
    %v2237 = vld [vmem:[%s2232 + $0x20] sm:$0xff]
    %v2238 = vld [vmem:[%s2232 + $0x28] sm:$0xff]
    %v2239 = vld [vmem:[%s2232 + $0x30] sm:$0xff]
    %v2240 = vld [vmem:[%s2232 + $0x38] sm:$0xff]
    %v2241 = vunpack.c.l.bf16 %v2233
    %v2242 = vunpack.c.h.bf16 %v2233
    %v2243 = vunpack.c.l.bf16 %v2234
    %v2244 = vunpack.c.h.bf16 %v2234
    %v2245 = vunpack.c.l.bf16 %v2235
    %v2246 = vunpack.c.h.bf16 %v2235
    %v2247 = vunpack.c.l.bf16 %v2236
    %v2248 = vunpack.c.h.bf16 %v2236
    %v2249 = vunpack.c.l.bf16 %v2237
    %v2250 = vunpack.c.h.bf16 %v2237
    %v2251 = vunpack.c.l.bf16 %v2238
    %v2252 = vunpack.c.h.bf16 %v2238
    %v2253 = vunpack.c.l.bf16 %v2239
    %v2254 = vunpack.c.h.bf16 %v2239
    %v2255 = vunpack.c.l.bf16 %v2240
    %v2256 = vunpack.c.h.bf16 %v2240
    %2257 = vmatpush.msra.mxu0 %v383
    %2258 = vmatpush.msra.mxu0 %v382
    %2259 = vmatpush.msra.mxu0 %v381
    %2260 = vmatpush.msra.mxu0 %v380
    %2261 = vmatpush.msra.mxu0 %v379
    %2262 = vmatpush.msra.mxu0 %v378
    %2263 = vmatpush.msra.mxu0 %v377
    %2264 = vmatpush.msra.mxu0 %v376
    %2265 = vmatpush.msra.mxu0 %v375
    %2266 = vmatpush.msra.mxu0 %v374
    %2267 = vmatpush.msra.mxu0 %v373
    %2268 = vmatpush.msra.mxu0 %v372
    %2269 = vmatpush.msra.mxu0 %v371
    %2270 = vmatpush.msra.mxu0 %v370
    %2271 = vmatpush.msra.mxu0 %v369
    %2272 = vmatpush.msra.mxu0 %v368
    %2273 = vmatmul.f32.gmra.mxu0 %v2241
    %v2274 = vpop.f32.mrf.mxu0
    %v2275 = vadd.f32 0.0, %v2274
    %2276 = vmatmul.f32.gmra.mxu0 %v2243
    %v2277 = vpop.f32.mrf.mxu0
    %v2278 = vadd.f32 0.0, %v2277
    %2279 = vmatmul.f32.gmra.mxu0 %v2245
    %v2280 = vpop.f32.mrf.mxu0
    %v2281 = vadd.f32 0.0, %v2280
    %2282 = vmatmul.f32.gmra.mxu0 %v2247
    %v2283 = vpop.f32.mrf.mxu0
    %v2284 = vadd.f32 0.0, %v2283
    %2285 = vmatmul.f32.gmra.mxu0 %v2249
    %v2286 = vpop.f32.mrf.mxu0
    %v2287 = vadd.f32 0.0, %v2286
    %2288 = vmatmul.f32.gmra.mxu0 %v2251
    %v2289 = vpop.f32.mrf.mxu0
    %v2290 = vadd.f32 0.0, %v2289
    %2291 = vmatmul.f32.gmra.mxu0 %v2253
    %v2292 = vpop.f32.mrf.mxu0
    %v2293 = vadd.f32 0.0, %v2292
    %2294 = vmatmul.f32.gmra.mxu0 %v2255
    %v2295 = vpop.f32.mrf.mxu0
    %v2296 = vadd.f32 0.0, %v2295
    %2297 = vdwg.mxu0
    %2298 = vmatpush.msra.mxu0 %v399
    %2299 = vmatpush.msra.mxu0 %v398
    %2300 = vmatpush.msra.mxu0 %v397
    %2301 = vmatpush.msra.mxu0 %v396
    %2302 = vmatpush.msra.mxu0 %v395
    %2303 = vmatpush.msra.mxu0 %v394
    %2304 = vmatpush.msra.mxu0 %v393
    %2305 = vmatpush.msra.mxu0 %v392
    %2306 = vmatpush.msra.mxu0 %v391
    %2307 = vmatpush.msra.mxu0 %v390
    %2308 = vmatpush.msra.mxu0 %v389
    %2309 = vmatpush.msra.mxu0 %v388
    %2310 = vmatpush.msra.mxu0 %v387
    %2311 = vmatpush.msra.mxu0 %v386
    %2312 = vmatpush.msra.mxu0 %v385
    %2313 = vmatpush.msra.mxu0 %v384
    %2314 = vmatmul.f32.gmra.mxu0 %v2242
    %v2315 = vpop.f32.mrf.mxu0
    %v2316 = vadd.f32 %v2275, %v2315
    %2317 = vmatmul.f32.gmra.mxu0 %v2244
    %v2318 = vpop.f32.mrf.mxu0
    %v2319 = vadd.f32 %v2278, %v2318
    %2320 = vmatmul.f32.gmra.mxu0 %v2246
    %v2321 = vpop.f32.mrf.mxu0
    %v2322 = vadd.f32 %v2281, %v2321
    %2323 = vmatmul.f32.gmra.mxu0 %v2248
    %v2324 = vpop.f32.mrf.mxu0
    %v2325 = vadd.f32 %v2284, %v2324
    %2326 = vmatmul.f32.gmra.mxu0 %v2250
    %v2327 = vpop.f32.mrf.mxu0
    %v2328 = vadd.f32 %v2287, %v2327
    %2329 = vmatmul.f32.gmra.mxu0 %v2252
    %v2330 = vpop.f32.mrf.mxu0
    %v2331 = vadd.f32 %v2290, %v2330
    %2332 = vmatmul.f32.gmra.mxu0 %v2254
    %v2333 = vpop.f32.mrf.mxu0
    %v2334 = vadd.f32 %v2293, %v2333
    %2335 = vmatmul.f32.gmra.mxu0 %v2256
    %v2336 = vpop.f32.mrf.mxu0
    %v2337 = vadd.f32 %v2296, %v2336
    %2338 = vdwg.mxu0
    %s2339 = scalar_lea.vmem %s4, 320
    %v2340 = vld [vmem:[%s2339] sm:$0xff]
    %v2341 = vld [vmem:[%s2339 + $0x8] sm:$0xff]
    %v2342 = vld [vmem:[%s2339 + $0x10] sm:$0xff]
    %v2343 = vld [vmem:[%s2339 + $0x18] sm:$0xff]
    %v2345 = vsel %vm94, %v2316, 0
    %v2348 = vsel %vm94, %v2319, 0
    %v2351 = vsel %vm94, %v2322, 0
    %v2354 = vsel %vm94, %v2325, 0
    %v2357 = vsel %vm94, %v2328, 0
    %v2360 = vsel %vm94, %v2331, 0
    %v2363 = vsel %vm94, %v2334, 0
    %v2366 = vsel %vm94, %v2337, 0
    %2368 = vmatpush.msra.mxu0 0.0
    %2369 = vmatpush.msra.mxu0 0.0
    %2370 = vmatpush.msra.mxu0 0.0
    %2371 = vmatpush.msra.mxu0 0.0
    %2372 = vmatpush.msra.mxu0 0.0
    %2373 = vmatpush.msra.mxu0 0.0
    %2374 = vmatpush.msra.mxu0 0.0
    %2375 = vmatpush.msra.mxu0 0.0
    %2376 = vmatpush.msra.mxu0 0.0
    %2377 = vmatpush.msra.mxu0 0.0
    %2378 = vmatpush.msra.mxu0 0.0
    %2379 = vmatpush.msra.mxu0 0.0
    %2380 = vmatpush.msra.mxu0 %v2343
    %2381 = vmatpush.msra.mxu0 %v2342
    %2382 = vmatpush.msra.mxu0 %v2341
    %2383 = vmatpush.msra.mxu0 %v2340
    %2384 = vmatmul.f32.gmra.mxu0 %v2345
    %v2385 = vpop.f32.mrf.mxu0
    %v2386 = vadd.f32 0.0, %v2385
    %2387 = vmatmul.f32.gmra.mxu0 %v2348
    %v2388 = vpop.f32.mrf.mxu0
    %v2389 = vadd.f32 0.0, %v2388
    %2390 = vmatmul.f32.gmra.mxu0 %v2351
    %v2391 = vpop.f32.mrf.mxu0
    %v2392 = vadd.f32 0.0, %v2391
    %2393 = vmatmul.f32.gmra.mxu0 %v2354
    %v2394 = vpop.f32.mrf.mxu0
    %v2395 = vadd.f32 0.0, %v2394
    %2396 = vmatmul.f32.gmra.mxu0 %v2357
    %v2397 = vpop.f32.mrf.mxu0
    %v2398 = vadd.f32 0.0, %v2397
    %2399 = vmatmul.f32.gmra.mxu0 %v2360
    %v2400 = vpop.f32.mrf.mxu0
    %v2401 = vadd.f32 0.0, %v2400
    %2402 = vmatmul.f32.gmra.mxu0 %v2363
    %v2403 = vpop.f32.mrf.mxu0
    %v2404 = vadd.f32 0.0, %v2403
    %2405 = vmatmul.f32.gmra.mxu0 %v2366
    %v2406 = vpop.f32.mrf.mxu0
    %v2407 = vadd.f32 0.0, %v2406
    %2408 = vdwg.mxu0
    %v2409 = vadd.f32 %v2224, %v2386
    %v2410 = vadd.f32 %v2225, %v2389
    %v2411 = vadd.f32 %v2226, %v2392
    %v2412 = vadd.f32 %v2227, %v2395
    %v2413 = vadd.f32 %v2228, %v2398
    %v2414 = vadd.f32 %v2229, %v2401
    %v2415 = vadd.f32 %v2230, %v2404
    %v2416 = vadd.f32 %v2231, %v2407
    %s2417 = scalar_lea.vmem %s3, 704
    %v2418 = vld [vmem:[%s2417] sm:$0xff]
    %v2419 = vld [vmem:[%s2417 + $0x8] sm:$0xff]
    %v2420 = vld [vmem:[%s2417 + $0x10] sm:$0xff]
    %v2421 = vld [vmem:[%s2417 + $0x18] sm:$0xff]
    %v2422 = vld [vmem:[%s2417 + $0x20] sm:$0xff]
    %v2423 = vld [vmem:[%s2417 + $0x28] sm:$0xff]
    %v2424 = vld [vmem:[%s2417 + $0x30] sm:$0xff]
    %v2425 = vld [vmem:[%s2417 + $0x38] sm:$0xff]
    %v2426 = vunpack.c.l.bf16 %v2418
    %v2427 = vunpack.c.h.bf16 %v2418
    %v2428 = vunpack.c.l.bf16 %v2419
    %v2429 = vunpack.c.h.bf16 %v2419
    %v2430 = vunpack.c.l.bf16 %v2420
    %v2431 = vunpack.c.h.bf16 %v2420
    %v2432 = vunpack.c.l.bf16 %v2421
    %v2433 = vunpack.c.h.bf16 %v2421
    %v2434 = vunpack.c.l.bf16 %v2422
    %v2435 = vunpack.c.h.bf16 %v2422
    %v2436 = vunpack.c.l.bf16 %v2423
    %v2437 = vunpack.c.h.bf16 %v2423
    %v2438 = vunpack.c.l.bf16 %v2424
    %v2439 = vunpack.c.h.bf16 %v2424
    %v2440 = vunpack.c.l.bf16 %v2425
    %v2441 = vunpack.c.h.bf16 %v2425
    %2442 = vmatpush.msra.mxu0 %v383
    %2443 = vmatpush.msra.mxu0 %v382
    %2444 = vmatpush.msra.mxu0 %v381
    %2445 = vmatpush.msra.mxu0 %v380
    %2446 = vmatpush.msra.mxu0 %v379
    %2447 = vmatpush.msra.mxu0 %v378
    %2448 = vmatpush.msra.mxu0 %v377
    %2449 = vmatpush.msra.mxu0 %v376
    %2450 = vmatpush.msra.mxu0 %v375
    %2451 = vmatpush.msra.mxu0 %v374
    %2452 = vmatpush.msra.mxu0 %v373
    %2453 = vmatpush.msra.mxu0 %v372
    %2454 = vmatpush.msra.mxu0 %v371
    %2455 = vmatpush.msra.mxu0 %v370
    %2456 = vmatpush.msra.mxu0 %v369
    %2457 = vmatpush.msra.mxu0 %v368
    %2458 = vmatmul.f32.gmra.mxu0 %v2426
    %v2459 = vpop.f32.mrf.mxu0
    %v2460 = vadd.f32 0.0, %v2459
    %2461 = vmatmul.f32.gmra.mxu0 %v2428
    %v2462 = vpop.f32.mrf.mxu0
    %v2463 = vadd.f32 0.0, %v2462
    %2464 = vmatmul.f32.gmra.mxu0 %v2430
    %v2465 = vpop.f32.mrf.mxu0
    %v2466 = vadd.f32 0.0, %v2465
    %2467 = vmatmul.f32.gmra.mxu0 %v2432
    %v2468 = vpop.f32.mrf.mxu0
    %v2469 = vadd.f32 0.0, %v2468
    %2470 = vmatmul.f32.gmra.mxu0 %v2434
    %v2471 = vpop.f32.mrf.mxu0
    %v2472 = vadd.f32 0.0, %v2471
    %2473 = vmatmul.f32.gmra.mxu0 %v2436
    %v2474 = vpop.f32.mrf.mxu0
    %v2475 = vadd.f32 0.0, %v2474
    %2476 = vmatmul.f32.gmra.mxu0 %v2438
    %v2477 = vpop.f32.mrf.mxu0
    %v2478 = vadd.f32 0.0, %v2477
    %2479 = vmatmul.f32.gmra.mxu0 %v2440
    %v2480 = vpop.f32.mrf.mxu0
    %v2481 = vadd.f32 0.0, %v2480
    %2482 = vdwg.mxu0
    %2483 = vmatpush.msra.mxu0 %v399
    %2484 = vmatpush.msra.mxu0 %v398
    %2485 = vmatpush.msra.mxu0 %v397
    %2486 = vmatpush.msra.mxu0 %v396
    %2487 = vmatpush.msra.mxu0 %v395
    %2488 = vmatpush.msra.mxu0 %v394
    %2489 = vmatpush.msra.mxu0 %v393
    %2490 = vmatpush.msra.mxu0 %v392
    %2491 = vmatpush.msra.mxu0 %v391
    %2492 = vmatpush.msra.mxu0 %v390
    %2493 = vmatpush.msra.mxu0 %v389
    %2494 = vmatpush.msra.mxu0 %v388
    %2495 = vmatpush.msra.mxu0 %v387
    %2496 = vmatpush.msra.mxu0 %v386
    %2497 = vmatpush.msra.mxu0 %v385
    %2498 = vmatpush.msra.mxu0 %v384
    %2499 = vmatmul.f32.gmra.mxu0 %v2427
    %v2500 = vpop.f32.mrf.mxu0
    %v2501 = vadd.f32 %v2460, %v2500
    %2502 = vmatmul.f32.gmra.mxu0 %v2429
    %v2503 = vpop.f32.mrf.mxu0
    %v2504 = vadd.f32 %v2463, %v2503
    %2505 = vmatmul.f32.gmra.mxu0 %v2431
    %v2506 = vpop.f32.mrf.mxu0
    %v2507 = vadd.f32 %v2466, %v2506
    %2508 = vmatmul.f32.gmra.mxu0 %v2433
    %v2509 = vpop.f32.mrf.mxu0
    %v2510 = vadd.f32 %v2469, %v2509
    %2511 = vmatmul.f32.gmra.mxu0 %v2435
    %v2512 = vpop.f32.mrf.mxu0
    %v2513 = vadd.f32 %v2472, %v2512
    %2514 = vmatmul.f32.gmra.mxu0 %v2437
    %v2515 = vpop.f32.mrf.mxu0
    %v2516 = vadd.f32 %v2475, %v2515
    %2517 = vmatmul.f32.gmra.mxu0 %v2439
    %v2518 = vpop.f32.mrf.mxu0
    %v2519 = vadd.f32 %v2478, %v2518
    %2520 = vmatmul.f32.gmra.mxu0 %v2441
    %v2521 = vpop.f32.mrf.mxu0
    %v2522 = vadd.f32 %v2481, %v2521
    %2523 = vdwg.mxu0
    %s2524 = scalar_lea.vmem %s4, 352
    %v2525 = vld [vmem:[%s2524] sm:$0xff]
    %v2526 = vld [vmem:[%s2524 + $0x8] sm:$0xff]
    %v2527 = vld [vmem:[%s2524 + $0x10] sm:$0xff]
    %v2528 = vld [vmem:[%s2524 + $0x18] sm:$0xff]
    %v2530 = vsel %vm94, %v2501, 0
    %v2533 = vsel %vm94, %v2504, 0
    %v2536 = vsel %vm94, %v2507, 0
    %v2539 = vsel %vm94, %v2510, 0
    %v2542 = vsel %vm94, %v2513, 0
    %v2545 = vsel %vm94, %v2516, 0
    %v2548 = vsel %vm94, %v2519, 0
    %v2551 = vsel %vm94, %v2522, 0
    %2553 = vmatpush.msra.mxu0 0.0
    %2554 = vmatpush.msra.mxu0 0.0
    %2555 = vmatpush.msra.mxu0 0.0
    %2556 = vmatpush.msra.mxu0 0.0
    %2557 = vmatpush.msra.mxu0 0.0
    %2558 = vmatpush.msra.mxu0 0.0
    %2559 = vmatpush.msra.mxu0 0.0
    %2560 = vmatpush.msra.mxu0 0.0
    %2561 = vmatpush.msra.mxu0 0.0
    %2562 = vmatpush.msra.mxu0 0.0
    %2563 = vmatpush.msra.mxu0 0.0
    %2564 = vmatpush.msra.mxu0 0.0
    %2565 = vmatpush.msra.mxu0 %v2528
    %2566 = vmatpush.msra.mxu0 %v2527
    %2567 = vmatpush.msra.mxu0 %v2526
    %2568 = vmatpush.msra.mxu0 %v2525
    %2569 = vmatmul.f32.gmra.mxu0 %v2530
    %v2570 = vpop.f32.mrf.mxu0
    %v2571 = vadd.f32 0.0, %v2570
    %2572 = vmatmul.f32.gmra.mxu0 %v2533
    %v2573 = vpop.f32.mrf.mxu0
    %v2574 = vadd.f32 0.0, %v2573
    %2575 = vmatmul.f32.gmra.mxu0 %v2536
    %v2576 = vpop.f32.mrf.mxu0
    %v2577 = vadd.f32 0.0, %v2576
    %2578 = vmatmul.f32.gmra.mxu0 %v2539
    %v2579 = vpop.f32.mrf.mxu0
    %v2580 = vadd.f32 0.0, %v2579
    %2581 = vmatmul.f32.gmra.mxu0 %v2542
    %v2582 = vpop.f32.mrf.mxu0
    %v2583 = vadd.f32 0.0, %v2582
    %2584 = vmatmul.f32.gmra.mxu0 %v2545
    %v2585 = vpop.f32.mrf.mxu0
    %v2586 = vadd.f32 0.0, %v2585
    %2587 = vmatmul.f32.gmra.mxu0 %v2548
    %v2588 = vpop.f32.mrf.mxu0
    %v2589 = vadd.f32 0.0, %v2588
    %2590 = vmatmul.f32.gmra.mxu0 %v2551
    %v2591 = vpop.f32.mrf.mxu0
    %v2592 = vadd.f32 0.0, %v2591
    %2593 = vdwg.mxu0
    %v2594 = vadd.f32 %v2409, %v2571
    %v2595 = vadd.f32 %v2410, %v2574
    %v2596 = vadd.f32 %v2411, %v2577
    %v2597 = vadd.f32 %v2412, %v2580
    %v2598 = vadd.f32 %v2413, %v2583
    %v2599 = vadd.f32 %v2414, %v2586
    %v2600 = vadd.f32 %v2415, %v2589
    %v2601 = vadd.f32 %v2416, %v2592
    %s2602 = scalar_lea.vmem %s3, 768
    %v2603 = vld [vmem:[%s2602] sm:$0xff]
    %v2604 = vld [vmem:[%s2602 + $0x8] sm:$0xff]
    %v2605 = vld [vmem:[%s2602 + $0x10] sm:$0xff]
    %v2606 = vld [vmem:[%s2602 + $0x18] sm:$0xff]
    %v2607 = vld [vmem:[%s2602 + $0x20] sm:$0xff]
    %v2608 = vld [vmem:[%s2602 + $0x28] sm:$0xff]
    %v2609 = vld [vmem:[%s2602 + $0x30] sm:$0xff]
    %v2610 = vld [vmem:[%s2602 + $0x38] sm:$0xff]
    %v2611 = vunpack.c.l.bf16 %v2603
    %v2612 = vunpack.c.h.bf16 %v2603
    %v2613 = vunpack.c.l.bf16 %v2604
    %v2614 = vunpack.c.h.bf16 %v2604
    %v2615 = vunpack.c.l.bf16 %v2605
    %v2616 = vunpack.c.h.bf16 %v2605
    %v2617 = vunpack.c.l.bf16 %v2606
    %v2618 = vunpack.c.h.bf16 %v2606
    %v2619 = vunpack.c.l.bf16 %v2607
    %v2620 = vunpack.c.h.bf16 %v2607
    %v2621 = vunpack.c.l.bf16 %v2608
    %v2622 = vunpack.c.h.bf16 %v2608
    %v2623 = vunpack.c.l.bf16 %v2609
    %v2624 = vunpack.c.h.bf16 %v2609
    %v2625 = vunpack.c.l.bf16 %v2610
    %v2626 = vunpack.c.h.bf16 %v2610
    %2627 = vmatpush.msra.mxu0 %v383
    %2628 = vmatpush.msra.mxu0 %v382
    %2629 = vmatpush.msra.mxu0 %v381
    %2630 = vmatpush.msra.mxu0 %v380
    %2631 = vmatpush.msra.mxu0 %v379
    %2632 = vmatpush.msra.mxu0 %v378
    %2633 = vmatpush.msra.mxu0 %v377
    %2634 = vmatpush.msra.mxu0 %v376
    %2635 = vmatpush.msra.mxu0 %v375
    %2636 = vmatpush.msra.mxu0 %v374
    %2637 = vmatpush.msra.mxu0 %v373
    %2638 = vmatpush.msra.mxu0 %v372
    %2639 = vmatpush.msra.mxu0 %v371
    %2640 = vmatpush.msra.mxu0 %v370
    %2641 = vmatpush.msra.mxu0 %v369
    %2642 = vmatpush.msra.mxu0 %v368
    %2643 = vmatmul.f32.gmra.mxu0 %v2611
    %v2644 = vpop.f32.mrf.mxu0
    %v2645 = vadd.f32 0.0, %v2644
    %2646 = vmatmul.f32.gmra.mxu0 %v2613
    %v2647 = vpop.f32.mrf.mxu0
    %v2648 = vadd.f32 0.0, %v2647
    %2649 = vmatmul.f32.gmra.mxu0 %v2615
    %v2650 = vpop.f32.mrf.mxu0
    %v2651 = vadd.f32 0.0, %v2650
    %2652 = vmatmul.f32.gmra.mxu0 %v2617
    %v2653 = vpop.f32.mrf.mxu0
    %v2654 = vadd.f32 0.0, %v2653
    %2655 = vmatmul.f32.gmra.mxu0 %v2619
    %v2656 = vpop.f32.mrf.mxu0
    %v2657 = vadd.f32 0.0, %v2656
    %2658 = vmatmul.f32.gmra.mxu0 %v2621
    %v2659 = vpop.f32.mrf.mxu0
    %v2660 = vadd.f32 0.0, %v2659
    %2661 = vmatmul.f32.gmra.mxu0 %v2623
    %v2662 = vpop.f32.mrf.mxu0
    %v2663 = vadd.f32 0.0, %v2662
    %2664 = vmatmul.f32.gmra.mxu0 %v2625
    %v2665 = vpop.f32.mrf.mxu0
    %v2666 = vadd.f32 0.0, %v2665
    %2667 = vdwg.mxu0
    %2668 = vmatpush.msra.mxu0 %v399
    %2669 = vmatpush.msra.mxu0 %v398
    %2670 = vmatpush.msra.mxu0 %v397
    %2671 = vmatpush.msra.mxu0 %v396
    %2672 = vmatpush.msra.mxu0 %v395
    %2673 = vmatpush.msra.mxu0 %v394
    %2674 = vmatpush.msra.mxu0 %v393
    %2675 = vmatpush.msra.mxu0 %v392
    %2676 = vmatpush.msra.mxu0 %v391
    %2677 = vmatpush.msra.mxu0 %v390
    %2678 = vmatpush.msra.mxu0 %v389
    %2679 = vmatpush.msra.mxu0 %v388
    %2680 = vmatpush.msra.mxu0 %v387
    %2681 = vmatpush.msra.mxu0 %v386
    %2682 = vmatpush.msra.mxu0 %v385
    %2683 = vmatpush.msra.mxu0 %v384
    %2684 = vmatmul.f32.gmra.mxu0 %v2612
    %v2685 = vpop.f32.mrf.mxu0
    %v2686 = vadd.f32 %v2645, %v2685
    %2687 = vmatmul.f32.gmra.mxu0 %v2614
    %v2688 = vpop.f32.mrf.mxu0
    %v2689 = vadd.f32 %v2648, %v2688
    %2690 = vmatmul.f32.gmra.mxu0 %v2616
    %v2691 = vpop.f32.mrf.mxu0
    %v2692 = vadd.f32 %v2651, %v2691
    %2693 = vmatmul.f32.gmra.mxu0 %v2618
    %v2694 = vpop.f32.mrf.mxu0
    %v2695 = vadd.f32 %v2654, %v2694
    %2696 = vmatmul.f32.gmra.mxu0 %v2620
    %v2697 = vpop.f32.mrf.mxu0
    %v2698 = vadd.f32 %v2657, %v2697
    %2699 = vmatmul.f32.gmra.mxu0 %v2622
    %v2700 = vpop.f32.mrf.mxu0
    %v2701 = vadd.f32 %v2660, %v2700
    %2702 = vmatmul.f32.gmra.mxu0 %v2624
    %v2703 = vpop.f32.mrf.mxu0
    %v2704 = vadd.f32 %v2663, %v2703
    %2705 = vmatmul.f32.gmra.mxu0 %v2626
    %v2706 = vpop.f32.mrf.mxu0
    %v2707 = vadd.f32 %v2666, %v2706
    %2708 = vdwg.mxu0
    %s2709 = scalar_lea.vmem %s4, 384
    %v2710 = vld [vmem:[%s2709] sm:$0xff]
    %v2711 = vld [vmem:[%s2709 + $0x8] sm:$0xff]
    %v2712 = vld [vmem:[%s2709 + $0x10] sm:$0xff]
    %v2713 = vld [vmem:[%s2709 + $0x18] sm:$0xff]
    %v2715 = vsel %vm94, %v2686, 0
    %v2718 = vsel %vm94, %v2689, 0
    %v2721 = vsel %vm94, %v2692, 0
    %v2724 = vsel %vm94, %v2695, 0
    %v2727 = vsel %vm94, %v2698, 0
    %v2730 = vsel %vm94, %v2701, 0
    %v2733 = vsel %vm94, %v2704, 0
    %v2736 = vsel %vm94, %v2707, 0
    %2738 = vmatpush.msra.mxu0 0.0
    %2739 = vmatpush.msra.mxu0 0.0
    %2740 = vmatpush.msra.mxu0 0.0
    %2741 = vmatpush.msra.mxu0 0.0
    %2742 = vmatpush.msra.mxu0 0.0
    %2743 = vmatpush.msra.mxu0 0.0
    %2744 = vmatpush.msra.mxu0 0.0
    %2745 = vmatpush.msra.mxu0 0.0
    %2746 = vmatpush.msra.mxu0 0.0
    %2747 = vmatpush.msra.mxu0 0.0
    %2748 = vmatpush.msra.mxu0 0.0
    %2749 = vmatpush.msra.mxu0 0.0
    %2750 = vmatpush.msra.mxu0 %v2713
    %2751 = vmatpush.msra.mxu0 %v2712
    %2752 = vmatpush.msra.mxu0 %v2711
    %2753 = vmatpush.msra.mxu0 %v2710
    %2754 = vmatmul.f32.gmra.mxu0 %v2715
    %v2755 = vpop.f32.mrf.mxu0
    %v2756 = vadd.f32 0.0, %v2755
    %2757 = vmatmul.f32.gmra.mxu0 %v2718
    %v2758 = vpop.f32.mrf.mxu0
    %v2759 = vadd.f32 0.0, %v2758
    %2760 = vmatmul.f32.gmra.mxu0 %v2721
    %v2761 = vpop.f32.mrf.mxu0
    %v2762 = vadd.f32 0.0, %v2761
    %2763 = vmatmul.f32.gmra.mxu0 %v2724
    %v2764 = vpop.f32.mrf.mxu0
    %v2765 = vadd.f32 0.0, %v2764
    %2766 = vmatmul.f32.gmra.mxu0 %v2727
    %v2767 = vpop.f32.mrf.mxu0
    %v2768 = vadd.f32 0.0, %v2767
    %2769 = vmatmul.f32.gmra.mxu0 %v2730
    %v2770 = vpop.f32.mrf.mxu0
    %v2771 = vadd.f32 0.0, %v2770
    %2772 = vmatmul.f32.gmra.mxu0 %v2733
    %v2773 = vpop.f32.mrf.mxu0
    %v2774 = vadd.f32 0.0, %v2773
    %2775 = vmatmul.f32.gmra.mxu0 %v2736
    %v2776 = vpop.f32.mrf.mxu0
    %v2777 = vadd.f32 0.0, %v2776
    %2778 = vdwg.mxu0
    %v2779 = vadd.f32 %v2594, %v2756
    %v2780 = vadd.f32 %v2595, %v2759
    %v2781 = vadd.f32 %v2596, %v2762
    %v2782 = vadd.f32 %v2597, %v2765
    %v2783 = vadd.f32 %v2598, %v2768
    %v2784 = vadd.f32 %v2599, %v2771
    %v2785 = vadd.f32 %v2600, %v2774
    %v2786 = vadd.f32 %v2601, %v2777
    %s2787 = scalar_lea.vmem %s3, 832
    %v2788 = vld [vmem:[%s2787] sm:$0xff]
    %v2789 = vld [vmem:[%s2787 + $0x8] sm:$0xff]
    %v2790 = vld [vmem:[%s2787 + $0x10] sm:$0xff]
    %v2791 = vld [vmem:[%s2787 + $0x18] sm:$0xff]
    %v2792 = vld [vmem:[%s2787 + $0x20] sm:$0xff]
    %v2793 = vld [vmem:[%s2787 + $0x28] sm:$0xff]
    %v2794 = vld [vmem:[%s2787 + $0x30] sm:$0xff]
    %v2795 = vld [vmem:[%s2787 + $0x38] sm:$0xff]
    %v2796 = vunpack.c.l.bf16 %v2788
    %v2797 = vunpack.c.h.bf16 %v2788
    %v2798 = vunpack.c.l.bf16 %v2789
    %v2799 = vunpack.c.h.bf16 %v2789
    %v2800 = vunpack.c.l.bf16 %v2790
    %v2801 = vunpack.c.h.bf16 %v2790
    %v2802 = vunpack.c.l.bf16 %v2791
    %v2803 = vunpack.c.h.bf16 %v2791
    %v2804 = vunpack.c.l.bf16 %v2792
    %v2805 = vunpack.c.h.bf16 %v2792
    %v2806 = vunpack.c.l.bf16 %v2793
    %v2807 = vunpack.c.h.bf16 %v2793
    %v2808 = vunpack.c.l.bf16 %v2794
    %v2809 = vunpack.c.h.bf16 %v2794
    %v2810 = vunpack.c.l.bf16 %v2795
    %v2811 = vunpack.c.h.bf16 %v2795
    %2812 = vmatpush.msra.mxu0 %v383
    %2813 = vmatpush.msra.mxu0 %v382
    %2814 = vmatpush.msra.mxu0 %v381
    %2815 = vmatpush.msra.mxu0 %v380
    %2816 = vmatpush.msra.mxu0 %v379
    %2817 = vmatpush.msra.mxu0 %v378
    %2818 = vmatpush.msra.mxu0 %v377
    %2819 = vmatpush.msra.mxu0 %v376
    %2820 = vmatpush.msra.mxu0 %v375
    %2821 = vmatpush.msra.mxu0 %v374
    %2822 = vmatpush.msra.mxu0 %v373
    %2823 = vmatpush.msra.mxu0 %v372
    %2824 = vmatpush.msra.mxu0 %v371
    %2825 = vmatpush.msra.mxu0 %v370
    %2826 = vmatpush.msra.mxu0 %v369
    %2827 = vmatpush.msra.mxu0 %v368
    %2828 = vmatmul.f32.gmra.mxu0 %v2796
    %v2829 = vpop.f32.mrf.mxu0
    %v2830 = vadd.f32 0.0, %v2829
    %2831 = vmatmul.f32.gmra.mxu0 %v2798
    %v2832 = vpop.f32.mrf.mxu0
    %v2833 = vadd.f32 0.0, %v2832
    %2834 = vmatmul.f32.gmra.mxu0 %v2800
    %v2835 = vpop.f32.mrf.mxu0
    %v2836 = vadd.f32 0.0, %v2835
    %2837 = vmatmul.f32.gmra.mxu0 %v2802
    %v2838 = vpop.f32.mrf.mxu0
    %v2839 = vadd.f32 0.0, %v2838
    %2840 = vmatmul.f32.gmra.mxu0 %v2804
    %v2841 = vpop.f32.mrf.mxu0
    %v2842 = vadd.f32 0.0, %v2841
    %2843 = vmatmul.f32.gmra.mxu0 %v2806
    %v2844 = vpop.f32.mrf.mxu0
    %v2845 = vadd.f32 0.0, %v2844
    %2846 = vmatmul.f32.gmra.mxu0 %v2808
    %v2847 = vpop.f32.mrf.mxu0
    %v2848 = vadd.f32 0.0, %v2847
    %2849 = vmatmul.f32.gmra.mxu0 %v2810
    %v2850 = vpop.f32.mrf.mxu0
    %v2851 = vadd.f32 0.0, %v2850
    %2852 = vdwg.mxu0
    %2853 = vmatpush.msra.mxu0 %v399
    %2854 = vmatpush.msra.mxu0 %v398
    %2855 = vmatpush.msra.mxu0 %v397
    %2856 = vmatpush.msra.mxu0 %v396
    %2857 = vmatpush.msra.mxu0 %v395
    %2858 = vmatpush.msra.mxu0 %v394
    %2859 = vmatpush.msra.mxu0 %v393
    %2860 = vmatpush.msra.mxu0 %v392
    %2861 = vmatpush.msra.mxu0 %v391
    %2862 = vmatpush.msra.mxu0 %v390
    %2863 = vmatpush.msra.mxu0 %v389
    %2864 = vmatpush.msra.mxu0 %v388
    %2865 = vmatpush.msra.mxu0 %v387
    %2866 = vmatpush.msra.mxu0 %v386
    %2867 = vmatpush.msra.mxu0 %v385
    %2868 = vmatpush.msra.mxu0 %v384
    %2869 = vmatmul.f32.gmra.mxu0 %v2797
    %v2870 = vpop.f32.mrf.mxu0
    %v2871 = vadd.f32 %v2830, %v2870
    %2872 = vmatmul.f32.gmra.mxu0 %v2799
    %v2873 = vpop.f32.mrf.mxu0
    %v2874 = vadd.f32 %v2833, %v2873
    %2875 = vmatmul.f32.gmra.mxu0 %v2801
    %v2876 = vpop.f32.mrf.mxu0
    %v2877 = vadd.f32 %v2836, %v2876
    %2878 = vmatmul.f32.gmra.mxu0 %v2803
    %v2879 = vpop.f32.mrf.mxu0
    %v2880 = vadd.f32 %v2839, %v2879
    %2881 = vmatmul.f32.gmra.mxu0 %v2805
    %v2882 = vpop.f32.mrf.mxu0
    %v2883 = vadd.f32 %v2842, %v2882
    %2884 = vmatmul.f32.gmra.mxu0 %v2807
    %v2885 = vpop.f32.mrf.mxu0
    %v2886 = vadd.f32 %v2845, %v2885
    %2887 = vmatmul.f32.gmra.mxu0 %v2809
    %v2888 = vpop.f32.mrf.mxu0
    %v2889 = vadd.f32 %v2848, %v2888
    %2890 = vmatmul.f32.gmra.mxu0 %v2811
    %v2891 = vpop.f32.mrf.mxu0
    %v2892 = vadd.f32 %v2851, %v2891
    %2893 = vdwg.mxu0
    %s2894 = scalar_lea.vmem %s4, 416
    %v2895 = vld [vmem:[%s2894] sm:$0xff]
    %v2896 = vld [vmem:[%s2894 + $0x8] sm:$0xff]
    %v2897 = vld [vmem:[%s2894 + $0x10] sm:$0xff]
    %v2898 = vld [vmem:[%s2894 + $0x18] sm:$0xff]
    %v2900 = vsel %vm94, %v2871, 0
    %v2903 = vsel %vm94, %v2874, 0
    %v2906 = vsel %vm94, %v2877, 0
    %v2909 = vsel %vm94, %v2880, 0
    %v2912 = vsel %vm94, %v2883, 0
    %v2915 = vsel %vm94, %v2886, 0
    %v2918 = vsel %vm94, %v2889, 0
    %v2921 = vsel %vm94, %v2892, 0
    %2923 = vmatpush.msra.mxu0 0.0
    %2924 = vmatpush.msra.mxu0 0.0
    %2925 = vmatpush.msra.mxu0 0.0
    %2926 = vmatpush.msra.mxu0 0.0
    %2927 = vmatpush.msra.mxu0 0.0
    %2928 = vmatpush.msra.mxu0 0.0
    %2929 = vmatpush.msra.mxu0 0.0
    %2930 = vmatpush.msra.mxu0 0.0
    %2931 = vmatpush.msra.mxu0 0.0
    %2932 = vmatpush.msra.mxu0 0.0
    %2933 = vmatpush.msra.mxu0 0.0
    %2934 = vmatpush.msra.mxu0 0.0
    %2935 = vmatpush.msra.mxu0 %v2898
    %2936 = vmatpush.msra.mxu0 %v2897
    %2937 = vmatpush.msra.mxu0 %v2896
    %2938 = vmatpush.msra.mxu0 %v2895
    %2939 = vmatmul.f32.gmra.mxu0 %v2900
    %v2940 = vpop.f32.mrf.mxu0
    %v2941 = vadd.f32 0.0, %v2940
    %2942 = vmatmul.f32.gmra.mxu0 %v2903
    %v2943 = vpop.f32.mrf.mxu0
    %v2944 = vadd.f32 0.0, %v2943
    %2945 = vmatmul.f32.gmra.mxu0 %v2906
    %v2946 = vpop.f32.mrf.mxu0
    %v2947 = vadd.f32 0.0, %v2946
    %2948 = vmatmul.f32.gmra.mxu0 %v2909
    %v2949 = vpop.f32.mrf.mxu0
    %v2950 = vadd.f32 0.0, %v2949
    %2951 = vmatmul.f32.gmra.mxu0 %v2912
    %v2952 = vpop.f32.mrf.mxu0
    %v2953 = vadd.f32 0.0, %v2952
    %2954 = vmatmul.f32.gmra.mxu0 %v2915
    %v2955 = vpop.f32.mrf.mxu0
    %v2956 = vadd.f32 0.0, %v2955
    %2957 = vmatmul.f32.gmra.mxu0 %v2918
    %v2958 = vpop.f32.mrf.mxu0
    %v2959 = vadd.f32 0.0, %v2958
    %2960 = vmatmul.f32.gmra.mxu0 %v2921
    %v2961 = vpop.f32.mrf.mxu0
    %v2962 = vadd.f32 0.0, %v2961
    %2963 = vdwg.mxu0
    %v2964 = vadd.f32 %v2779, %v2941
    %v2965 = vadd.f32 %v2780, %v2944
    %v2966 = vadd.f32 %v2781, %v2947
    %v2967 = vadd.f32 %v2782, %v2950
    %v2968 = vadd.f32 %v2783, %v2953
    %v2969 = vadd.f32 %v2784, %v2956
    %v2970 = vadd.f32 %v2785, %v2959
    %v2971 = vadd.f32 %v2786, %v2962
    %s2972 = scalar_lea.vmem %s3, 896
    %v2973 = vld [vmem:[%s2972] sm:$0xff]
    %v2974 = vld [vmem:[%s2972 + $0x8] sm:$0xff]
    %v2975 = vld [vmem:[%s2972 + $0x10] sm:$0xff]
    %v2976 = vld [vmem:[%s2972 + $0x18] sm:$0xff]
    %v2977 = vld [vmem:[%s2972 + $0x20] sm:$0xff]
    %v2978 = vld [vmem:[%s2972 + $0x28] sm:$0xff]
    %v2979 = vld [vmem:[%s2972 + $0x30] sm:$0xff]
    %v2980 = vld [vmem:[%s2972 + $0x38] sm:$0xff]
    %v2981 = vunpack.c.l.bf16 %v2973
    %v2982 = vunpack.c.h.bf16 %v2973
    %v2983 = vunpack.c.l.bf16 %v2974
    %v2984 = vunpack.c.h.bf16 %v2974
    %v2985 = vunpack.c.l.bf16 %v2975
    %v2986 = vunpack.c.h.bf16 %v2975
    %v2987 = vunpack.c.l.bf16 %v2976
    %v2988 = vunpack.c.h.bf16 %v2976
    %v2989 = vunpack.c.l.bf16 %v2977
    %v2990 = vunpack.c.h.bf16 %v2977
    %v2991 = vunpack.c.l.bf16 %v2978
    %v2992 = vunpack.c.h.bf16 %v2978
    %v2993 = vunpack.c.l.bf16 %v2979
    %v2994 = vunpack.c.h.bf16 %v2979
    %v2995 = vunpack.c.l.bf16 %v2980
    %v2996 = vunpack.c.h.bf16 %v2980
    %2997 = vmatpush.msra.mxu0 %v383
    %2998 = vmatpush.msra.mxu0 %v382
    %2999 = vmatpush.msra.mxu0 %v381
    %3000 = vmatpush.msra.mxu0 %v380
    %3001 = vmatpush.msra.mxu0 %v379
    %3002 = vmatpush.msra.mxu0 %v378
    %3003 = vmatpush.msra.mxu0 %v377
    %3004 = vmatpush.msra.mxu0 %v376
    %3005 = vmatpush.msra.mxu0 %v375
    %3006 = vmatpush.msra.mxu0 %v374
    %3007 = vmatpush.msra.mxu0 %v373
    %3008 = vmatpush.msra.mxu0 %v372
    %3009 = vmatpush.msra.mxu0 %v371
    %3010 = vmatpush.msra.mxu0 %v370
    %3011 = vmatpush.msra.mxu0 %v369
    %3012 = vmatpush.msra.mxu0 %v368
    %3013 = vmatmul.f32.gmra.mxu0 %v2981
    %v3014 = vpop.f32.mrf.mxu0
    %v3015 = vadd.f32 0.0, %v3014
    %3016 = vmatmul.f32.gmra.mxu0 %v2983
    %v3017 = vpop.f32.mrf.mxu0
    %v3018 = vadd.f32 0.0, %v3017
    %3019 = vmatmul.f32.gmra.mxu0 %v2985
    %v3020 = vpop.f32.mrf.mxu0
    %v3021 = vadd.f32 0.0, %v3020
    %3022 = vmatmul.f32.gmra.mxu0 %v2987
    %v3023 = vpop.f32.mrf.mxu0
    %v3024 = vadd.f32 0.0, %v3023
    %3025 = vmatmul.f32.gmra.mxu0 %v2989
    %v3026 = vpop.f32.mrf.mxu0
    %v3027 = vadd.f32 0.0, %v3026
    %3028 = vmatmul.f32.gmra.mxu0 %v2991
    %v3029 = vpop.f32.mrf.mxu0
    %v3030 = vadd.f32 0.0, %v3029
    %3031 = vmatmul.f32.gmra.mxu0 %v2993
    %v3032 = vpop.f32.mrf.mxu0
    %v3033 = vadd.f32 0.0, %v3032
    %3034 = vmatmul.f32.gmra.mxu0 %v2995
    %v3035 = vpop.f32.mrf.mxu0
    %v3036 = vadd.f32 0.0, %v3035
    %3037 = vdwg.mxu0
    %3038 = vmatpush.msra.mxu0 %v399
    %3039 = vmatpush.msra.mxu0 %v398
    %3040 = vmatpush.msra.mxu0 %v397
    %3041 = vmatpush.msra.mxu0 %v396
    %3042 = vmatpush.msra.mxu0 %v395
    %3043 = vmatpush.msra.mxu0 %v394
    %3044 = vmatpush.msra.mxu0 %v393
    %3045 = vmatpush.msra.mxu0 %v392
    %3046 = vmatpush.msra.mxu0 %v391
    %3047 = vmatpush.msra.mxu0 %v390
    %3048 = vmatpush.msra.mxu0 %v389
    %3049 = vmatpush.msra.mxu0 %v388
    %3050 = vmatpush.msra.mxu0 %v387
    %3051 = vmatpush.msra.mxu0 %v386
    %3052 = vmatpush.msra.mxu0 %v385
    %3053 = vmatpush.msra.mxu0 %v384
    %3054 = vmatmul.f32.gmra.mxu0 %v2982
    %v3055 = vpop.f32.mrf.mxu0
    %v3056 = vadd.f32 %v3015, %v3055
    %3057 = vmatmul.f32.gmra.mxu0 %v2984
    %v3058 = vpop.f32.mrf.mxu0
    %v3059 = vadd.f32 %v3018, %v3058
    %3060 = vmatmul.f32.gmra.mxu0 %v2986
    %v3061 = vpop.f32.mrf.mxu0
    %v3062 = vadd.f32 %v3021, %v3061
    %3063 = vmatmul.f32.gmra.mxu0 %v2988
    %v3064 = vpop.f32.mrf.mxu0
    %v3065 = vadd.f32 %v3024, %v3064
    %3066 = vmatmul.f32.gmra.mxu0 %v2990
    %v3067 = vpop.f32.mrf.mxu0
    %v3068 = vadd.f32 %v3027, %v3067
    %3069 = vmatmul.f32.gmra.mxu0 %v2992
    %v3070 = vpop.f32.mrf.mxu0
    %v3071 = vadd.f32 %v3030, %v3070
    %3072 = vmatmul.f32.gmra.mxu0 %v2994
    %v3073 = vpop.f32.mrf.mxu0
    %v3074 = vadd.f32 %v3033, %v3073
    %3075 = vmatmul.f32.gmra.mxu0 %v2996
    %v3076 = vpop.f32.mrf.mxu0
    %v3077 = vadd.f32 %v3036, %v3076
    %3078 = vdwg.mxu0
    %s3079 = scalar_lea.vmem %s4, 448
    %v3080 = vld [vmem:[%s3079] sm:$0xff]
    %v3081 = vld [vmem:[%s3079 + $0x8] sm:$0xff]
    %v3082 = vld [vmem:[%s3079 + $0x10] sm:$0xff]
    %v3083 = vld [vmem:[%s3079 + $0x18] sm:$0xff]
    %v3085 = vsel %vm94, %v3056, 0
    %v3088 = vsel %vm94, %v3059, 0
    %v3091 = vsel %vm94, %v3062, 0
    %v3094 = vsel %vm94, %v3065, 0
    %v3097 = vsel %vm94, %v3068, 0
    %v3100 = vsel %vm94, %v3071, 0
    %v3103 = vsel %vm94, %v3074, 0
    %v3106 = vsel %vm94, %v3077, 0
    %3108 = vmatpush.msra.mxu0 0.0
    %3109 = vmatpush.msra.mxu0 0.0
    %3110 = vmatpush.msra.mxu0 0.0
    %3111 = vmatpush.msra.mxu0 0.0
    %3112 = vmatpush.msra.mxu0 0.0
    %3113 = vmatpush.msra.mxu0 0.0
    %3114 = vmatpush.msra.mxu0 0.0
    %3115 = vmatpush.msra.mxu0 0.0
    %3116 = vmatpush.msra.mxu0 0.0
    %3117 = vmatpush.msra.mxu0 0.0
    %3118 = vmatpush.msra.mxu0 0.0
    %3119 = vmatpush.msra.mxu0 0.0
    %3120 = vmatpush.msra.mxu0 %v3083
    %3121 = vmatpush.msra.mxu0 %v3082
    %3122 = vmatpush.msra.mxu0 %v3081
    %3123 = vmatpush.msra.mxu0 %v3080
    %3124 = vmatmul.f32.gmra.mxu0 %v3085
    %v3125 = vpop.f32.mrf.mxu0
    %v3126 = vadd.f32 0.0, %v3125
    %3127 = vmatmul.f32.gmra.mxu0 %v3088
    %v3128 = vpop.f32.mrf.mxu0
    %v3129 = vadd.f32 0.0, %v3128
    %3130 = vmatmul.f32.gmra.mxu0 %v3091
    %v3131 = vpop.f32.mrf.mxu0
    %v3132 = vadd.f32 0.0, %v3131
    %3133 = vmatmul.f32.gmra.mxu0 %v3094
    %v3134 = vpop.f32.mrf.mxu0
    %v3135 = vadd.f32 0.0, %v3134
    %3136 = vmatmul.f32.gmra.mxu0 %v3097
    %v3137 = vpop.f32.mrf.mxu0
    %v3138 = vadd.f32 0.0, %v3137
    %3139 = vmatmul.f32.gmra.mxu0 %v3100
    %v3140 = vpop.f32.mrf.mxu0
    %v3141 = vadd.f32 0.0, %v3140
    %3142 = vmatmul.f32.gmra.mxu0 %v3103
    %v3143 = vpop.f32.mrf.mxu0
    %v3144 = vadd.f32 0.0, %v3143
    %3145 = vmatmul.f32.gmra.mxu0 %v3106
    %v3146 = vpop.f32.mrf.mxu0
    %v3147 = vadd.f32 0.0, %v3146
    %3148 = vdwg.mxu0
    %v3149 = vadd.f32 %v2964, %v3126
    %v3150 = vadd.f32 %v2965, %v3129
    %v3151 = vadd.f32 %v2966, %v3132
    %v3152 = vadd.f32 %v2967, %v3135
    %v3153 = vadd.f32 %v2968, %v3138
    %v3154 = vadd.f32 %v2969, %v3141
    %v3155 = vadd.f32 %v2970, %v3144
    %v3156 = vadd.f32 %v2971, %v3147
    %s3157 = scalar_lea.vmem %s3, 960
    %v3158 = vld [vmem:[%s3157] sm:$0xff]
    %v3159 = vld [vmem:[%s3157 + $0x8] sm:$0xff]
    %v3160 = vld [vmem:[%s3157 + $0x10] sm:$0xff]
    %v3161 = vld [vmem:[%s3157 + $0x18] sm:$0xff]
    %v3162 = vld [vmem:[%s3157 + $0x20] sm:$0xff]
    %v3163 = vld [vmem:[%s3157 + $0x28] sm:$0xff]
    %v3164 = vld [vmem:[%s3157 + $0x30] sm:$0xff]
    %v3165 = vld [vmem:[%s3157 + $0x38] sm:$0xff]
    %v3166 = vunpack.c.l.bf16 %v3158
    %v3167 = vunpack.c.h.bf16 %v3158
    %v3168 = vunpack.c.l.bf16 %v3159
    %v3169 = vunpack.c.h.bf16 %v3159
    %v3170 = vunpack.c.l.bf16 %v3160
    %v3171 = vunpack.c.h.bf16 %v3160
    %v3172 = vunpack.c.l.bf16 %v3161
    %v3173 = vunpack.c.h.bf16 %v3161
    %v3174 = vunpack.c.l.bf16 %v3162
    %v3175 = vunpack.c.h.bf16 %v3162
    %v3176 = vunpack.c.l.bf16 %v3163
    %v3177 = vunpack.c.h.bf16 %v3163
    %v3178 = vunpack.c.l.bf16 %v3164
    %v3179 = vunpack.c.h.bf16 %v3164
    %v3180 = vunpack.c.l.bf16 %v3165
    %v3181 = vunpack.c.h.bf16 %v3165
    %3182 = vmatpush.msra.mxu0 %v383
    %3183 = vmatpush.msra.mxu0 %v382
    %3184 = vmatpush.msra.mxu0 %v381
    %3185 = vmatpush.msra.mxu0 %v380
    %3186 = vmatpush.msra.mxu0 %v379
    %3187 = vmatpush.msra.mxu0 %v378
    %3188 = vmatpush.msra.mxu0 %v377
    %3189 = vmatpush.msra.mxu0 %v376
    %3190 = vmatpush.msra.mxu0 %v375
    %3191 = vmatpush.msra.mxu0 %v374
    %3192 = vmatpush.msra.mxu0 %v373
    %3193 = vmatpush.msra.mxu0 %v372
    %3194 = vmatpush.msra.mxu0 %v371
    %3195 = vmatpush.msra.mxu0 %v370
    %3196 = vmatpush.msra.mxu0 %v369
    %3197 = vmatpush.msra.mxu0 %v368
    %3198 = vmatmul.f32.gmra.mxu0 %v3166
    %v3199 = vpop.f32.mrf.mxu0
    %v3200 = vadd.f32 0.0, %v3199
    %3201 = vmatmul.f32.gmra.mxu0 %v3168
    %v3202 = vpop.f32.mrf.mxu0
    %v3203 = vadd.f32 0.0, %v3202
    %3204 = vmatmul.f32.gmra.mxu0 %v3170
    %v3205 = vpop.f32.mrf.mxu0
    %v3206 = vadd.f32 0.0, %v3205
    %3207 = vmatmul.f32.gmra.mxu0 %v3172
    %v3208 = vpop.f32.mrf.mxu0
    %v3209 = vadd.f32 0.0, %v3208
    %3210 = vmatmul.f32.gmra.mxu0 %v3174
    %v3211 = vpop.f32.mrf.mxu0
    %v3212 = vadd.f32 0.0, %v3211
    %3213 = vmatmul.f32.gmra.mxu0 %v3176
    %v3214 = vpop.f32.mrf.mxu0
    %v3215 = vadd.f32 0.0, %v3214
    %3216 = vmatmul.f32.gmra.mxu0 %v3178
    %v3217 = vpop.f32.mrf.mxu0
    %v3218 = vadd.f32 0.0, %v3217
    %3219 = vmatmul.f32.gmra.mxu0 %v3180
    %v3220 = vpop.f32.mrf.mxu0
    %v3221 = vadd.f32 0.0, %v3220
    %3222 = vdwg.mxu0
    %3223 = vmatpush.msra.mxu0 %v399
    %3224 = vmatpush.msra.mxu0 %v398
    %3225 = vmatpush.msra.mxu0 %v397
    %3226 = vmatpush.msra.mxu0 %v396
    %3227 = vmatpush.msra.mxu0 %v395
    %3228 = vmatpush.msra.mxu0 %v394
    %3229 = vmatpush.msra.mxu0 %v393
    %3230 = vmatpush.msra.mxu0 %v392
    %3231 = vmatpush.msra.mxu0 %v391
    %3232 = vmatpush.msra.mxu0 %v390
    %3233 = vmatpush.msra.mxu0 %v389
    %3234 = vmatpush.msra.mxu0 %v388
    %3235 = vmatpush.msra.mxu0 %v387
    %3236 = vmatpush.msra.mxu0 %v386
    %3237 = vmatpush.msra.mxu0 %v385
    %3238 = vmatpush.msra.mxu0 %v384
    %3239 = vmatmul.f32.gmra.mxu0 %v3167
    %v3240 = vpop.f32.mrf.mxu0
    %v3241 = vadd.f32 %v3200, %v3240
    %3242 = vmatmul.f32.gmra.mxu0 %v3169
    %v3243 = vpop.f32.mrf.mxu0
    %v3244 = vadd.f32 %v3203, %v3243
    %3245 = vmatmul.f32.gmra.mxu0 %v3171
    %v3246 = vpop.f32.mrf.mxu0
    %v3247 = vadd.f32 %v3206, %v3246
    %3248 = vmatmul.f32.gmra.mxu0 %v3173
    %v3249 = vpop.f32.mrf.mxu0
    %v3250 = vadd.f32 %v3209, %v3249
    %3251 = vmatmul.f32.gmra.mxu0 %v3175
    %v3252 = vpop.f32.mrf.mxu0
    %v3253 = vadd.f32 %v3212, %v3252
    %3254 = vmatmul.f32.gmra.mxu0 %v3177
    %v3255 = vpop.f32.mrf.mxu0
    %v3256 = vadd.f32 %v3215, %v3255
    %3257 = vmatmul.f32.gmra.mxu0 %v3179
    %v3258 = vpop.f32.mrf.mxu0
    %v3259 = vadd.f32 %v3218, %v3258
    %3260 = vmatmul.f32.gmra.mxu0 %v3181
    %v3261 = vpop.f32.mrf.mxu0
    %v3262 = vadd.f32 %v3221, %v3261
    %3263 = vdwg.mxu0
    %s3264 = scalar_lea.vmem %s4, 480
    %v3265 = vld [vmem:[%s3264] sm:$0xff]
    %v3266 = vld [vmem:[%s3264 + $0x8] sm:$0xff]
    %v3267 = vld [vmem:[%s3264 + $0x10] sm:$0xff]
    %v3268 = vld [vmem:[%s3264 + $0x18] sm:$0xff]
    %v3270 = vsel %vm94, %v3241, 0
    %v3273 = vsel %vm94, %v3244, 0
    %v3276 = vsel %vm94, %v3247, 0
    %v3279 = vsel %vm94, %v3250, 0
    %v3282 = vsel %vm94, %v3253, 0
    %v3285 = vsel %vm94, %v3256, 0
    %v3288 = vsel %vm94, %v3259, 0
    %v3291 = vsel %vm94, %v3262, 0
    %3293 = vmatpush.msra.mxu0 0.0
    %3294 = vmatpush.msra.mxu0 0.0
    %3295 = vmatpush.msra.mxu0 0.0
    %3296 = vmatpush.msra.mxu0 0.0
    %3297 = vmatpush.msra.mxu0 0.0
    %3298 = vmatpush.msra.mxu0 0.0
    %3299 = vmatpush.msra.mxu0 0.0
    %3300 = vmatpush.msra.mxu0 0.0
    %3301 = vmatpush.msra.mxu0 0.0
    %3302 = vmatpush.msra.mxu0 0.0
    %3303 = vmatpush.msra.mxu0 0.0
    %3304 = vmatpush.msra.mxu0 0.0
    %3305 = vmatpush.msra.mxu0 %v3268
    %3306 = vmatpush.msra.mxu0 %v3267
    %3307 = vmatpush.msra.mxu0 %v3266
    %3308 = vmatpush.msra.mxu0 %v3265
    %3309 = vmatmul.f32.gmra.mxu0 %v3270
    %v3310 = vpop.f32.mrf.mxu0
    %v3311 = vadd.f32 0.0, %v3310
    %3312 = vmatmul.f32.gmra.mxu0 %v3273
    %v3313 = vpop.f32.mrf.mxu0
    %v3314 = vadd.f32 0.0, %v3313
    %3315 = vmatmul.f32.gmra.mxu0 %v3276
    %v3316 = vpop.f32.mrf.mxu0
    %v3317 = vadd.f32 0.0, %v3316
    %3318 = vmatmul.f32.gmra.mxu0 %v3279
    %v3319 = vpop.f32.mrf.mxu0
    %v3320 = vadd.f32 0.0, %v3319
    %3321 = vmatmul.f32.gmra.mxu0 %v3282
    %v3322 = vpop.f32.mrf.mxu0
    %v3323 = vadd.f32 0.0, %v3322
    %3324 = vmatmul.f32.gmra.mxu0 %v3285
    %v3325 = vpop.f32.mrf.mxu0
    %v3326 = vadd.f32 0.0, %v3325
    %3327 = vmatmul.f32.gmra.mxu0 %v3288
    %v3328 = vpop.f32.mrf.mxu0
    %v3329 = vadd.f32 0.0, %v3328
    %3330 = vmatmul.f32.gmra.mxu0 %v3291
    %v3331 = vpop.f32.mrf.mxu0
    %v3332 = vadd.f32 0.0, %v3331
    %3333 = vdwg.mxu0
    %v3334 = vadd.f32 %v3149, %v3311
    %v3335 = vadd.f32 %v3150, %v3314
    %v3336 = vadd.f32 %v3151, %v3317
    %v3337 = vadd.f32 %v3152, %v3320
    %v3338 = vadd.f32 %v3153, %v3323
    %v3339 = vadd.f32 %v3154, %v3326
    %v3340 = vadd.f32 %v3155, %v3329
    %v3341 = vadd.f32 %v3156, %v3332
    %v3342 = vld [vmem:[%s5] sm:$0xff]
    %v3343 = vld [vmem:[%s5 + $0x8] sm:$0xff]
    %v3344 = vld [vmem:[%s5 + $0x10] sm:$0xff]
    %v3345 = vld [vmem:[%s5 + $0x18] sm:$0xff]
    %v3346 = vld [vmem:[%s5 + $0x20] sm:$0xff]
    %v3347 = vld [vmem:[%s5 + $0x28] sm:$0xff]
    %v3348 = vld [vmem:[%s5 + $0x30] sm:$0xff]
    %v3349 = vld [vmem:[%s5 + $0x38] sm:$0xff]
    %vm3350 = vcmask 523264
    %v3352 = vsel %vm3350, %v3334, 0
    %v3355 = vsel %vm3350, %v3335, 0
    %v3358 = vsel %vm3350, %v3336, 0
    %v3361 = vsel %vm3350, %v3337, 0
    %v3364 = vsel %vm3350, %v3338, 0
    %v3367 = vsel %vm3350, %v3339, 0
    %v3370 = vsel %vm3350, %v3340, 0
    %v3373 = vsel %vm3350, %v3341, 0
    %3375 = vmatpush.msra.mxu0 0.0
    %3376 = vmatpush.msra.mxu0 0.0
    %3377 = vmatpush.msra.mxu0 0.0
    %3378 = vmatpush.msra.mxu0 0.0
    %3379 = vmatpush.msra.mxu0 0.0
    %3380 = vmatpush.msra.mxu0 0.0
    %3381 = vmatpush.msra.mxu0 0.0
    %3382 = vmatpush.msra.mxu0 0.0
    %3383 = vmatpush.msra.mxu0 %v3349
    %3384 = vmatpush.msra.mxu0 %v3348
    %3385 = vmatpush.msra.mxu0 %v3347
    %3386 = vmatpush.msra.mxu0 %v3346
    %3387 = vmatpush.msra.mxu0 %v3345
    %3388 = vmatpush.msra.mxu0 %v3344
    %3389 = vmatpush.msra.mxu0 %v3343
    %3390 = vmatpush.msra.mxu0 %v3342
    %3391 = vmatmul.f32.gmra.mxu0 %v3352
    %v3392 = vpop.f32.mrf.mxu0
    %v3393 = vadd.f32 0.0, %v3392
    %3394 = vmatmul.f32.gmra.mxu0 %v3355
    %v3395 = vpop.f32.mrf.mxu0
    %v3396 = vadd.f32 0.0, %v3395
    %3397 = vmatmul.f32.gmra.mxu0 %v3358
    %v3398 = vpop.f32.mrf.mxu0
    %v3399 = vadd.f32 0.0, %v3398
    %3400 = vmatmul.f32.gmra.mxu0 %v3361
    %v3401 = vpop.f32.mrf.mxu0
    %v3402 = vadd.f32 0.0, %v3401
    %3403 = vmatmul.f32.gmra.mxu0 %v3364
    %v3404 = vpop.f32.mrf.mxu0
    %v3405 = vadd.f32 0.0, %v3404
    %3406 = vmatmul.f32.gmra.mxu0 %v3367
    %v3407 = vpop.f32.mrf.mxu0
    %v3408 = vadd.f32 0.0, %v3407
    %3409 = vmatmul.f32.gmra.mxu0 %v3370
    %v3410 = vpop.f32.mrf.mxu0
    %v3411 = vadd.f32 0.0, %v3410
    %3412 = vmatmul.f32.gmra.mxu0 %v3373
    %v3413 = vpop.f32.mrf.mxu0
    %v3414 = vadd.f32 0.0, %v3413
    %3415 = vdwg.mxu0
    %v3416 = vsel %vm3350, %v3393, 0.0
    %v3417 = vsel %vm3350, %v3396, 0.0
    %v3418 = vadd.f32 %v3416, %v3417
    %v3419 = vsel %vm3350, %v3399, 0.0
    %v3420 = vadd.f32 %v3418, %v3419
    %v3421 = vsel %vm3350, %v3402, 0.0
    %v3422 = vadd.f32 %v3420, %v3421
    %v3423 = vsel %vm3350, %v3405, 0.0
    %v3424 = vadd.f32 %v3422, %v3423
    %v3425 = vsel %vm3350, %v3408, 0.0
    %v3426 = vadd.f32 %v3424, %v3425
    %v3427 = vsel %vm3350, %v3411, 0.0
    %v3428 = vadd.f32 %v3426, %v3427
    %v3429 = vsel %vm3350, %v3414, 0.0
    %v3430 = vadd.f32 %v3428, %v3429
    %v3431 = vrot.slane %v3430, 4
    %v3432 = vadd.f32 %v3430, %v3431
    %v3433 = vrot.slane %v3432, 2
    %v3434 = vadd.f32 %v3432, %v3433
    %v3435 = vrot.slane %v3434, 1
    %v3436 = vadd.f32 %v3434, %v3435
    %v3437 = vrcp.pop 64.0
    %v3438 = vmul.f32 64.0, %v3437
    %v3439 = vsub.f32 1.0, %v3438
    %v3440 = vmul.f32 %v3437, %v3439
    %v3441 = vadd.f32 %v3437, %v3440
    %vm3442 = vweird.f32 %v3437
    %v3443 = vsel %vm3442, %v3437, %v3441
    %v3444 = vmul.f32 %v3436, %v3443
    %v3445 = vmul.f32 %v3334, %v3334
    %v3446 = vmul.f32 %v3335, %v3335
    %v3447 = vmul.f32 %v3336, %v3336
    %v3448 = vmul.f32 %v3337, %v3337
    %v3449 = vmul.f32 %v3338, %v3338
    %v3450 = vmul.f32 %v3339, %v3339
    %v3451 = vmul.f32 %v3340, %v3340
    %v3452 = vmul.f32 %v3341, %v3341
    %v3454 = vsel %vm3350, %v3445, 0
    %v3457 = vsel %vm3350, %v3446, 0
    %v3460 = vsel %vm3350, %v3447, 0
    %v3463 = vsel %vm3350, %v3448, 0
    %v3466 = vsel %vm3350, %v3449, 0
    %v3469 = vsel %vm3350, %v3450, 0
    %v3472 = vsel %vm3350, %v3451, 0
    %v3475 = vsel %vm3350, %v3452, 0
    %3477 = vmatpush.msra.mxu0 0.0
    %3478 = vmatpush.msra.mxu0 0.0
    %3479 = vmatpush.msra.mxu0 0.0
    %3480 = vmatpush.msra.mxu0 0.0
    %3481 = vmatpush.msra.mxu0 0.0
    %3482 = vmatpush.msra.mxu0 0.0
    %3483 = vmatpush.msra.mxu0 0.0
    %3484 = vmatpush.msra.mxu0 0.0
    %3485 = vmatpush.msra.mxu0 %v3349
    %3486 = vmatpush.msra.mxu0 %v3348
    %3487 = vmatpush.msra.mxu0 %v3347
    %3488 = vmatpush.msra.mxu0 %v3346
    %3489 = vmatpush.msra.mxu0 %v3345
    %3490 = vmatpush.msra.mxu0 %v3344
    %3491 = vmatpush.msra.mxu0 %v3343
    %3492 = vmatpush.msra.mxu0 %v3342
    %3493 = vmatmul.f32.gmra.mxu0 %v3454
    %v3494 = vpop.f32.mrf.mxu0
    %v3495 = vadd.f32 0.0, %v3494
    %3496 = vmatmul.f32.gmra.mxu0 %v3457
    %v3497 = vpop.f32.mrf.mxu0
    %v3498 = vadd.f32 0.0, %v3497
    %3499 = vmatmul.f32.gmra.mxu0 %v3460
    %v3500 = vpop.f32.mrf.mxu0
    %v3501 = vadd.f32 0.0, %v3500
    %3502 = vmatmul.f32.gmra.mxu0 %v3463
    %v3503 = vpop.f32.mrf.mxu0
    %v3504 = vadd.f32 0.0, %v3503
    %3505 = vmatmul.f32.gmra.mxu0 %v3466
    %v3506 = vpop.f32.mrf.mxu0
    %v3507 = vadd.f32 0.0, %v3506
    %3508 = vmatmul.f32.gmra.mxu0 %v3469
    %v3509 = vpop.f32.mrf.mxu0
    %v3510 = vadd.f32 0.0, %v3509
    %3511 = vmatmul.f32.gmra.mxu0 %v3472
    %v3512 = vpop.f32.mrf.mxu0
    %v3513 = vadd.f32 0.0, %v3512
    %3514 = vmatmul.f32.gmra.mxu0 %v3475
    %v3515 = vpop.f32.mrf.mxu0
    %v3516 = vadd.f32 0.0, %v3515
    %3517 = vdwg.mxu0
    %v3518 = vsel %vm3350, %v3495, 0.0
    %v3519 = vsel %vm3350, %v3498, 0.0
    %v3520 = vadd.f32 %v3518, %v3519
    %v3521 = vsel %vm3350, %v3501, 0.0
    %v3522 = vadd.f32 %v3520, %v3521
    %v3523 = vsel %vm3350, %v3504, 0.0
    %v3524 = vadd.f32 %v3522, %v3523
    %v3525 = vsel %vm3350, %v3507, 0.0
    %v3526 = vadd.f32 %v3524, %v3525
    %v3527 = vsel %vm3350, %v3510, 0.0
    %v3528 = vadd.f32 %v3526, %v3527
    %v3529 = vsel %vm3350, %v3513, 0.0
    %v3530 = vadd.f32 %v3528, %v3529
    %v3531 = vsel %vm3350, %v3516, 0.0
    %v3532 = vadd.f32 %v3530, %v3531
    %v3533 = vrot.slane %v3532, 4
    %v3534 = vadd.f32 %v3532, %v3533
    %v3535 = vrot.slane %v3534, 2
    %v3536 = vadd.f32 %v3534, %v3535
    %v3537 = vrot.slane %v3536, 1
    %v3538 = vadd.f32 %v3536, %v3537
    %v3539 = vmul.f32 %v3538, %v3443
    %v3540 = vmul.f32 %v3444, %v3444
    %v3541 = vsub.f32 %v3539, %v3540
    %v3542 = vsub.f32 %v3334, %v3444
    %v3543 = vsub.f32 %v3335, %v3444
    %v3544 = vsub.f32 %v3336, %v3444
    %v3545 = vsub.f32 %v3337, %v3444
    %v3546 = vsub.f32 %v3338, %v3444
    %v3547 = vsub.f32 %v3339, %v3444
    %v3548 = vsub.f32 %v3340, %v3444
    %v3549 = vsub.f32 %v3341, %v3444
    %v3550 = vadd.f32 %v3541, 1e-05
    %v3551 = vrsqrt.pop %v3550
    %v3552 = vmul.f32 %v3551, %v3550
    %v3553 = vmul.f32 %v3552, %v3551
    %v3554 = vmul.f32 0.5, %v3553
    %v3555 = vsub.f32 1.5, %v3554
    %v3556 = vmul.f32 %v3551, %v3555
    %vm3557 = vweird.f32 %v3550
    %vm3558 = vweird.f32 %v3551
    %vm3559 = vmor %vm3557, %vm3558
    %v3560 = vsel %vm3559, %v3551, %v3556
    %v3561 = vmul.f32 %v3542, %v3560
    %v3562 = vmul.f32 %v3543, %v3560
    %v3563 = vmul.f32 %v3544, %v3560
    %v3564 = vmul.f32 %v3545, %v3560
    %v3565 = vmul.f32 %v3546, %v3560
    %v3566 = vmul.f32 %v3547, %v3560
    %v3567 = vmul.f32 %v3548, %v3560
    %v3568 = vmul.f32 %v3549, %v3560
    %v3569 = vld [vmem:[%s6] sm:$0x1]
    %v3571 = vperm.slane %v3569, 0
    %v3573 = vmul.f32 %v3561, %v3571
    %v3574 = vmul.f32 %v3562, %v3571
    %v3575 = vmul.f32 %v3563, %v3571
    %v3576 = vmul.f32 %v3564, %v3571
    %v3577 = vmul.f32 %v3565, %v3571
    %v3578 = vmul.f32 %v3566, %v3571
    %v3579 = vmul.f32 %v3567, %v3571
    %v3580 = vmul.f32 %v3568, %v3571
    %v3581 = vld [vmem:[%s7] sm:$0x1]
    %v3583 = vperm.slane %v3581, 0
    %v3585 = vadd.f32 %v3573, %v3583
    %v3586 = vadd.f32 %v3574, %v3583
    %v3587 = vadd.f32 %v3575, %v3583
    %v3588 = vadd.f32 %v3576, %v3583
    %v3589 = vadd.f32 %v3577, %v3583
    %v3590 = vadd.f32 %v3578, %v3583
    %v3591 = vadd.f32 %v3579, %v3583
    %v3592 = vadd.f32 %v3580, %v3583
    %vm3593 = vcmp.gt.f32.partialorder %v3585, 0.0
    %vm3594 = vcmp.gt.f32.partialorder %v3586, 0.0
    %vm3595 = vcmp.gt.f32.partialorder %v3587, 0.0
    %vm3596 = vcmp.gt.f32.partialorder %v3588, 0.0
    %vm3597 = vcmp.gt.f32.partialorder %v3589, 0.0
    %vm3598 = vcmp.gt.f32.partialorder %v3590, 0.0
    %vm3599 = vcmp.gt.f32.partialorder %v3591, 0.0
    %vm3600 = vcmp.gt.f32.partialorder %v3592, 0.0
    %v3601 = vmul.f32 %v3585, 0.2
    %v3602 = vmul.f32 %v3586, 0.2
    %v3603 = vmul.f32 %v3587, 0.2
    %v3604 = vmul.f32 %v3588, 0.2
    %v3605 = vmul.f32 %v3589, 0.2
    %v3606 = vmul.f32 %v3590, 0.2
    %v3607 = vmul.f32 %v3591, 0.2
    %v3608 = vmul.f32 %v3592, 0.2
    %v3609 = vsel %vm3593, %v3585, %v3601
    %v3610 = vsel %vm3594, %v3586, %v3602
    %v3611 = vsel %vm3595, %v3587, %v3603
    %v3612 = vsel %vm3596, %v3588, %v3604
    %v3613 = vsel %vm3597, %v3589, %v3605
    %v3614 = vsel %vm3598, %v3590, %v3606
    %v3615 = vsel %vm3599, %v3591, %v3607
    %v3616 = vsel %vm3600, %v3592, %v3608
    %v3617 = vld [vmem:[%s8] sm:$0xf]
    %v3618 = vld [vmem:[%s8 + $0x4] sm:$0xf]
    %v3619 = vunpack.c.l.bf16 %v3617
    %v3620 = vunpack.c.l.bf16 %v3618
    %v3622 = vsel %vm3350, %v3619, 0
    %v3625 = vsel %vm3350, %v3620, 0
    %3627 = vmatpush.msra.mxu0 0.0
    %3628 = vmatpush.msra.mxu0 0.0
    %3629 = vmatpush.msra.mxu0 0.0
    %3630 = vmatpush.msra.mxu0 0.0
    %3631 = vmatpush.msra.mxu0 0.0
    %3632 = vmatpush.msra.mxu0 0.0
    %3633 = vmatpush.msra.mxu0 0.0
    %3634 = vmatpush.msra.mxu0 0.0
    %3635 = vmatpush.msra.mxu0 %v3616
    %3636 = vmatpush.msra.mxu0 %v3615
    %3637 = vmatpush.msra.mxu0 %v3614
    %3638 = vmatpush.msra.mxu0 %v3613
    %3639 = vmatpush.msra.mxu0 %v3612
    %3640 = vmatpush.msra.mxu0 %v3611
    %3641 = vmatpush.msra.mxu0 %v3610
    %3642 = vmatpush.msra.mxu0 %v3609
    %3643 = vmatmul.f32.gmra.mxu0 %v3622
    %v3644 = vpop.f32.mrf.mxu0
    %v3645 = vadd.f32 0.0, %v3644
    %3646 = vmatmul.f32.gmra.mxu0 %v3625
    %v3647 = vpop.f32.mrf.mxu0
    %v3648 = vadd.f32 0.0, %v3647
    %3649 = vdwg.mxu0
    %v3650 = vld [vmem:[%s9] sm:$0xff]
    %v3651 = vld [vmem:[%s9 + $0x8] sm:$0xff]
    %v3652 = vld [vmem:[%s9 + $0x10] sm:$0xff]
    %v3653 = vld [vmem:[%s9 + $0x18] sm:$0xff]
    %v3654 = vld [vmem:[%s9 + $0x20] sm:$0xff]
    %v3655 = vld [vmem:[%s9 + $0x28] sm:$0xff]
    %v3656 = vld [vmem:[%s9 + $0x30] sm:$0xff]
    %v3657 = vld [vmem:[%s9 + $0x38] sm:$0xff]
    %s3658 = scalar_lea.vmem %s8, 8
    %v3659 = vld [vmem:[%s3658] sm:$0xf]
    %v3660 = vld [vmem:[%s3658 + $0x4] sm:$0xf]
    %v3661 = vunpack.c.l.bf16 %v3659
    %v3662 = vunpack.c.l.bf16 %v3660
    %v3664 = vsel %vm3350, %v3661, 0
    %v3667 = vsel %vm3350, %v3662, 0
    %3669 = vmatpush.msra.mxu0 0.0
    %3670 = vmatpush.msra.mxu0 0.0
    %3671 = vmatpush.msra.mxu0 0.0
    %3672 = vmatpush.msra.mxu0 0.0
    %3673 = vmatpush.msra.mxu0 0.0
    %3674 = vmatpush.msra.mxu0 0.0
    %3675 = vmatpush.msra.mxu0 0.0
    %3676 = vmatpush.msra.mxu0 0.0
    %3677 = vmatpush.msra.mxu0 %v3616
    %3678 = vmatpush.msra.mxu0 %v3615
    %3679 = vmatpush.msra.mxu0 %v3614
    %3680 = vmatpush.msra.mxu0 %v3613
    %3681 = vmatpush.msra.mxu0 %v3612
    %3682 = vmatpush.msra.mxu0 %v3611
    %3683 = vmatpush.msra.mxu0 %v3610
    %3684 = vmatpush.msra.mxu0 %v3609
    %3685 = vmatmul.f32.gmra.mxu0 %v3664
    %v3686 = vpop.f32.mrf.mxu0
    %v3687 = vadd.f32 0.0, %v3686
    %3688 = vmatmul.f32.gmra.mxu0 %v3667
    %v3689 = vpop.f32.mrf.mxu0
    %v3690 = vadd.f32 0.0, %v3689
    %3691 = vdwg.mxu0
    %s3692 = scalar_lea.vmem %s9, 64
    %v3693 = vld [vmem:[%s3692] sm:$0xff]
    %v3694 = vld [vmem:[%s3692 + $0x8] sm:$0xff]
    %v3695 = vld [vmem:[%s3692 + $0x10] sm:$0xff]
    %v3696 = vld [vmem:[%s3692 + $0x18] sm:$0xff]
    %v3697 = vld [vmem:[%s3692 + $0x20] sm:$0xff]
    %v3698 = vld [vmem:[%s3692 + $0x28] sm:$0xff]
    %v3699 = vld [vmem:[%s3692 + $0x30] sm:$0xff]
    %v3700 = vld [vmem:[%s3692 + $0x38] sm:$0xff]
    %v3702 = vsel %vm3350, %v3687, 0
    %v3705 = vsel %vm3350, %v3690, 0
    %3707 = vmatpush.msra.mxu0 0.0
    %3708 = vmatpush.msra.mxu0 0.0
    %3709 = vmatpush.msra.mxu0 0.0
    %3710 = vmatpush.msra.mxu0 0.0
    %3711 = vmatpush.msra.mxu0 0.0
    %3712 = vmatpush.msra.mxu0 0.0
    %3713 = vmatpush.msra.mxu0 0.0
    %3714 = vmatpush.msra.mxu0 0.0
    %3715 = vmatpush.msra.mxu0 %v3700
    %3716 = vmatpush.msra.mxu0 %v3699
    %3717 = vmatpush.msra.mxu0 %v3698
    %3718 = vmatpush.msra.mxu0 %v3697
    %3719 = vmatpush.msra.mxu0 %v3696
    %3720 = vmatpush.msra.mxu0 %v3695
    %3721 = vmatpush.msra.mxu0 %v3694
    %3722 = vmatpush.msra.mxu0 %v3693
    %3723 = vmatmul.f32.gmra.mxu0 %v3702
    %v3724 = vpop.f32.mrf.mxu0
    %v3725 = vadd.f32 0.0, %v3724
    %3726 = vmatmul.f32.gmra.mxu0 %v3705
    %v3727 = vpop.f32.mrf.mxu0
    %v3728 = vadd.f32 0.0, %v3727
    %3729 = vdwg.mxu0
    %v3731 = vsel %vm3350, %v3645, 0
    %v3734 = vsel %vm3350, %v3648, 0
    %3736 = vmatpush.msra.mxu0 0.0
    %3737 = vmatpush.msra.mxu0 0.0
    %3738 = vmatpush.msra.mxu0 0.0
    %3739 = vmatpush.msra.mxu0 0.0
    %3740 = vmatpush.msra.mxu0 0.0
    %3741 = vmatpush.msra.mxu0 0.0
    %3742 = vmatpush.msra.mxu0 0.0
    %3743 = vmatpush.msra.mxu0 0.0
    %3744 = vmatpush.msra.mxu0 %v3657
    %3745 = vmatpush.msra.mxu0 %v3656
    %3746 = vmatpush.msra.mxu0 %v3655
    %3747 = vmatpush.msra.mxu0 %v3654
    %3748 = vmatpush.msra.mxu0 %v3653
    %3749 = vmatpush.msra.mxu0 %v3652
    %3750 = vmatpush.msra.mxu0 %v3651
    %3751 = vmatpush.msra.mxu0 %v3650
    %3752 = vmatmul.f32.gmra.mxu0 %v3731
    %v3753 = vpop.f32.mrf.mxu0
    %v3754 = vadd.f32 %v3725, %v3753
    %3755 = vmatmul.f32.gmra.mxu0 %v3734
    %v3756 = vpop.f32.mrf.mxu0
    %v3757 = vadd.f32 %v3728, %v3756
    %3758 = vdwg.mxu0
    %s3759 = scalar_lea.vmem %s8, 16
    %v3760 = vld [vmem:[%s3759] sm:$0xf]
    %v3761 = vld [vmem:[%s3759 + $0x4] sm:$0xf]
    %v3762 = vunpack.c.l.bf16 %v3760
    %v3763 = vunpack.c.l.bf16 %v3761
    %v3765 = vsel %vm3350, %v3762, 0
    %v3768 = vsel %vm3350, %v3763, 0
    %3770 = vmatpush.msra.mxu0 0.0
    %3771 = vmatpush.msra.mxu0 0.0
    %3772 = vmatpush.msra.mxu0 0.0
    %3773 = vmatpush.msra.mxu0 0.0
    %3774 = vmatpush.msra.mxu0 0.0
    %3775 = vmatpush.msra.mxu0 0.0
    %3776 = vmatpush.msra.mxu0 0.0
    %3777 = vmatpush.msra.mxu0 0.0
    %3778 = vmatpush.msra.mxu0 %v3616
    %3779 = vmatpush.msra.mxu0 %v3615
    %3780 = vmatpush.msra.mxu0 %v3614
    %3781 = vmatpush.msra.mxu0 %v3613
    %3782 = vmatpush.msra.mxu0 %v3612
    %3783 = vmatpush.msra.mxu0 %v3611
    %3784 = vmatpush.msra.mxu0 %v3610
    %3785 = vmatpush.msra.mxu0 %v3609
    %3786 = vmatmul.f32.gmra.mxu0 %v3765
    %v3787 = vpop.f32.mrf.mxu0
    %v3788 = vadd.f32 0.0, %v3787
    %3789 = vmatmul.f32.gmra.mxu0 %v3768
    %v3790 = vpop.f32.mrf.mxu0
    %v3791 = vadd.f32 0.0, %v3790
    %3792 = vdwg.mxu0
    %s3793 = scalar_lea.vmem %s9, 128
    %v3794 = vld [vmem:[%s3793] sm:$0xff]
    %v3795 = vld [vmem:[%s3793 + $0x8] sm:$0xff]
    %v3796 = vld [vmem:[%s3793 + $0x10] sm:$0xff]
    %v3797 = vld [vmem:[%s3793 + $0x18] sm:$0xff]
    %v3798 = vld [vmem:[%s3793 + $0x20] sm:$0xff]
    %v3799 = vld [vmem:[%s3793 + $0x28] sm:$0xff]
    %v3800 = vld [vmem:[%s3793 + $0x30] sm:$0xff]
    %v3801 = vld [vmem:[%s3793 + $0x38] sm:$0xff]
    %v3803 = vsel %vm3350, %v3788, 0
    %v3806 = vsel %vm3350, %v3791, 0
    %3808 = vmatpush.msra.mxu0 0.0
    %3809 = vmatpush.msra.mxu0 0.0
    %3810 = vmatpush.msra.mxu0 0.0
    %3811 = vmatpush.msra.mxu0 0.0
    %3812 = vmatpush.msra.mxu0 0.0
    %3813 = vmatpush.msra.mxu0 0.0
    %3814 = vmatpush.msra.mxu0 0.0
    %3815 = vmatpush.msra.mxu0 0.0
    %3816 = vmatpush.msra.mxu0 %v3801
    %3817 = vmatpush.msra.mxu0 %v3800
    %3818 = vmatpush.msra.mxu0 %v3799
    %3819 = vmatpush.msra.mxu0 %v3798
    %3820 = vmatpush.msra.mxu0 %v3797
    %3821 = vmatpush.msra.mxu0 %v3796
    %3822 = vmatpush.msra.mxu0 %v3795
    %3823 = vmatpush.msra.mxu0 %v3794
    %3824 = vmatmul.f32.gmra.mxu0 %v3803
    %v3825 = vpop.f32.mrf.mxu0
    %v3826 = vadd.f32 0.0, %v3825
    %3827 = vmatmul.f32.gmra.mxu0 %v3806
    %v3828 = vpop.f32.mrf.mxu0
    %v3829 = vadd.f32 0.0, %v3828
    %3830 = vdwg.mxu0
    %v3831 = vadd.f32 %v3754, %v3826
    %v3832 = vadd.f32 %v3757, %v3829
    %s3833 = scalar_lea.vmem %s8, 24
    %v3834 = vld [vmem:[%s3833] sm:$0xf]
    %v3835 = vld [vmem:[%s3833 + $0x4] sm:$0xf]
    %v3836 = vunpack.c.l.bf16 %v3834
    %v3837 = vunpack.c.l.bf16 %v3835
    %v3839 = vsel %vm3350, %v3836, 0
    %v3842 = vsel %vm3350, %v3837, 0
    %3844 = vmatpush.msra.mxu0 0.0
    %3845 = vmatpush.msra.mxu0 0.0
    %3846 = vmatpush.msra.mxu0 0.0
    %3847 = vmatpush.msra.mxu0 0.0
    %3848 = vmatpush.msra.mxu0 0.0
    %3849 = vmatpush.msra.mxu0 0.0
    %3850 = vmatpush.msra.mxu0 0.0
    %3851 = vmatpush.msra.mxu0 0.0
    %3852 = vmatpush.msra.mxu0 %v3616
    %3853 = vmatpush.msra.mxu0 %v3615
    %3854 = vmatpush.msra.mxu0 %v3614
    %3855 = vmatpush.msra.mxu0 %v3613
    %3856 = vmatpush.msra.mxu0 %v3612
    %3857 = vmatpush.msra.mxu0 %v3611
    %3858 = vmatpush.msra.mxu0 %v3610
    %3859 = vmatpush.msra.mxu0 %v3609
    %3860 = vmatmul.f32.gmra.mxu0 %v3839
    %v3861 = vpop.f32.mrf.mxu0
    %v3862 = vadd.f32 0.0, %v3861
    %3863 = vmatmul.f32.gmra.mxu0 %v3842
    %v3864 = vpop.f32.mrf.mxu0
    %v3865 = vadd.f32 0.0, %v3864
    %3866 = vdwg.mxu0
    %s3867 = scalar_lea.vmem %s9, 192
    %v3868 = vld [vmem:[%s3867] sm:$0xff]
    %v3869 = vld [vmem:[%s3867 + $0x8] sm:$0xff]
    %v3870 = vld [vmem:[%s3867 + $0x10] sm:$0xff]
    %v3871 = vld [vmem:[%s3867 + $0x18] sm:$0xff]
    %v3872 = vld [vmem:[%s3867 + $0x20] sm:$0xff]
    %v3873 = vld [vmem:[%s3867 + $0x28] sm:$0xff]
    %v3874 = vld [vmem:[%s3867 + $0x30] sm:$0xff]
    %v3875 = vld [vmem:[%s3867 + $0x38] sm:$0xff]
    %v3877 = vsel %vm3350, %v3862, 0
    %v3880 = vsel %vm3350, %v3865, 0
    %3882 = vmatpush.msra.mxu0 0.0
    %3883 = vmatpush.msra.mxu0 0.0
    %3884 = vmatpush.msra.mxu0 0.0
    %3885 = vmatpush.msra.mxu0 0.0
    %3886 = vmatpush.msra.mxu0 0.0
    %3887 = vmatpush.msra.mxu0 0.0
    %3888 = vmatpush.msra.mxu0 0.0
    %3889 = vmatpush.msra.mxu0 0.0
    %3890 = vmatpush.msra.mxu0 %v3875
    %3891 = vmatpush.msra.mxu0 %v3874
    %3892 = vmatpush.msra.mxu0 %v3873
    %3893 = vmatpush.msra.mxu0 %v3872
    %3894 = vmatpush.msra.mxu0 %v3871
    %3895 = vmatpush.msra.mxu0 %v3870
    %3896 = vmatpush.msra.mxu0 %v3869
    %3897 = vmatpush.msra.mxu0 %v3868
    %3898 = vmatmul.f32.gmra.mxu0 %v3877
    %v3899 = vpop.f32.mrf.mxu0
    %v3900 = vadd.f32 0.0, %v3899
    %3901 = vmatmul.f32.gmra.mxu0 %v3880
    %v3902 = vpop.f32.mrf.mxu0
    %v3903 = vadd.f32 0.0, %v3902
    %3904 = vdwg.mxu0
    %v3905 = vadd.f32 %v3831, %v3900
    %v3906 = vadd.f32 %v3832, %v3903
    %s3907 = scalar_lea.vmem %s8, 32
    %v3908 = vld [vmem:[%s3907] sm:$0xf]
    %v3909 = vld [vmem:[%s3907 + $0x4] sm:$0xf]
    %v3910 = vunpack.c.l.bf16 %v3908
    %v3911 = vunpack.c.l.bf16 %v3909
    %v3913 = vsel %vm3350, %v3910, 0
    %v3916 = vsel %vm3350, %v3911, 0
    %3918 = vmatpush.msra.mxu0 0.0
    %3919 = vmatpush.msra.mxu0 0.0
    %3920 = vmatpush.msra.mxu0 0.0
    %3921 = vmatpush.msra.mxu0 0.0
    %3922 = vmatpush.msra.mxu0 0.0
    %3923 = vmatpush.msra.mxu0 0.0
    %3924 = vmatpush.msra.mxu0 0.0
    %3925 = vmatpush.msra.mxu0 0.0
    %3926 = vmatpush.msra.mxu0 %v3616
    %3927 = vmatpush.msra.mxu0 %v3615
    %3928 = vmatpush.msra.mxu0 %v3614
    %3929 = vmatpush.msra.mxu0 %v3613
    %3930 = vmatpush.msra.mxu0 %v3612
    %3931 = vmatpush.msra.mxu0 %v3611
    %3932 = vmatpush.msra.mxu0 %v3610
    %3933 = vmatpush.msra.mxu0 %v3609
    %3934 = vmatmul.f32.gmra.mxu0 %v3913
    %v3935 = vpop.f32.mrf.mxu0
    %v3936 = vadd.f32 0.0, %v3935
    %3937 = vmatmul.f32.gmra.mxu0 %v3916
    %v3938 = vpop.f32.mrf.mxu0
    %v3939 = vadd.f32 0.0, %v3938
    %3940 = vdwg.mxu0
    %s3941 = scalar_lea.vmem %s9, 256
    %v3942 = vld [vmem:[%s3941] sm:$0xff]
    %v3943 = vld [vmem:[%s3941 + $0x8] sm:$0xff]
    %v3944 = vld [vmem:[%s3941 + $0x10] sm:$0xff]
    %v3945 = vld [vmem:[%s3941 + $0x18] sm:$0xff]
    %v3946 = vld [vmem:[%s3941 + $0x20] sm:$0xff]
    %v3947 = vld [vmem:[%s3941 + $0x28] sm:$0xff]
    %v3948 = vld [vmem:[%s3941 + $0x30] sm:$0xff]
    %v3949 = vld [vmem:[%s3941 + $0x38] sm:$0xff]
    %v3951 = vsel %vm3350, %v3936, 0
    %v3954 = vsel %vm3350, %v3939, 0
    %3956 = vmatpush.msra.mxu0 0.0
    %3957 = vmatpush.msra.mxu0 0.0
    %3958 = vmatpush.msra.mxu0 0.0
    %3959 = vmatpush.msra.mxu0 0.0
    %3960 = vmatpush.msra.mxu0 0.0
    %3961 = vmatpush.msra.mxu0 0.0
    %3962 = vmatpush.msra.mxu0 0.0
    %3963 = vmatpush.msra.mxu0 0.0
    %3964 = vmatpush.msra.mxu0 %v3949
    %3965 = vmatpush.msra.mxu0 %v3948
    %3966 = vmatpush.msra.mxu0 %v3947
    %3967 = vmatpush.msra.mxu0 %v3946
    %3968 = vmatpush.msra.mxu0 %v3945
    %3969 = vmatpush.msra.mxu0 %v3944
    %3970 = vmatpush.msra.mxu0 %v3943
    %3971 = vmatpush.msra.mxu0 %v3942
    %3972 = vmatmul.f32.gmra.mxu0 %v3951
    %v3973 = vpop.f32.mrf.mxu0
    %v3974 = vadd.f32 0.0, %v3973
    %3975 = vmatmul.f32.gmra.mxu0 %v3954
    %v3976 = vpop.f32.mrf.mxu0
    %v3977 = vadd.f32 0.0, %v3976
    %3978 = vdwg.mxu0
    %v3979 = vadd.f32 %v3905, %v3974
    %v3980 = vadd.f32 %v3906, %v3977
    %s3981 = scalar_lea.vmem %s8, 40
    %v3982 = vld [vmem:[%s3981] sm:$0xf]
    %v3983 = vld [vmem:[%s3981 + $0x4] sm:$0xf]
    %v3984 = vunpack.c.l.bf16 %v3982
    %v3985 = vunpack.c.l.bf16 %v3983
    %v3987 = vsel %vm3350, %v3984, 0
    %v3990 = vsel %vm3350, %v3985, 0
    %3992 = vmatpush.msra.mxu0 0.0
    %3993 = vmatpush.msra.mxu0 0.0
    %3994 = vmatpush.msra.mxu0 0.0
    %3995 = vmatpush.msra.mxu0 0.0
    %3996 = vmatpush.msra.mxu0 0.0
    %3997 = vmatpush.msra.mxu0 0.0
    %3998 = vmatpush.msra.mxu0 0.0
    %3999 = vmatpush.msra.mxu0 0.0
    %4000 = vmatpush.msra.mxu0 %v3616
    %4001 = vmatpush.msra.mxu0 %v3615
    %4002 = vmatpush.msra.mxu0 %v3614
    %4003 = vmatpush.msra.mxu0 %v3613
    %4004 = vmatpush.msra.mxu0 %v3612
    %4005 = vmatpush.msra.mxu0 %v3611
    %4006 = vmatpush.msra.mxu0 %v3610
    %4007 = vmatpush.msra.mxu0 %v3609
    %4008 = vmatmul.f32.gmra.mxu0 %v3987
    %v4009 = vpop.f32.mrf.mxu0
    %v4010 = vadd.f32 0.0, %v4009
    %4011 = vmatmul.f32.gmra.mxu0 %v3990
    %v4012 = vpop.f32.mrf.mxu0
    %v4013 = vadd.f32 0.0, %v4012
    %4014 = vdwg.mxu0
    %s4015 = scalar_lea.vmem %s9, 320
    %v4016 = vld [vmem:[%s4015] sm:$0xff]
    %v4017 = vld [vmem:[%s4015 + $0x8] sm:$0xff]
    %v4018 = vld [vmem:[%s4015 + $0x10] sm:$0xff]
    %v4019 = vld [vmem:[%s4015 + $0x18] sm:$0xff]
    %v4020 = vld [vmem:[%s4015 + $0x20] sm:$0xff]
    %v4021 = vld [vmem:[%s4015 + $0x28] sm:$0xff]
    %v4022 = vld [vmem:[%s4015 + $0x30] sm:$0xff]
    %v4023 = vld [vmem:[%s4015 + $0x38] sm:$0xff]
    %v4025 = vsel %vm3350, %v4010, 0
    %v4028 = vsel %vm3350, %v4013, 0
    %4030 = vmatpush.msra.mxu0 0.0
    %4031 = vmatpush.msra.mxu0 0.0
    %4032 = vmatpush.msra.mxu0 0.0
    %4033 = vmatpush.msra.mxu0 0.0
    %4034 = vmatpush.msra.mxu0 0.0
    %4035 = vmatpush.msra.mxu0 0.0
    %4036 = vmatpush.msra.mxu0 0.0
    %4037 = vmatpush.msra.mxu0 0.0
    %4038 = vmatpush.msra.mxu0 %v4023
    %4039 = vmatpush.msra.mxu0 %v4022
    %4040 = vmatpush.msra.mxu0 %v4021
    %4041 = vmatpush.msra.mxu0 %v4020
    %4042 = vmatpush.msra.mxu0 %v4019
    %4043 = vmatpush.msra.mxu0 %v4018
    %4044 = vmatpush.msra.mxu0 %v4017
    %4045 = vmatpush.msra.mxu0 %v4016
    %4046 = vmatmul.f32.gmra.mxu0 %v4025
    %v4047 = vpop.f32.mrf.mxu0
    %v4048 = vadd.f32 0.0, %v4047
    %4049 = vmatmul.f32.gmra.mxu0 %v4028
    %v4050 = vpop.f32.mrf.mxu0
    %v4051 = vadd.f32 0.0, %v4050
    %4052 = vdwg.mxu0
    %v4053 = vadd.f32 %v3979, %v4048
    %v4054 = vadd.f32 %v3980, %v4051
    %s4055 = scalar_lea.vmem %s8, 48
    %v4056 = vld [vmem:[%s4055] sm:$0xf]
    %v4057 = vld [vmem:[%s4055 + $0x4] sm:$0xf]
    %v4058 = vunpack.c.l.bf16 %v4056
    %v4059 = vunpack.c.l.bf16 %v4057
    %v4061 = vsel %vm3350, %v4058, 0
    %v4064 = vsel %vm3350, %v4059, 0
    %4066 = vmatpush.msra.mxu0 0.0
    %4067 = vmatpush.msra.mxu0 0.0
    %4068 = vmatpush.msra.mxu0 0.0
    %4069 = vmatpush.msra.mxu0 0.0
    %4070 = vmatpush.msra.mxu0 0.0
    %4071 = vmatpush.msra.mxu0 0.0
    %4072 = vmatpush.msra.mxu0 0.0
    %4073 = vmatpush.msra.mxu0 0.0
    %4074 = vmatpush.msra.mxu0 %v3616
    %4075 = vmatpush.msra.mxu0 %v3615
    %4076 = vmatpush.msra.mxu0 %v3614
    %4077 = vmatpush.msra.mxu0 %v3613
    %4078 = vmatpush.msra.mxu0 %v3612
    %4079 = vmatpush.msra.mxu0 %v3611
    %4080 = vmatpush.msra.mxu0 %v3610
    %4081 = vmatpush.msra.mxu0 %v3609
    %4082 = vmatmul.f32.gmra.mxu0 %v4061
    %v4083 = vpop.f32.mrf.mxu0
    %v4084 = vadd.f32 0.0, %v4083
    %4085 = vmatmul.f32.gmra.mxu0 %v4064
    %v4086 = vpop.f32.mrf.mxu0
    %v4087 = vadd.f32 0.0, %v4086
    %4088 = vdwg.mxu0
    %s4089 = scalar_lea.vmem %s9, 384
    %v4090 = vld [vmem:[%s4089] sm:$0xff]
    %v4091 = vld [vmem:[%s4089 + $0x8] sm:$0xff]
    %v4092 = vld [vmem:[%s4089 + $0x10] sm:$0xff]
    %v4093 = vld [vmem:[%s4089 + $0x18] sm:$0xff]
    %v4094 = vld [vmem:[%s4089 + $0x20] sm:$0xff]
    %v4095 = vld [vmem:[%s4089 + $0x28] sm:$0xff]
    %v4096 = vld [vmem:[%s4089 + $0x30] sm:$0xff]
    %v4097 = vld [vmem:[%s4089 + $0x38] sm:$0xff]
    %v4099 = vsel %vm3350, %v4084, 0
    %v4102 = vsel %vm3350, %v4087, 0
    %4104 = vmatpush.msra.mxu0 0.0
    %4105 = vmatpush.msra.mxu0 0.0
    %4106 = vmatpush.msra.mxu0 0.0
    %4107 = vmatpush.msra.mxu0 0.0
    %4108 = vmatpush.msra.mxu0 0.0
    %4109 = vmatpush.msra.mxu0 0.0
    %4110 = vmatpush.msra.mxu0 0.0
    %4111 = vmatpush.msra.mxu0 0.0
    %4112 = vmatpush.msra.mxu0 %v4097
    %4113 = vmatpush.msra.mxu0 %v4096
    %4114 = vmatpush.msra.mxu0 %v4095
    %4115 = vmatpush.msra.mxu0 %v4094
    %4116 = vmatpush.msra.mxu0 %v4093
    %4117 = vmatpush.msra.mxu0 %v4092
    %4118 = vmatpush.msra.mxu0 %v4091
    %4119 = vmatpush.msra.mxu0 %v4090
    %4120 = vmatmul.f32.gmra.mxu0 %v4099
    %v4121 = vpop.f32.mrf.mxu0
    %v4122 = vadd.f32 0.0, %v4121
    %4123 = vmatmul.f32.gmra.mxu0 %v4102
    %v4124 = vpop.f32.mrf.mxu0
    %v4125 = vadd.f32 0.0, %v4124
    %4126 = vdwg.mxu0
    %v4127 = vadd.f32 %v4053, %v4122
    %v4128 = vadd.f32 %v4054, %v4125
    %s4129 = scalar_lea.vmem %s8, 56
    %v4130 = vld [vmem:[%s4129] sm:$0xf]
    %v4131 = vld [vmem:[%s4129 + $0x4] sm:$0xf]
    %v4132 = vunpack.c.l.bf16 %v4130
    %v4133 = vunpack.c.l.bf16 %v4131
    %v4135 = vsel %vm3350, %v4132, 0
    %v4138 = vsel %vm3350, %v4133, 0
    %4140 = vmatpush.msra.mxu0 0.0
    %4141 = vmatpush.msra.mxu0 0.0
    %4142 = vmatpush.msra.mxu0 0.0
    %4143 = vmatpush.msra.mxu0 0.0
    %4144 = vmatpush.msra.mxu0 0.0
    %4145 = vmatpush.msra.mxu0 0.0
    %4146 = vmatpush.msra.mxu0 0.0
    %4147 = vmatpush.msra.mxu0 0.0
    %4148 = vmatpush.msra.mxu0 %v3616
    %4149 = vmatpush.msra.mxu0 %v3615
    %4150 = vmatpush.msra.mxu0 %v3614
    %4151 = vmatpush.msra.mxu0 %v3613
    %4152 = vmatpush.msra.mxu0 %v3612
    %4153 = vmatpush.msra.mxu0 %v3611
    %4154 = vmatpush.msra.mxu0 %v3610
    %4155 = vmatpush.msra.mxu0 %v3609
    %4156 = vmatmul.f32.gmra.mxu0 %v4135
    %v4157 = vpop.f32.mrf.mxu0
    %v4158 = vadd.f32 0.0, %v4157
    %4159 = vmatmul.f32.gmra.mxu0 %v4138
    %v4160 = vpop.f32.mrf.mxu0
    %v4161 = vadd.f32 0.0, %v4160
    %4162 = vdwg.mxu0
    %s4163 = scalar_lea.vmem %s9, 448
    %v4164 = vld [vmem:[%s4163] sm:$0xff]
    %v4165 = vld [vmem:[%s4163 + $0x8] sm:$0xff]
    %v4166 = vld [vmem:[%s4163 + $0x10] sm:$0xff]
    %v4167 = vld [vmem:[%s4163 + $0x18] sm:$0xff]
    %v4168 = vld [vmem:[%s4163 + $0x20] sm:$0xff]
    %v4169 = vld [vmem:[%s4163 + $0x28] sm:$0xff]
    %v4170 = vld [vmem:[%s4163 + $0x30] sm:$0xff]
    %v4171 = vld [vmem:[%s4163 + $0x38] sm:$0xff]
    %v4173 = vsel %vm3350, %v4158, 0
    %v4176 = vsel %vm3350, %v4161, 0
    %4178 = vmatpush.msra.mxu0 0.0
    %4179 = vmatpush.msra.mxu0 0.0
    %4180 = vmatpush.msra.mxu0 0.0
    %4181 = vmatpush.msra.mxu0 0.0
    %4182 = vmatpush.msra.mxu0 0.0
    %4183 = vmatpush.msra.mxu0 0.0
    %4184 = vmatpush.msra.mxu0 0.0
    %4185 = vmatpush.msra.mxu0 0.0
    %4186 = vmatpush.msra.mxu0 %v4171
    %4187 = vmatpush.msra.mxu0 %v4170
    %4188 = vmatpush.msra.mxu0 %v4169
    %4189 = vmatpush.msra.mxu0 %v4168
    %4190 = vmatpush.msra.mxu0 %v4167
    %4191 = vmatpush.msra.mxu0 %v4166
    %4192 = vmatpush.msra.mxu0 %v4165
    %4193 = vmatpush.msra.mxu0 %v4164
    %4194 = vmatmul.f32.gmra.mxu0 %v4173
    %v4195 = vpop.f32.mrf.mxu0
    %v4196 = vadd.f32 0.0, %v4195
    %4197 = vmatmul.f32.gmra.mxu0 %v4176
    %v4198 = vpop.f32.mrf.mxu0
    %v4199 = vadd.f32 0.0, %v4198
    %4200 = vdwg.mxu0
    %v4201 = vadd.f32 %v4127, %v4196
    %v4202 = vadd.f32 %v4128, %v4199
    %s4203 = scalar_lea.vmem %s8, 64
    %v4204 = vld [vmem:[%s4203] sm:$0xf]
    %v4205 = vld [vmem:[%s4203 + $0x4] sm:$0xf]
    %v4206 = vunpack.c.l.bf16 %v4204
    %v4207 = vunpack.c.l.bf16 %v4205
    %v4209 = vsel %vm3350, %v4206, 0
    %v4212 = vsel %vm3350, %v4207, 0
    %4214 = vmatpush.msra.mxu0 0.0
    %4215 = vmatpush.msra.mxu0 0.0
    %4216 = vmatpush.msra.mxu0 0.0
    %4217 = vmatpush.msra.mxu0 0.0
    %4218 = vmatpush.msra.mxu0 0.0
    %4219 = vmatpush.msra.mxu0 0.0
    %4220 = vmatpush.msra.mxu0 0.0
    %4221 = vmatpush.msra.mxu0 0.0
    %4222 = vmatpush.msra.mxu0 %v3616
    %4223 = vmatpush.msra.mxu0 %v3615
    %4224 = vmatpush.msra.mxu0 %v3614
    %4225 = vmatpush.msra.mxu0 %v3613
    %4226 = vmatpush.msra.mxu0 %v3612
    %4227 = vmatpush.msra.mxu0 %v3611
    %4228 = vmatpush.msra.mxu0 %v3610
    %4229 = vmatpush.msra.mxu0 %v3609
    %4230 = vmatmul.f32.gmra.mxu0 %v4209
    %v4231 = vpop.f32.mrf.mxu0
    %v4232 = vadd.f32 0.0, %v4231
    %4233 = vmatmul.f32.gmra.mxu0 %v4212
    %v4234 = vpop.f32.mrf.mxu0
    %v4235 = vadd.f32 0.0, %v4234
    %4236 = vdwg.mxu0
    %s4237 = scalar_lea.vmem %s9, 512
    %v4238 = vld [vmem:[%s4237] sm:$0xff]
    %v4239 = vld [vmem:[%s4237 + $0x8] sm:$0xff]
    %v4240 = vld [vmem:[%s4237 + $0x10] sm:$0xff]
    %v4241 = vld [vmem:[%s4237 + $0x18] sm:$0xff]
    %v4242 = vld [vmem:[%s4237 + $0x20] sm:$0xff]
    %v4243 = vld [vmem:[%s4237 + $0x28] sm:$0xff]
    %v4244 = vld [vmem:[%s4237 + $0x30] sm:$0xff]
    %v4245 = vld [vmem:[%s4237 + $0x38] sm:$0xff]
    %v4247 = vsel %vm3350, %v4232, 0
    %v4250 = vsel %vm3350, %v4235, 0
    %4252 = vmatpush.msra.mxu0 0.0
    %4253 = vmatpush.msra.mxu0 0.0
    %4254 = vmatpush.msra.mxu0 0.0
    %4255 = vmatpush.msra.mxu0 0.0
    %4256 = vmatpush.msra.mxu0 0.0
    %4257 = vmatpush.msra.mxu0 0.0
    %4258 = vmatpush.msra.mxu0 0.0
    %4259 = vmatpush.msra.mxu0 0.0
    %4260 = vmatpush.msra.mxu0 %v4245
    %4261 = vmatpush.msra.mxu0 %v4244
    %4262 = vmatpush.msra.mxu0 %v4243
    %4263 = vmatpush.msra.mxu0 %v4242
    %4264 = vmatpush.msra.mxu0 %v4241
    %4265 = vmatpush.msra.mxu0 %v4240
    %4266 = vmatpush.msra.mxu0 %v4239
    %4267 = vmatpush.msra.mxu0 %v4238
    %4268 = vmatmul.f32.gmra.mxu0 %v4247
    %v4269 = vpop.f32.mrf.mxu0
    %v4270 = vadd.f32 0.0, %v4269
    %4271 = vmatmul.f32.gmra.mxu0 %v4250
    %v4272 = vpop.f32.mrf.mxu0
    %v4273 = vadd.f32 0.0, %v4272
    %4274 = vdwg.mxu0
    %v4275 = vadd.f32 %v4201, %v4270
    %v4276 = vadd.f32 %v4202, %v4273
    %s4277 = scalar_lea.vmem %s8, 72
    %v4278 = vld [vmem:[%s4277] sm:$0xf]
    %v4279 = vld [vmem:[%s4277 + $0x4] sm:$0xf]
    %v4280 = vunpack.c.l.bf16 %v4278
    %v4281 = vunpack.c.l.bf16 %v4279
    %v4283 = vsel %vm3350, %v4280, 0
    %v4286 = vsel %vm3350, %v4281, 0
    %4288 = vmatpush.msra.mxu0 0.0
    %4289 = vmatpush.msra.mxu0 0.0
    %4290 = vmatpush.msra.mxu0 0.0
    %4291 = vmatpush.msra.mxu0 0.0
    %4292 = vmatpush.msra.mxu0 0.0
    %4293 = vmatpush.msra.mxu0 0.0
    %4294 = vmatpush.msra.mxu0 0.0
    %4295 = vmatpush.msra.mxu0 0.0
    %4296 = vmatpush.msra.mxu0 %v3616
    %4297 = vmatpush.msra.mxu0 %v3615
    %4298 = vmatpush.msra.mxu0 %v3614
    %4299 = vmatpush.msra.mxu0 %v3613
    %4300 = vmatpush.msra.mxu0 %v3612
    %4301 = vmatpush.msra.mxu0 %v3611
    %4302 = vmatpush.msra.mxu0 %v3610
    %4303 = vmatpush.msra.mxu0 %v3609
    %4304 = vmatmul.f32.gmra.mxu0 %v4283
    %v4305 = vpop.f32.mrf.mxu0
    %v4306 = vadd.f32 0.0, %v4305
    %4307 = vmatmul.f32.gmra.mxu0 %v4286
    %v4308 = vpop.f32.mrf.mxu0
    %v4309 = vadd.f32 0.0, %v4308
    %4310 = vdwg.mxu0
    %s4311 = scalar_lea.vmem %s9, 576
    %v4312 = vld [vmem:[%s4311] sm:$0xff]
    %v4313 = vld [vmem:[%s4311 + $0x8] sm:$0xff]
    %v4314 = vld [vmem:[%s4311 + $0x10] sm:$0xff]
    %v4315 = vld [vmem:[%s4311 + $0x18] sm:$0xff]
    %v4316 = vld [vmem:[%s4311 + $0x20] sm:$0xff]
    %v4317 = vld [vmem:[%s4311 + $0x28] sm:$0xff]
    %v4318 = vld [vmem:[%s4311 + $0x30] sm:$0xff]
    %v4319 = vld [vmem:[%s4311 + $0x38] sm:$0xff]
    %v4321 = vsel %vm3350, %v4306, 0
    %v4324 = vsel %vm3350, %v4309, 0
    %4326 = vmatpush.msra.mxu0 0.0
    %4327 = vmatpush.msra.mxu0 0.0
    %4328 = vmatpush.msra.mxu0 0.0
    %4329 = vmatpush.msra.mxu0 0.0
    %4330 = vmatpush.msra.mxu0 0.0
    %4331 = vmatpush.msra.mxu0 0.0
    %4332 = vmatpush.msra.mxu0 0.0
    %4333 = vmatpush.msra.mxu0 0.0
    %4334 = vmatpush.msra.mxu0 %v4319
    %4335 = vmatpush.msra.mxu0 %v4318
    %4336 = vmatpush.msra.mxu0 %v4317
    %4337 = vmatpush.msra.mxu0 %v4316
    %4338 = vmatpush.msra.mxu0 %v4315
    %4339 = vmatpush.msra.mxu0 %v4314
    %4340 = vmatpush.msra.mxu0 %v4313
    %4341 = vmatpush.msra.mxu0 %v4312
    %4342 = vmatmul.f32.gmra.mxu0 %v4321
    %v4343 = vpop.f32.mrf.mxu0
    %v4344 = vadd.f32 0.0, %v4343
    %4345 = vmatmul.f32.gmra.mxu0 %v4324
    %v4346 = vpop.f32.mrf.mxu0
    %v4347 = vadd.f32 0.0, %v4346
    %4348 = vdwg.mxu0
    %v4349 = vadd.f32 %v4275, %v4344
    %v4350 = vadd.f32 %v4276, %v4347
    %s4351 = scalar_lea.vmem %s8, 80
    %v4352 = vld [vmem:[%s4351] sm:$0xf]
    %v4353 = vld [vmem:[%s4351 + $0x4] sm:$0xf]
    %v4354 = vunpack.c.l.bf16 %v4352
    %v4355 = vunpack.c.l.bf16 %v4353
    %v4357 = vsel %vm3350, %v4354, 0
    %v4360 = vsel %vm3350, %v4355, 0
    %4362 = vmatpush.msra.mxu0 0.0
    %4363 = vmatpush.msra.mxu0 0.0
    %4364 = vmatpush.msra.mxu0 0.0
    %4365 = vmatpush.msra.mxu0 0.0
    %4366 = vmatpush.msra.mxu0 0.0
    %4367 = vmatpush.msra.mxu0 0.0
    %4368 = vmatpush.msra.mxu0 0.0
    %4369 = vmatpush.msra.mxu0 0.0
    %4370 = vmatpush.msra.mxu0 %v3616
    %4371 = vmatpush.msra.mxu0 %v3615
    %4372 = vmatpush.msra.mxu0 %v3614
    %4373 = vmatpush.msra.mxu0 %v3613
    %4374 = vmatpush.msra.mxu0 %v3612
    %4375 = vmatpush.msra.mxu0 %v3611
    %4376 = vmatpush.msra.mxu0 %v3610
    %4377 = vmatpush.msra.mxu0 %v3609
    %4378 = vmatmul.f32.gmra.mxu0 %v4357
    %v4379 = vpop.f32.mrf.mxu0
    %v4380 = vadd.f32 0.0, %v4379
    %4381 = vmatmul.f32.gmra.mxu0 %v4360
    %v4382 = vpop.f32.mrf.mxu0
    %v4383 = vadd.f32 0.0, %v4382
    %4384 = vdwg.mxu0
    %s4385 = scalar_lea.vmem %s9, 640
    %v4386 = vld [vmem:[%s4385] sm:$0xff]
    %v4387 = vld [vmem:[%s4385 + $0x8] sm:$0xff]
    %v4388 = vld [vmem:[%s4385 + $0x10] sm:$0xff]
    %v4389 = vld [vmem:[%s4385 + $0x18] sm:$0xff]
    %v4390 = vld [vmem:[%s4385 + $0x20] sm:$0xff]
    %v4391 = vld [vmem:[%s4385 + $0x28] sm:$0xff]
    %v4392 = vld [vmem:[%s4385 + $0x30] sm:$0xff]
    %v4393 = vld [vmem:[%s4385 + $0x38] sm:$0xff]
    %v4395 = vsel %vm3350, %v4380, 0
    %v4398 = vsel %vm3350, %v4383, 0
    %4400 = vmatpush.msra.mxu0 0.0
    %4401 = vmatpush.msra.mxu0 0.0
    %4402 = vmatpush.msra.mxu0 0.0
    %4403 = vmatpush.msra.mxu0 0.0
    %4404 = vmatpush.msra.mxu0 0.0
    %4405 = vmatpush.msra.mxu0 0.0
    %4406 = vmatpush.msra.mxu0 0.0
    %4407 = vmatpush.msra.mxu0 0.0
    %4408 = vmatpush.msra.mxu0 %v4393
    %4409 = vmatpush.msra.mxu0 %v4392
    %4410 = vmatpush.msra.mxu0 %v4391
    %4411 = vmatpush.msra.mxu0 %v4390
    %4412 = vmatpush.msra.mxu0 %v4389
    %4413 = vmatpush.msra.mxu0 %v4388
    %4414 = vmatpush.msra.mxu0 %v4387
    %4415 = vmatpush.msra.mxu0 %v4386
    %4416 = vmatmul.f32.gmra.mxu0 %v4395
    %v4417 = vpop.f32.mrf.mxu0
    %v4418 = vadd.f32 0.0, %v4417
    %4419 = vmatmul.f32.gmra.mxu0 %v4398
    %v4420 = vpop.f32.mrf.mxu0
    %v4421 = vadd.f32 0.0, %v4420
    %4422 = vdwg.mxu0
    %v4423 = vadd.f32 %v4349, %v4418
    %v4424 = vadd.f32 %v4350, %v4421
    %s4425 = scalar_lea.vmem %s8, 88
    %v4426 = vld [vmem:[%s4425] sm:$0xf]
    %v4427 = vld [vmem:[%s4425 + $0x4] sm:$0xf]
    %v4428 = vunpack.c.l.bf16 %v4426
    %v4429 = vunpack.c.l.bf16 %v4427
    %v4431 = vsel %vm3350, %v4428, 0
    %v4434 = vsel %vm3350, %v4429, 0
    %4436 = vmatpush.msra.mxu0 0.0
    %4437 = vmatpush.msra.mxu0 0.0
    %4438 = vmatpush.msra.mxu0 0.0
    %4439 = vmatpush.msra.mxu0 0.0
    %4440 = vmatpush.msra.mxu0 0.0
    %4441 = vmatpush.msra.mxu0 0.0
    %4442 = vmatpush.msra.mxu0 0.0
    %4443 = vmatpush.msra.mxu0 0.0
    %4444 = vmatpush.msra.mxu0 %v3616
    %4445 = vmatpush.msra.mxu0 %v3615
    %4446 = vmatpush.msra.mxu0 %v3614
    %4447 = vmatpush.msra.mxu0 %v3613
    %4448 = vmatpush.msra.mxu0 %v3612
    %4449 = vmatpush.msra.mxu0 %v3611
    %4450 = vmatpush.msra.mxu0 %v3610
    %4451 = vmatpush.msra.mxu0 %v3609
    %4452 = vmatmul.f32.gmra.mxu0 %v4431
    %v4453 = vpop.f32.mrf.mxu0
    %v4454 = vadd.f32 0.0, %v4453
    %4455 = vmatmul.f32.gmra.mxu0 %v4434
    %v4456 = vpop.f32.mrf.mxu0
    %v4457 = vadd.f32 0.0, %v4456
    %4458 = vdwg.mxu0
    %s4459 = scalar_lea.vmem %s9, 704
    %v4460 = vld [vmem:[%s4459] sm:$0xff]
    %v4461 = vld [vmem:[%s4459 + $0x8] sm:$0xff]
    %v4462 = vld [vmem:[%s4459 + $0x10] sm:$0xff]
    %v4463 = vld [vmem:[%s4459 + $0x18] sm:$0xff]
    %v4464 = vld [vmem:[%s4459 + $0x20] sm:$0xff]
    %v4465 = vld [vmem:[%s4459 + $0x28] sm:$0xff]
    %v4466 = vld [vmem:[%s4459 + $0x30] sm:$0xff]
    %v4467 = vld [vmem:[%s4459 + $0x38] sm:$0xff]
    %v4469 = vsel %vm3350, %v4454, 0
    %v4472 = vsel %vm3350, %v4457, 0
    %4474 = vmatpush.msra.mxu0 0.0
    %4475 = vmatpush.msra.mxu0 0.0
    %4476 = vmatpush.msra.mxu0 0.0
    %4477 = vmatpush.msra.mxu0 0.0
    %4478 = vmatpush.msra.mxu0 0.0
    %4479 = vmatpush.msra.mxu0 0.0
    %4480 = vmatpush.msra.mxu0 0.0
    %4481 = vmatpush.msra.mxu0 0.0
    %4482 = vmatpush.msra.mxu0 %v4467
    %4483 = vmatpush.msra.mxu0 %v4466
    %4484 = vmatpush.msra.mxu0 %v4465
    %4485 = vmatpush.msra.mxu0 %v4464
    %4486 = vmatpush.msra.mxu0 %v4463
    %4487 = vmatpush.msra.mxu0 %v4462
    %4488 = vmatpush.msra.mxu0 %v4461
    %4489 = vmatpush.msra.mxu0 %v4460
    %4490 = vmatmul.f32.gmra.mxu0 %v4469
    %v4491 = vpop.f32.mrf.mxu0
    %v4492 = vadd.f32 0.0, %v4491
    %4493 = vmatmul.f32.gmra.mxu0 %v4472
    %v4494 = vpop.f32.mrf.mxu0
    %v4495 = vadd.f32 0.0, %v4494
    %4496 = vdwg.mxu0
    %v4497 = vadd.f32 %v4423, %v4492
    %v4498 = vadd.f32 %v4424, %v4495
    %s4499 = scalar_lea.vmem %s8, 96
    %v4500 = vld [vmem:[%s4499] sm:$0xf]
    %v4501 = vld [vmem:[%s4499 + $0x4] sm:$0xf]
    %v4502 = vunpack.c.l.bf16 %v4500
    %v4503 = vunpack.c.l.bf16 %v4501
    %v4505 = vsel %vm3350, %v4502, 0
    %v4508 = vsel %vm3350, %v4503, 0
    %4510 = vmatpush.msra.mxu0 0.0
    %4511 = vmatpush.msra.mxu0 0.0
    %4512 = vmatpush.msra.mxu0 0.0
    %4513 = vmatpush.msra.mxu0 0.0
    %4514 = vmatpush.msra.mxu0 0.0
    %4515 = vmatpush.msra.mxu0 0.0
    %4516 = vmatpush.msra.mxu0 0.0
    %4517 = vmatpush.msra.mxu0 0.0
    %4518 = vmatpush.msra.mxu0 %v3616
    %4519 = vmatpush.msra.mxu0 %v3615
    %4520 = vmatpush.msra.mxu0 %v3614
    %4521 = vmatpush.msra.mxu0 %v3613
    %4522 = vmatpush.msra.mxu0 %v3612
    %4523 = vmatpush.msra.mxu0 %v3611
    %4524 = vmatpush.msra.mxu0 %v3610
    %4525 = vmatpush.msra.mxu0 %v3609
    %4526 = vmatmul.f32.gmra.mxu0 %v4505
    %v4527 = vpop.f32.mrf.mxu0
    %v4528 = vadd.f32 0.0, %v4527
    %4529 = vmatmul.f32.gmra.mxu0 %v4508
    %v4530 = vpop.f32.mrf.mxu0
    %v4531 = vadd.f32 0.0, %v4530
    %4532 = vdwg.mxu0
    %s4533 = scalar_lea.vmem %s9, 768
    %v4534 = vld [vmem:[%s4533] sm:$0xff]
    %v4535 = vld [vmem:[%s4533 + $0x8] sm:$0xff]
    %v4536 = vld [vmem:[%s4533 + $0x10] sm:$0xff]
    %v4537 = vld [vmem:[%s4533 + $0x18] sm:$0xff]
    %v4538 = vld [vmem:[%s4533 + $0x20] sm:$0xff]
    %v4539 = vld [vmem:[%s4533 + $0x28] sm:$0xff]
    %v4540 = vld [vmem:[%s4533 + $0x30] sm:$0xff]
    %v4541 = vld [vmem:[%s4533 + $0x38] sm:$0xff]
    %v4543 = vsel %vm3350, %v4528, 0
    %v4546 = vsel %vm3350, %v4531, 0
    %4548 = vmatpush.msra.mxu0 0.0
    %4549 = vmatpush.msra.mxu0 0.0
    %4550 = vmatpush.msra.mxu0 0.0
    %4551 = vmatpush.msra.mxu0 0.0
    %4552 = vmatpush.msra.mxu0 0.0
    %4553 = vmatpush.msra.mxu0 0.0
    %4554 = vmatpush.msra.mxu0 0.0
    %4555 = vmatpush.msra.mxu0 0.0
    %4556 = vmatpush.msra.mxu0 %v4541
    %4557 = vmatpush.msra.mxu0 %v4540
    %4558 = vmatpush.msra.mxu0 %v4539
    %4559 = vmatpush.msra.mxu0 %v4538
    %4560 = vmatpush.msra.mxu0 %v4537
    %4561 = vmatpush.msra.mxu0 %v4536
    %4562 = vmatpush.msra.mxu0 %v4535
    %4563 = vmatpush.msra.mxu0 %v4534
    %4564 = vmatmul.f32.gmra.mxu0 %v4543
    %v4565 = vpop.f32.mrf.mxu0
    %v4566 = vadd.f32 0.0, %v4565
    %4567 = vmatmul.f32.gmra.mxu0 %v4546
    %v4568 = vpop.f32.mrf.mxu0
    %v4569 = vadd.f32 0.0, %v4568
    %4570 = vdwg.mxu0
    %v4571 = vadd.f32 %v4497, %v4566
    %v4572 = vadd.f32 %v4498, %v4569
    %s4573 = scalar_lea.vmem %s8, 104
    %v4574 = vld [vmem:[%s4573] sm:$0xf]
    %v4575 = vld [vmem:[%s4573 + $0x4] sm:$0xf]
    %v4576 = vunpack.c.l.bf16 %v4574
    %v4577 = vunpack.c.l.bf16 %v4575
    %v4579 = vsel %vm3350, %v4576, 0
    %v4582 = vsel %vm3350, %v4577, 0
    %4584 = vmatpush.msra.mxu0 0.0
    %4585 = vmatpush.msra.mxu0 0.0
    %4586 = vmatpush.msra.mxu0 0.0
    %4587 = vmatpush.msra.mxu0 0.0
    %4588 = vmatpush.msra.mxu0 0.0
    %4589 = vmatpush.msra.mxu0 0.0
    %4590 = vmatpush.msra.mxu0 0.0
    %4591 = vmatpush.msra.mxu0 0.0
    %4592 = vmatpush.msra.mxu0 %v3616
    %4593 = vmatpush.msra.mxu0 %v3615
    %4594 = vmatpush.msra.mxu0 %v3614
    %4595 = vmatpush.msra.mxu0 %v3613
    %4596 = vmatpush.msra.mxu0 %v3612
    %4597 = vmatpush.msra.mxu0 %v3611
    %4598 = vmatpush.msra.mxu0 %v3610
    %4599 = vmatpush.msra.mxu0 %v3609
    %4600 = vmatmul.f32.gmra.mxu0 %v4579
    %v4601 = vpop.f32.mrf.mxu0
    %v4602 = vadd.f32 0.0, %v4601
    %4603 = vmatmul.f32.gmra.mxu0 %v4582
    %v4604 = vpop.f32.mrf.mxu0
    %v4605 = vadd.f32 0.0, %v4604
    %4606 = vdwg.mxu0
    %s4607 = scalar_lea.vmem %s9, 832
    %v4608 = vld [vmem:[%s4607] sm:$0xff]
    %v4609 = vld [vmem:[%s4607 + $0x8] sm:$0xff]
    %v4610 = vld [vmem:[%s4607 + $0x10] sm:$0xff]
    %v4611 = vld [vmem:[%s4607 + $0x18] sm:$0xff]
    %v4612 = vld [vmem:[%s4607 + $0x20] sm:$0xff]
    %v4613 = vld [vmem:[%s4607 + $0x28] sm:$0xff]
    %v4614 = vld [vmem:[%s4607 + $0x30] sm:$0xff]
    %v4615 = vld [vmem:[%s4607 + $0x38] sm:$0xff]
    %v4617 = vsel %vm3350, %v4602, 0
    %v4620 = vsel %vm3350, %v4605, 0
    %4622 = vmatpush.msra.mxu0 0.0
    %4623 = vmatpush.msra.mxu0 0.0
    %4624 = vmatpush.msra.mxu0 0.0
    %4625 = vmatpush.msra.mxu0 0.0
    %4626 = vmatpush.msra.mxu0 0.0
    %4627 = vmatpush.msra.mxu0 0.0
    %4628 = vmatpush.msra.mxu0 0.0
    %4629 = vmatpush.msra.mxu0 0.0
    %4630 = vmatpush.msra.mxu0 %v4615
    %4631 = vmatpush.msra.mxu0 %v4614
    %4632 = vmatpush.msra.mxu0 %v4613
    %4633 = vmatpush.msra.mxu0 %v4612
    %4634 = vmatpush.msra.mxu0 %v4611
    %4635 = vmatpush.msra.mxu0 %v4610
    %4636 = vmatpush.msra.mxu0 %v4609
    %4637 = vmatpush.msra.mxu0 %v4608
    %4638 = vmatmul.f32.gmra.mxu0 %v4617
    %v4639 = vpop.f32.mrf.mxu0
    %v4640 = vadd.f32 0.0, %v4639
    %4641 = vmatmul.f32.gmra.mxu0 %v4620
    %v4642 = vpop.f32.mrf.mxu0
    %v4643 = vadd.f32 0.0, %v4642
    %4644 = vdwg.mxu0
    %v4645 = vadd.f32 %v4571, %v4640
    %v4646 = vadd.f32 %v4572, %v4643
    %s4647 = scalar_lea.vmem %s8, 112
    %v4648 = vld [vmem:[%s4647] sm:$0xf]
    %v4649 = vld [vmem:[%s4647 + $0x4] sm:$0xf]
    %v4650 = vunpack.c.l.bf16 %v4648
    %v4651 = vunpack.c.l.bf16 %v4649
    %v4653 = vsel %vm3350, %v4650, 0
    %v4656 = vsel %vm3350, %v4651, 0
    %4658 = vmatpush.msra.mxu0 0.0
    %4659 = vmatpush.msra.mxu0 0.0
    %4660 = vmatpush.msra.mxu0 0.0
    %4661 = vmatpush.msra.mxu0 0.0
    %4662 = vmatpush.msra.mxu0 0.0
    %4663 = vmatpush.msra.mxu0 0.0
    %4664 = vmatpush.msra.mxu0 0.0
    %4665 = vmatpush.msra.mxu0 0.0
    %4666 = vmatpush.msra.mxu0 %v3616
    %4667 = vmatpush.msra.mxu0 %v3615
    %4668 = vmatpush.msra.mxu0 %v3614
    %4669 = vmatpush.msra.mxu0 %v3613
    %4670 = vmatpush.msra.mxu0 %v3612
    %4671 = vmatpush.msra.mxu0 %v3611
    %4672 = vmatpush.msra.mxu0 %v3610
    %4673 = vmatpush.msra.mxu0 %v3609
    %4674 = vmatmul.f32.gmra.mxu0 %v4653
    %v4675 = vpop.f32.mrf.mxu0
    %v4676 = vadd.f32 0.0, %v4675
    %4677 = vmatmul.f32.gmra.mxu0 %v4656
    %v4678 = vpop.f32.mrf.mxu0
    %v4679 = vadd.f32 0.0, %v4678
    %4680 = vdwg.mxu0
    %s4681 = scalar_lea.vmem %s9, 896
    %v4682 = vld [vmem:[%s4681] sm:$0xff]
    %v4683 = vld [vmem:[%s4681 + $0x8] sm:$0xff]
    %v4684 = vld [vmem:[%s4681 + $0x10] sm:$0xff]
    %v4685 = vld [vmem:[%s4681 + $0x18] sm:$0xff]
    %v4686 = vld [vmem:[%s4681 + $0x20] sm:$0xff]
    %v4687 = vld [vmem:[%s4681 + $0x28] sm:$0xff]
    %v4688 = vld [vmem:[%s4681 + $0x30] sm:$0xff]
    %v4689 = vld [vmem:[%s4681 + $0x38] sm:$0xff]
    %v4691 = vsel %vm3350, %v4676, 0
    %v4694 = vsel %vm3350, %v4679, 0
    %4696 = vmatpush.msra.mxu0 0.0
    %4697 = vmatpush.msra.mxu0 0.0
    %4698 = vmatpush.msra.mxu0 0.0
    %4699 = vmatpush.msra.mxu0 0.0
    %4700 = vmatpush.msra.mxu0 0.0
    %4701 = vmatpush.msra.mxu0 0.0
    %4702 = vmatpush.msra.mxu0 0.0
    %4703 = vmatpush.msra.mxu0 0.0
    %4704 = vmatpush.msra.mxu0 %v4689
    %4705 = vmatpush.msra.mxu0 %v4688
    %4706 = vmatpush.msra.mxu0 %v4687
    %4707 = vmatpush.msra.mxu0 %v4686
    %4708 = vmatpush.msra.mxu0 %v4685
    %4709 = vmatpush.msra.mxu0 %v4684
    %4710 = vmatpush.msra.mxu0 %v4683
    %4711 = vmatpush.msra.mxu0 %v4682
    %4712 = vmatmul.f32.gmra.mxu0 %v4691
    %v4713 = vpop.f32.mrf.mxu0
    %v4714 = vadd.f32 0.0, %v4713
    %4715 = vmatmul.f32.gmra.mxu0 %v4694
    %v4716 = vpop.f32.mrf.mxu0
    %v4717 = vadd.f32 0.0, %v4716
    %4718 = vdwg.mxu0
    %v4719 = vadd.f32 %v4645, %v4714
    %v4720 = vadd.f32 %v4646, %v4717
    %s4721 = scalar_lea.vmem %s8, 120
    %v4722 = vld [vmem:[%s4721] sm:$0xf]
    %v4723 = vld [vmem:[%s4721 + $0x4] sm:$0xf]
    %v4724 = vunpack.c.l.bf16 %v4722
    %v4725 = vunpack.c.l.bf16 %v4723
    %v4727 = vsel %vm3350, %v4724, 0
    %v4730 = vsel %vm3350, %v4725, 0
    %4732 = vmatpush.msra.mxu0 0.0
    %4733 = vmatpush.msra.mxu0 0.0
    %4734 = vmatpush.msra.mxu0 0.0
    %4735 = vmatpush.msra.mxu0 0.0
    %4736 = vmatpush.msra.mxu0 0.0
    %4737 = vmatpush.msra.mxu0 0.0
    %4738 = vmatpush.msra.mxu0 0.0
    %4739 = vmatpush.msra.mxu0 0.0
    %4740 = vmatpush.msra.mxu0 %v3616
    %4741 = vmatpush.msra.mxu0 %v3615
    %4742 = vmatpush.msra.mxu0 %v3614
    %4743 = vmatpush.msra.mxu0 %v3613
    %4744 = vmatpush.msra.mxu0 %v3612
    %4745 = vmatpush.msra.mxu0 %v3611
    %4746 = vmatpush.msra.mxu0 %v3610
    %4747 = vmatpush.msra.mxu0 %v3609
    %4748 = vmatmul.f32.gmra.mxu0 %v4727
    %v4749 = vpop.f32.mrf.mxu0
    %v4750 = vadd.f32 0.0, %v4749
    %4751 = vmatmul.f32.gmra.mxu0 %v4730
    %v4752 = vpop.f32.mrf.mxu0
    %v4753 = vadd.f32 0.0, %v4752
    %4754 = vdwg.mxu0
    %s4755 = scalar_lea.vmem %s9, 960
    %v4756 = vld [vmem:[%s4755] sm:$0xff]
    %v4757 = vld [vmem:[%s4755 + $0x8] sm:$0xff]
    %v4758 = vld [vmem:[%s4755 + $0x10] sm:$0xff]
    %v4759 = vld [vmem:[%s4755 + $0x18] sm:$0xff]
    %v4760 = vld [vmem:[%s4755 + $0x20] sm:$0xff]
    %v4761 = vld [vmem:[%s4755 + $0x28] sm:$0xff]
    %v4762 = vld [vmem:[%s4755 + $0x30] sm:$0xff]
    %v4763 = vld [vmem:[%s4755 + $0x38] sm:$0xff]
    %v4765 = vsel %vm3350, %v4750, 0
    %v4768 = vsel %vm3350, %v4753, 0
    %4770 = vmatpush.msra.mxu0 0.0
    %4771 = vmatpush.msra.mxu0 0.0
    %4772 = vmatpush.msra.mxu0 0.0
    %4773 = vmatpush.msra.mxu0 0.0
    %4774 = vmatpush.msra.mxu0 0.0
    %4775 = vmatpush.msra.mxu0 0.0
    %4776 = vmatpush.msra.mxu0 0.0
    %4777 = vmatpush.msra.mxu0 0.0
    %4778 = vmatpush.msra.mxu0 %v4763
    %4779 = vmatpush.msra.mxu0 %v4762
    %4780 = vmatpush.msra.mxu0 %v4761
    %4781 = vmatpush.msra.mxu0 %v4760
    %4782 = vmatpush.msra.mxu0 %v4759
    %4783 = vmatpush.msra.mxu0 %v4758
    %4784 = vmatpush.msra.mxu0 %v4757
    %4785 = vmatpush.msra.mxu0 %v4756
    %4786 = vmatmul.f32.gmra.mxu0 %v4765
    %v4787 = vpop.f32.mrf.mxu0
    %v4788 = vadd.f32 0.0, %v4787
    %4789 = vmatmul.f32.gmra.mxu0 %v4768
    %v4790 = vpop.f32.mrf.mxu0
    %v4791 = vadd.f32 0.0, %v4790
    %4792 = vdwg.mxu0
    %v4793 = vadd.f32 %v4719, %v4788
    %v4794 = vadd.f32 %v4720, %v4791
    %v4795 = vld [vmem:[%s10] sm:$0xff]
    %v4796 = vld [vmem:[%s10 + $0x8] sm:$0xff]
    %v4797 = vld [vmem:[%s10 + $0x10] sm:$0xff]
    %v4798 = vld [vmem:[%s10 + $0x18] sm:$0xff]
    %v4799 = vld [vmem:[%s10 + $0x20] sm:$0xff]
    %v4800 = vld [vmem:[%s10 + $0x28] sm:$0xff]
    %v4801 = vld [vmem:[%s10 + $0x30] sm:$0xff]
    %v4802 = vld [vmem:[%s10 + $0x38] sm:$0xff]
    %v4803 = vld [vmem:[%s10 + $0x40] sm:$0xff]
    %v4804 = vld [vmem:[%s10 + $0x48] sm:$0xff]
    %v4805 = vld [vmem:[%s10 + $0x50] sm:$0xff]
    %v4806 = vld [vmem:[%s10 + $0x58] sm:$0xff]
    %v4807 = vld [vmem:[%s10 + $0x60] sm:$0xff]
    %v4808 = vld [vmem:[%s10 + $0x68] sm:$0xff]
    %v4809 = vld [vmem:[%s10 + $0x70] sm:$0xff]
    %v4810 = vld [vmem:[%s10 + $0x78] sm:$0xff]
    %4811 = vmatpush.msra.mxu0 %v4810
    %4812 = vmatpush.msra.mxu0 %v4809
    %4813 = vmatpush.msra.mxu0 %v4808
    %4814 = vmatpush.msra.mxu0 %v4807
    %4815 = vmatpush.msra.mxu0 %v4806
    %4816 = vmatpush.msra.mxu0 %v4805
    %4817 = vmatpush.msra.mxu0 %v4804
    %4818 = vmatpush.msra.mxu0 %v4803
    %4819 = vmatpush.msra.mxu0 %v4802
    %4820 = vmatpush.msra.mxu0 %v4801
    %4821 = vmatpush.msra.mxu0 %v4800
    %4822 = vmatpush.msra.mxu0 %v4799
    %4823 = vmatpush.msra.mxu0 %v4798
    %4824 = vmatpush.msra.mxu0 %v4797
    %4825 = vmatpush.msra.mxu0 %v4796
    %4826 = vmatpush.msra.mxu0 %v4795
    %4827 = vmatmul.f32.gmra.mxu0 %v4793
    %v4828 = vpop.f32.mrf.mxu0
    %v4829 = vadd.f32 0.0, %v4828
    %4830 = vmatmul.f32.gmra.mxu0 %v4794
    %v4831 = vpop.f32.mrf.mxu0
    %v4832 = vadd.f32 0.0, %v4831
    %4833 = vdwg.mxu0
    %v4834 = vadd.f32 %v4829, %v4832
    %v4835 = vrot.slane %v4834, 4
    %v4836 = vadd.f32 %v4834, %v4835
    %v4837 = vrot.slane %v4836, 2
    %v4838 = vadd.f32 %v4836, %v4837
    %v4839 = vrot.slane %v4838, 1
    %v4840 = vadd.f32 %v4838, %v4839
    %v4841 = vrcp.pop 16.0
    %v4842 = vmul.f32 16.0, %v4841
    %v4843 = vsub.f32 1.0, %v4842
    %v4844 = vmul.f32 %v4841, %v4843
    %v4845 = vadd.f32 %v4841, %v4844
    %vm4846 = vweird.f32 %v4841
    %v4847 = vsel %vm4846, %v4841, %v4845
    %v4848 = vmul.f32 %v4840, %v4847
    %v4849 = vmul.f32 %v4793, %v4793
    %v4850 = vmul.f32 %v4794, %v4794
    %4851 = vmatpush.msra.mxu0 %v4810
    %4852 = vmatpush.msra.mxu0 %v4809
    %4853 = vmatpush.msra.mxu0 %v4808
    %4854 = vmatpush.msra.mxu0 %v4807
    %4855 = vmatpush.msra.mxu0 %v4806
    %4856 = vmatpush.msra.mxu0 %v4805
    %4857 = vmatpush.msra.mxu0 %v4804
    %4858 = vmatpush.msra.mxu0 %v4803
    %4859 = vmatpush.msra.mxu0 %v4802
    %4860 = vmatpush.msra.mxu0 %v4801
    %4861 = vmatpush.msra.mxu0 %v4800
    %4862 = vmatpush.msra.mxu0 %v4799
    %4863 = vmatpush.msra.mxu0 %v4798
    %4864 = vmatpush.msra.mxu0 %v4797
    %4865 = vmatpush.msra.mxu0 %v4796
    %4866 = vmatpush.msra.mxu0 %v4795
    %4867 = vmatmul.f32.gmra.mxu0 %v4849
    %v4868 = vpop.f32.mrf.mxu0
    %v4869 = vadd.f32 0.0, %v4868
    %4870 = vmatmul.f32.gmra.mxu0 %v4850
    %v4871 = vpop.f32.mrf.mxu0
    %v4872 = vadd.f32 0.0, %v4871
    %4873 = vdwg.mxu0
    %v4874 = vadd.f32 %v4869, %v4872
    %v4875 = vrot.slane %v4874, 4
    %v4876 = vadd.f32 %v4874, %v4875
    %v4877 = vrot.slane %v4876, 2
    %v4878 = vadd.f32 %v4876, %v4877
    %v4879 = vrot.slane %v4878, 1
    %v4880 = vadd.f32 %v4878, %v4879
    %v4881 = vmul.f32 %v4880, %v4847
    %v4882 = vmul.f32 %v4848, %v4848
    %v4883 = vsub.f32 %v4881, %v4882
    %v4884 = vsub.f32 %v4793, %v4848
    %v4885 = vsub.f32 %v4794, %v4848
    %v4886 = vadd.f32 %v4883, 1e-05
    %v4887 = vrsqrt.pop %v4886
    %v4888 = vmul.f32 %v4887, %v4886
    %v4889 = vmul.f32 %v4888, %v4887
    %v4890 = vmul.f32 0.5, %v4889
    %v4891 = vsub.f32 1.5, %v4890
    %v4892 = vmul.f32 %v4887, %v4891
    %vm4893 = vweird.f32 %v4886
    %vm4894 = vweird.f32 %v4887
    %vm4895 = vmor %vm4893, %vm4894
    %v4896 = vsel %vm4895, %v4887, %v4892
    %v4897 = vmul.f32 %v4884, %v4896
    %v4898 = vmul.f32 %v4885, %v4896
    %v4899 = vld [vmem:[%s11] sm:$0x1]
    %v4901 = vperm.slane %v4899, 0
    %v4903 = vmul.f32 %v4897, %v4901
    %v4904 = vmul.f32 %v4898, %v4901
    %v4905 = vld [vmem:[%s12] sm:$0x1]
    %v4907 = vperm.slane %v4905, 0
    %v4909 = vadd.f32 %v4903, %v4907
    %v4910 = vadd.f32 %v4904, %v4907
    %vm4911 = vcmp.gt.f32.partialorder %v4909, 0.0
    %vm4912 = vcmp.gt.f32.partialorder %v4910, 0.0
    %v4913 = vmul.f32 %v4909, 0.2
    %v4914 = vmul.f32 %v4910, 0.2
    %v4915 = vsel %vm4911, %v4909, %v4913
    %v4916 = vsel %vm4912, %v4910, %v4914
    %v4917 = vld [vmem:[%s13] sm:$0xff]
    %v4918 = vld [vmem:[%s13 + $0x8] sm:$0xff]
    %v4919 = vmul.f32 %v4915, %v4917
    %v4920 = vmul.f32 %v4916, %v4918
    %v4921 = vld [vmem:[%s14] sm:$0xff]
    %v4922 = vld [vmem:[%s14 + $0x8] sm:$0xff]
    %v4923 = vld [vmem:[%s14 + $0x10] sm:$0xff]
    %v4924 = vld [vmem:[%s14 + $0x18] sm:$0xff]
    %v4925 = vld [vmem:[%s14 + $0x20] sm:$0xff]
    %v4926 = vld [vmem:[%s14 + $0x28] sm:$0xff]
    %v4927 = vld [vmem:[%s14 + $0x30] sm:$0xff]
    %v4928 = vld [vmem:[%s14 + $0x38] sm:$0xff]
    %v4929 = vld [vmem:[%s14 + $0x40] sm:$0xff]
    %v4930 = vld [vmem:[%s14 + $0x48] sm:$0xff]
    %v4931 = vld [vmem:[%s14 + $0x50] sm:$0xff]
    %v4932 = vld [vmem:[%s14 + $0x58] sm:$0xff]
    %v4933 = vld [vmem:[%s14 + $0x60] sm:$0xff]
    %v4934 = vld [vmem:[%s14 + $0x68] sm:$0xff]
    %v4935 = vld [vmem:[%s14 + $0x70] sm:$0xff]
    %v4936 = vld [vmem:[%s14 + $0x78] sm:$0xff]
    %4937 = vmatpush.msra.mxu0 %v4936
    %4938 = vmatpush.msra.mxu0 %v4935
    %4939 = vmatpush.msra.mxu0 %v4934
    %4940 = vmatpush.msra.mxu0 %v4933
    %4941 = vmatpush.msra.mxu0 %v4932
    %4942 = vmatpush.msra.mxu0 %v4931
    %4943 = vmatpush.msra.mxu0 %v4930
    %4944 = vmatpush.msra.mxu0 %v4929
    %4945 = vmatpush.msra.mxu0 %v4928
    %4946 = vmatpush.msra.mxu0 %v4927
    %4947 = vmatpush.msra.mxu0 %v4926
    %4948 = vmatpush.msra.mxu0 %v4925
    %4949 = vmatpush.msra.mxu0 %v4924
    %4950 = vmatpush.msra.mxu0 %v4923
    %4951 = vmatpush.msra.mxu0 %v4922
    %4952 = vmatpush.msra.mxu0 %v4921
    %4953 = vmatmul.f32.gmra.mxu0 %v4919
    %v4954 = vpop.f32.mrf.mxu0
    %v4955 = vadd.f32 0.0, %v4954
    %4956 = vmatmul.f32.gmra.mxu0 %v4920
    %v4957 = vpop.f32.mrf.mxu0
    %v4958 = vadd.f32 0.0, %v4957
    %4959 = vdwg.mxu0
    %vm4960 = vcmask 15360
    %v4961 = vsel %vm4960, %v4955, 0.0
    %v4962 = vsel %vm4960, %v4958, 0.0
    %v4963 = vadd.f32 %v4961, %v4962
    %v4964 = vrot.slane %v4963, 4
    %v4965 = vadd.f32 %v4963, %v4964
    %v4966 = vrot.slane %v4965, 2
    %v4967 = vadd.f32 %v4965, %v4966
    %v4968 = vrot.slane %v4967, 1
    %v4969 = vadd.f32 %v4967, %v4968
    %v4970 = vld [vmem:[%s15] sm:$0x1]
    %v4971 = vadd.f32 %v4969, %v4970
    %vm4972 = vcmask 8192
    %4973 = vst.msk [vmem:[#allocation2] sm:$0x1] %vm4972, %v4971
    // Predicated region
    $region66: #{discriminator_forward.1} parent=1 // pred_check
      _
    $region67: #{discriminator_forward.1} parent=1 // pred_check_branch
      %4975 = sbr.rel (0) target = $region69
    $region68: #{discriminator_forward.1} parent=1 // pred_region
      %4977 = vsyncadd [#allocation3], 0
      %s4979 = sshll.u32 [#allocation2], 4
      %s4980 = int_to_ptr.vmem [resolvable:$true] %s4979
      %s4981 = sshll.u32 %s16, 4
      %s4982 = int_to_ptr.hbm [resolvable:$true] %s4981
      %4984 = dma.vmem_to_hbm [thread:$0]  %s4980, 16, %s4982, [#allocation3]
    $region69: #{discriminator_forward.1} parent=1 // pred_fallthru
      _
    // Predicated region
    $region70: #{discriminator_forward.1} parent=1 // pred_check
      _
    $region71: #{discriminator_forward.1} parent=1 // pred_check_branch
      %4986 = sbr.rel (0) target = $region73
    $region72: #{discriminator_forward.1} parent=1 // pred_region
      %4988 = dma.done [#allocation3], 16
    $region73: #{discriminator_forward.1} parent=1 // pred_fallthru
      _
    %4989 = vsyncpa [#allocation3], 1

</llo_original>
